<compile_context>
chip_gen: v7x
topology: tpu7x:2x2x1
jax: 0.10.0
libtpu: 0.0.40
codegen_flags: <defaults>
</compile_context>

<pallas_src>
import math
import functools

import jax
import jax.numpy as jnp
from jax.experimental import pallas as pl
from jax.experimental.pallas import tpu as pltpu


# ----------------------------------------------------------------------------
# In-kernel helpers
# ----------------------------------------------------------------------------

def _layernorm(x, g, b, eps):
    mean = jnp.mean(x, axis=-1, keepdims=True)
    var = jnp.mean(jnp.square(x - mean), axis=-1, keepdims=True)
    return (x - mean) * jax.lax.rsqrt(var + eps) * g + b


def _attn_heads(q, k, v, keep, heads):
    """q: (Lq,E) pre-scaled, k/v: (Lk,E), keep: (Lq,Lk) bool -> (Lq,E)."""
    lq, e = q.shape
    d = e // heads
    ctx = []
    for h in range(heads):                        # static unroll, one grid step
        qh = q[:, h * d:(h + 1) * d]
        kh = k[:, h * d:(h + 1) * d]
        vh = v[:, h * d:(h + 1) * d]
        # contract last dims of both operands (no k.T materialization)
        en = jax.lax.dot_general(qh, kh, (((1,), (1,)), ((), ())),
                                 preferred_element_type=jnp.float32)   # (Lq,Lk)
        en = jnp.where(keep, en, jnp.float32(-1e20))
        en = en - jnp.max(en, axis=-1, keepdims=True)
        p = jnp.exp(en)
        p = p * pl.reciprocal(jnp.sum(p, axis=-1, keepdims=True), approx=True)
        ctx.append(jnp.dot(p, vh, preferred_element_type=jnp.float32))  # (Lq,D)
    return jnp.concatenate(ctx, axis=-1)                                 # (Lq,E)


# ----------------------------------------------------------------------------
# One fused kernel: full DecoderBlock + fc_out, one batch element per grid step
# ----------------------------------------------------------------------------

def _decoder_kernel(x_ref, enc_ref, skp_ref,
                    sa_wqkv_ref, sa_bqkv_ref, sa_wo_ref, sa_bo_ref,
                    ln0_g_ref, ln0_b_ref,
                    ca_wq_ref, ca_bq_ref, ca_wkv_ref, ca_bkv_ref,
                    ca_wo_ref, ca_bo_ref,
                    ln1_g_ref, ln1_b_ref,
                    ff1_w_ref, ff1_b_ref, ff2_w_ref, ff2_b_ref,
                    ln2_g_ref, ln2_b_ref,
                    fc_w_ref, fc_b_ref,
                    out_ref, *, heads, scale, eps):
    x = x_ref[0]                                       # (L, E)
    enc = enc_ref[0]                                   # (Lk, E)
    l, e = x.shape
    lk = enc.shape[0]

    # ---- masked (causal) self-attention: fused QKV + all heads + out proj ----
    qkv = jnp.dot(x, sa_wqkv_ref[...],
                  preferred_element_type=jnp.float32) + sa_bqkv_ref[...]  # (L,3E)
    q = qkv[:, :e] * scale
    k = qkv[:, e:2 * e]
    v = qkv[:, 2 * e:]
    qi = jax.lax.broadcasted_iota(jnp.int32, (l, l), 0)
    ki = jax.lax.broadcasted_iota(jnp.int32, (l, l), 1)
    ctx = _attn_heads(q, k, v, qi >= ki, heads)
    attn = jnp.dot(ctx, sa_wo_ref[...],
                   preferred_element_type=jnp.float32) + sa_bo_ref[...]

    # residual + LayerNorm   (dropout p=0 -> identity)
    qb = _layernorm(attn + x, ln0_g_ref[...], ln0_b_ref[...], eps)

    # ---- cross-attention over encoder output (fused KV proj) ----
    qc = (jnp.dot(qb, ca_wq_ref[...],
                  preferred_element_type=jnp.float32) + ca_bq_ref[...]) * scale
    kv = jnp.dot(enc, ca_wkv_ref[...],
                 preferred_element_type=jnp.float32) + ca_bkv_ref[...]    # (Lk,2E)
    keep = jnp.broadcast_to(skp_ref[0] != 0.0, (l, lk))
    ctx2 = _attn_heads(qc, kv[:, :e], kv[:, e:], keep, heads)
    attn2 = jnp.dot(ctx2, ca_wo_ref[...],
                    preferred_element_type=jnp.float32) + ca_bo_ref[...]

    h = _layernorm(attn2 + qb, ln1_g_ref[...], ln1_b_ref[...], eps)

    # ---- feed-forward + residual + LayerNorm (4E intermediate stays on-chip) ----
    ff = jnp.maximum(jnp.dot(h, ff1_w_ref[...],
                             preferred_element_type=jnp.float32) + ff1_b_ref[...],
                     0.0)
    y = jnp.dot(ff, ff2_w_ref[...],
                preferred_element_type=jnp.float32) + ff2_b_ref[...] + h
    dec = _layernorm(y, ln2_g_ref[...], ln2_b_ref[...], eps)

    # ---- final vocab projection (padded to 128 lanes -> dense store) ----
    out_ref[0] = jnp.dot(dec, fc_w_ref[...],
                         preferred_element_type=jnp.float32) + fc_b_ref[...]


def decoder_forward(params, trg, enc_out, src_key_mask, *, heads, trg_vocab):
    n, l = trg.shape
    e = params["emb"].shape[1]
    lk = enc_out.shape[1]
    vpad = params["fc_out_w"].shape[1]
    hdim = params["ff1_w"].shape[1]
    scale = 1.0 / math.sqrt(e)

    # TODO(synk): embedding gather + positional-table add kept in plain JAX glue.
    x = params["emb"][trg] + params["pe"][:l][None, :, :]
    src_kpad = src_key_mask.astype(jnp.float32).reshape(n, 1, lk)

    def w(shape):                     # replicated weight: fetched once, revisited
        return pl.BlockSpec(shape, lambda b, _s=shape: (0,) * len(_s))

    logits = pl.pallas_call(
        functools.partial(_decoder_kernel, heads=heads, scale=scale, eps=1e-5),
        grid=(n,),
        in_specs=[
            pl.BlockSpec((1, l, e), lambda b: (b, 0, 0)),
            pl.BlockSpec((1, lk, e), lambda b: (b, 0, 0)),
            pl.BlockSpec((1, 1, lk), lambda b: (b, 0, 0)),
            w((e, 3 * e)), w((1, 3 * e)), w((e, e)), w((1, e)),      # self-attn
            w((1, e)), w((1, e)),                                    # ln0
            w((e, e)), w((1, e)), w((e, 2 * e)), w((1, 2 * e)),      # cross-attn
            w((e, e)), w((1, e)),
            w((1, e)), w((1, e)),                                    # ln1
            w((e, hdim)), w((1, hdim)), w((hdim, e)), w((1, e)),     # ffn
            w((1, e)), w((1, e)),                                    # ln2
            w((e, vpad)), w((1, vpad)),                              # fc_out
        ],
        out_specs=pl.BlockSpec((1, l, vpad), lambda b: (b, 0, 0)),
        out_shape=jax.ShapeDtypeStruct((n, l, vpad), jnp.float32),
        compiler_params=pltpu.CompilerParams(dimension_semantics=("parallel",)),
    )(x, enc_out, src_kpad,
      params["sa_wqkv"], params["sa_bqkv"], params["sa_wo"], params["sa_bo"],
      params["ln0_g"], params["ln0_b"],
      params["ca_wq"], params["ca_bq"], params["ca_wkv"], params["ca_bkv"],
      params["ca_wo"], params["ca_bo"],
      params["ln1_g"], params["ln1_b"],
      params["ff1_w"], params["ff1_b"], params["ff2_w"], params["ff2_b"],
      params["ln2_g"], params["ln2_b"],
      params["fc_out_w"], params["fc_out_b"])

    return logits[:, :, :trg_vocab]


# ----------------------------------------------------------------------------
# Deterministic parameter initialization (weights stored pre-fused)
# ----------------------------------------------------------------------------

def make_positional_encoding(max_len, d_model):
    position = jnp.arange(max_len, dtype=jnp.float32)[:, None]
    div_term = jnp.exp(jnp.arange(0, d_model, 2, dtype=jnp.float32)
                       * -(math.log(10000.0) / d_model))
    pe = jnp.zeros((max_len, d_model), jnp.float32)
    pe = pe.at[:, 0::2].set(jnp.sin(position * div_term))
    pe = pe.at[:, 1::2].set(jnp.cos(position * div_term))
    return pe


def _init_linear(key, in_dim, out_dim):
    kw, kb = jax.random.split(key)
    w = jax.random.normal(kw, (in_dim, out_dim), jnp.float32) * 0.05
    b = jax.random.normal(kb, (out_dim,), jnp.float32) * 0.05
    return w, b


def init_decoder_params(key, trg_vocab, e, expansion, max_len):
    ks = jax.random.split(key, 12)
    # self-attention (q,k,v fused into one (E,3E) weight)
    wq, bq = _init_linear(ks[0], e, e)
    wk, bk = _init_linear(ks[1], e, e)
    wv, bv = _init_linear(ks[2], e, e)
    wo, bo = _init_linear(ks[3], e, e)
    # cross-attention (k,v fused into one (E,2E) weight)
    cwq, cbq = _init_linear(ks[4], e, e)
    cwk, cbk = _init_linear(ks[5], e, e)
    cwv, cbv = _init_linear(ks[6], e, e)
    cwo, cbo = _init_linear(ks[7], e, e)
    # feed-forward
    ff1_w, ff1_b = _init_linear(ks[8], e, expansion * e)
    ff2_w, ff2_b = _init_linear(ks[9], expansion * e, e)
    # final vocab projection padded to 128 lanes (sliced back in the wrapper)
    fc_w, fc_b = _init_linear(ks[10], e, trg_vocab)
    vpad = ((trg_vocab + 127) // 128) * 128
    fc_w_pad = jnp.zeros((e, vpad), jnp.float32).at[:, :trg_vocab].set(fc_w)
    fc_b_pad = jnp.zeros((1, vpad), jnp.float32).at[:, :trg_vocab].set(fc_b)

    ones = jnp.ones((1, e), jnp.float32)
    zeros = jnp.zeros((1, e), jnp.float32)
    return dict(
        emb=jax.random.normal(ks[11], (trg_vocab, e), jnp.float32) * 0.05,
        pe=make_positional_encoding(max_len, e),
        sa_wqkv=jnp.concatenate([wq, wk, wv], axis=1),
        sa_bqkv=jnp.concatenate([bq, bk, bv]).reshape(1, 3 * e),
        sa_wo=wo, sa_bo=bo.reshape(1, e),
        ln0_g=ones, ln0_b=zeros,
        ca_wq=cwq, ca_bq=cbq.reshape(1, e),
        ca_wkv=jnp.concatenate([cwk, cwv], axis=1),
        ca_bkv=jnp.concatenate([cbk, cbv]).reshape(1, 2 * e),
        ca_wo=cwo, ca_bo=cbo.reshape(1, e),
        ln1_g=ones, ln1_b=zeros,
        ff1_w=ff1_w, ff1_b=ff1_b.reshape(1, expansion * e),
        ff2_w=ff2_w, ff2_b=ff2_b.reshape(1, e),
        ln2_g=ones, ln2_b=zeros,
        fc_out_w=fc_w_pad, fc_out_b=fc_b_pad,
    )


# ----------------------------------------------------------------------------
# Main
# ----------------------------------------------------------------------------

if __name__ == "__main__":
    TRG_VOCAB = 19
    EMBED_SIZE, HEADS = 32, 4
    EXPANSION, MAX_LEN = 4, 100
    N, L_TRG, L_SRC = 2, 8, 8

    key = jax.random.PRNGKey(0)
    k_params, k_trg, k_enc = jax.random.split(key, 3)

    params = init_decoder_params(k_params, TRG_VOCAB, EMBED_SIZE,
                                 EXPANSION, MAX_LEN)

    trg = jax.random.randint(k_trg, (N, L_TRG), 1, TRG_VOCAB, dtype=jnp.int32)
    enc_out = jax.random.normal(k_enc, (N, L_SRC, EMBED_SIZE), jnp.float32)
    # source key-padding mask (1 = keep); mask out last 2 positions
    src_key_mask = jnp.ones((N, L_SRC), jnp.float32).at[:, -2:].set(0.0)

    fwd = jax.jit(functools.partial(decoder_forward, heads=HEADS,
                                    trg_vocab=TRG_VOCAB))
    out = jax.block_until_ready(fwd(params, trg, enc_out, src_key_mask))

    assert out.shape == (N, L_TRG, TRG_VOCAB), out.shape
    assert bool(jnp.all(jnp.isfinite(out)))
    print("KERNEL_OK")
</pallas_src>

<mosaic_0001>
module attributes {stable_mosaic.version = 11 : i64} {
  func.func @_decoder_kernel(%arg0: i32, %arg1: memref<1x8x32xf32, #tpu.memory_space<vmem>>, %arg2: memref<1x8x32xf32, #tpu.memory_space<vmem>>, %arg3: memref<1x1x8xf32, #tpu.memory_space<vmem>>, %arg4: memref<32x96xf32, #tpu.memory_space<vmem>>, %arg5: memref<1x96xf32, #tpu.memory_space<vmem>>, %arg6: memref<32x32xf32, #tpu.memory_space<vmem>>, %arg7: memref<1x32xf32, #tpu.memory_space<vmem>>, %arg8: memref<1x32xf32, #tpu.memory_space<vmem>>, %arg9: memref<1x32xf32, #tpu.memory_space<vmem>>, %arg10: memref<32x32xf32, #tpu.memory_space<vmem>>, %arg11: memref<1x32xf32, #tpu.memory_space<vmem>>, %arg12: memref<32x64xf32, #tpu.memory_space<vmem>>, %arg13: memref<1x64xf32, #tpu.memory_space<vmem>>, %arg14: memref<32x32xf32, #tpu.memory_space<vmem>>, %arg15: memref<1x32xf32, #tpu.memory_space<vmem>>, %arg16: memref<1x32xf32, #tpu.memory_space<vmem>>, %arg17: memref<1x32xf32, #tpu.memory_space<vmem>>, %arg18: memref<32x128xf32, #tpu.memory_space<vmem>>, %arg19: memref<1x128xf32, #tpu.memory_space<vmem>>, %arg20: memref<128x32xf32, #tpu.memory_space<vmem>>, %arg21: memref<1x32xf32, #tpu.memory_space<vmem>>, %arg22: memref<1x32xf32, #tpu.memory_space<vmem>>, %arg23: memref<1x32xf32, #tpu.memory_space<vmem>>, %arg24: memref<32x128xf32, #tpu.memory_space<vmem>>, %arg25: memref<1x128xf32, #tpu.memory_space<vmem>>, %arg26: memref<1x8x128xf32, #tpu.memory_space<vmem>>) attributes {dimension_semantics = [#tpu.dimension_semantics<parallel>], iteration_bounds = array<i64: 2>, scalar_prefetch = 0 : i64, scratch_operands = 0 : i64, tpu.core_type = #tpu.core_type<tc>, window_params = [{transform_indices = @transform_0, window_bounds = array<i64: 1, 8, 32>}, {transform_indices = @transform_1, window_bounds = array<i64: 1, 8, 32>}, {transform_indices = @transform_2, window_bounds = array<i64: 1, 1, 8>}, {pipeline_mode = #tpu.pipeline_mode<synchronous>, transform_indices = @transform_3, window_bounds = array<i64: 32, 96>}, {pipeline_mode = #tpu.pipeline_mode<synchronous>, transform_indices = @transform_4, window_bounds = array<i64: 1, 96>}, {pipeline_mode = #tpu.pipeline_mode<synchronous>, transform_indices = @transform_5, window_bounds = array<i64: 32, 32>}, {pipeline_mode = #tpu.pipeline_mode<synchronous>, transform_indices = @transform_6, window_bounds = array<i64: 1, 32>}, {pipeline_mode = #tpu.pipeline_mode<synchronous>, transform_indices = @transform_7, window_bounds = array<i64: 1, 32>}, {pipeline_mode = #tpu.pipeline_mode<synchronous>, transform_indices = @transform_8, window_bounds = array<i64: 1, 32>}, {pipeline_mode = #tpu.pipeline_mode<synchronous>, transform_indices = @transform_9, window_bounds = array<i64: 32, 32>}, {pipeline_mode = #tpu.pipeline_mode<synchronous>, transform_indices = @transform_10, window_bounds = array<i64: 1, 32>}, {pipeline_mode = #tpu.pipeline_mode<synchronous>, transform_indices = @transform_11, window_bounds = array<i64: 32, 64>}, {pipeline_mode = #tpu.pipeline_mode<synchronous>, transform_indices = @transform_12, window_bounds = array<i64: 1, 64>}, {pipeline_mode = #tpu.pipeline_mode<synchronous>, transform_indices = @transform_13, window_bounds = array<i64: 32, 32>}, {pipeline_mode = #tpu.pipeline_mode<synchronous>, transform_indices = @transform_14, window_bounds = array<i64: 1, 32>}, {pipeline_mode = #tpu.pipeline_mode<synchronous>, transform_indices = @transform_15, window_bounds = array<i64: 1, 32>}, {pipeline_mode = #tpu.pipeline_mode<synchronous>, transform_indices = @transform_16, window_bounds = array<i64: 1, 32>}, {pipeline_mode = #tpu.pipeline_mode<synchronous>, transform_indices = @transform_17, window_bounds = array<i64: 32, 128>}, {pipeline_mode = #tpu.pipeline_mode<synchronous>, transform_indices = @transform_18, window_bounds = array<i64: 1, 128>}, {pipeline_mode = #tpu.pipeline_mode<synchronous>, transform_indices = @transform_19, window_bounds = array<i64: 128, 32>}, {pipeline_mode = #tpu.pipeline_mode<synchronous>, transform_indices = @transform_20, window_bounds = array<i64: 1, 32>}, {pipeline_mode = #tpu.pipeline_mode<synchronous>, transform_indices = @transform_21, window_bounds = array<i64: 1, 32>}, {pipeline_mode = #tpu.pipeline_mode<synchronous>, transform_indices = @transform_22, window_bounds = array<i64: 1, 32>}, {pipeline_mode = #tpu.pipeline_mode<synchronous>, transform_indices = @transform_23, window_bounds = array<i64: 32, 128>}, {pipeline_mode = #tpu.pipeline_mode<synchronous>, transform_indices = @transform_24, window_bounds = array<i64: 1, 128>}, {transform_indices = @transform_25, window_bounds = array<i64: 1, 8, 128>}]} {
    %c0 = arith.constant 0 : index
    %c0_0 = arith.constant 0 : index
    %c0_1 = arith.constant 0 : index
    %0 = vector.load %arg1[%c0, %c0_0, %c0_1] : memref<1x8x32xf32, #tpu.memory_space<vmem>>, vector<1x8x32xf32>
    %1 = vector.shape_cast %0 : vector<1x8x32xf32> to vector<8x32xf32>
    %c0_2 = arith.constant 0 : index
    %c0_3 = arith.constant 0 : index
    %c0_4 = arith.constant 0 : index
    %2 = vector.load %arg2[%c0_2, %c0_3, %c0_4] : memref<1x8x32xf32, #tpu.memory_space<vmem>>, vector<1x8x32xf32>
    %3 = vector.shape_cast %2 : vector<1x8x32xf32> to vector<8x32xf32>
    %c0_5 = arith.constant 0 : index
    %c0_6 = arith.constant 0 : index
    %4 = vector.load %arg4[%c0_5, %c0_6] : memref<32x96xf32, #tpu.memory_space<vmem>>, vector<32x96xf32>
    %cst = arith.constant dense<0.000000e+00> : vector<8x96xf32>
    %5 = tpu.matmul %1, %4, %cst {dimension_numbers = #tpu.dot_dimension_numbers<[1], [0], [0], [1], [0, 0, 1, 1], [], []>} : vector<8x32xf32>, vector<32x96xf32>, vector<8x96xf32> -> vector<8x96xf32>
    %c0_7 = arith.constant 0 : index
    %c0_8 = arith.constant 0 : index
    %6 = vector.load %arg5[%c0_7, %c0_8] : memref<1x96xf32, #tpu.memory_space<vmem>>, vector<1x96xf32>
    %7 = vector.broadcast %6 : vector<1x96xf32> to vector<8x96xf32>
    %8 = arith.addf %5, %7 : vector<8x96xf32>
    %9 = vector.extract_strided_slice %8 {offsets = [0, 0], sizes = [8, 32], strides = [1, 1]} : vector<8x96xf32> to vector<8x32xf32>
    %cst_9 = arith.constant 0.176776692 : f32
    %10 = vector.broadcast %cst_9 : f32 to vector<8x32xf32>
    %11 = arith.mulf %9, %10 : vector<8x32xf32>
    %12 = vector.extract_strided_slice %8 {offsets = [0, 32], sizes = [8, 32], strides = [1, 1]} : vector<8x96xf32> to vector<8x32xf32>
    %13 = vector.extract_strided_slice %8 {offsets = [0, 64], sizes = [8, 32], strides = [1, 1]} : vector<8x96xf32> to vector<8x32xf32>
    %14 = tpu.iota {dimensions = array<i32: 0>} : vector<8x8xi32>
    %15 = tpu.iota {dimensions = array<i32: 1>} : vector<8x8xi32>
    %16 = arith.cmpi sge, %14, %15 : vector<8x8xi32>
    %17 = vector.extract_strided_slice %11 {offsets = [0, 0], sizes = [8, 8], strides = [1, 1]} : vector<8x32xf32> to vector<8x8xf32>
    %18 = vector.extract_strided_slice %12 {offsets = [0, 0], sizes = [8, 8], strides = [1, 1]} : vector<8x32xf32> to vector<8x8xf32>
    %19 = vector.extract_strided_slice %13 {offsets = [0, 0], sizes = [8, 8], strides = [1, 1]} : vector<8x32xf32> to vector<8x8xf32>
    %cst_10 = arith.constant dense<0.000000e+00> : vector<8x8xf32>
    %20 = tpu.matmul %17, %18, %cst_10 {dimension_numbers = #tpu.dot_dimension_numbers<[1], [1], [0], [0], [0, 0, 1, 0], [], []>} : vector<8x8xf32>, vector<8x8xf32>, vector<8x8xf32> -> vector<8x8xf32>
    %cst_11 = arith.constant -1.000000e+20 : f32
    %21 = vector.broadcast %cst_11 : f32 to vector<8x8xf32>
    %22 = arith.select %16, %20, %21 : vector<8x8xi1>, vector<8x8xf32>
    %cst_12 = arith.constant dense<0xFF800000> : vector<8xf32>
    %23 = vector.multi_reduction <maximumf>, %22, %cst_12 [1] : vector<8x8xf32> to vector<8xf32>
    %24 = vector.shape_cast %23 : vector<8xf32> to vector<8x1xf32>
    %25 = vector.broadcast %24 : vector<8x1xf32> to vector<8x8xf32>
    %26 = arith.subf %22, %25 : vector<8x8xf32>
    %27 = math.exp %26 : vector<8x8xf32>
    %cst_13 = arith.constant dense<0.000000e+00> : vector<8xf32>
    %28 = vector.multi_reduction <add>, %27, %cst_13 [1] : vector<8x8xf32> to vector<8xf32>
    %29 = vector.shape_cast %28 : vector<8xf32> to vector<8x1xf32>
    %30 = tpu.reciprocal %29 {approx = true} : vector<8x1xf32> -> vector<8x1xf32>
    %31 = vector.broadcast %30 : vector<8x1xf32> to vector<8x8xf32>
    %32 = arith.mulf %27, %31 : vector<8x8xf32>
    %cst_14 = arith.constant dense<0.000000e+00> : vector<8x8xf32>
    %33 = tpu.matmul %32, %19, %cst_14 {dimension_numbers = #tpu.dot_dimension_numbers<[1], [0], [0], [1], [0, 0, 1, 1], [], []>} : vector<8x8xf32>, vector<8x8xf32>, vector<8x8xf32> -> vector<8x8xf32>
    %34 = vector.extract_strided_slice %11 {offsets = [0, 8], sizes = [8, 8], strides = [1, 1]} : vector<8x32xf32> to vector<8x8xf32>
    %35 = vector.extract_strided_slice %12 {offsets = [0, 8], sizes = [8, 8], strides = [1, 1]} : vector<8x32xf32> to vector<8x8xf32>
    %36 = vector.extract_strided_slice %13 {offsets = [0, 8], sizes = [8, 8], strides = [1, 1]} : vector<8x32xf32> to vector<8x8xf32>
    %cst_15 = arith.constant dense<0.000000e+00> : vector<8x8xf32>
    %37 = tpu.matmul %34, %35, %cst_15 {dimension_numbers = #tpu.dot_dimension_numbers<[1], [1], [0], [0], [0, 0, 1, 0], [], []>} : vector<8x8xf32>, vector<8x8xf32>, vector<8x8xf32> -> vector<8x8xf32>
    %cst_16 = arith.constant -1.000000e+20 : f32
    %38 = vector.broadcast %cst_16 : f32 to vector<8x8xf32>
    %39 = arith.select %16, %37, %38 : vector<8x8xi1>, vector<8x8xf32>
    %cst_17 = arith.constant dense<0xFF800000> : vector<8xf32>
    %40 = vector.multi_reduction <maximumf>, %39, %cst_17 [1] : vector<8x8xf32> to vector<8xf32>
    %41 = vector.shape_cast %40 : vector<8xf32> to vector<8x1xf32>
    %42 = vector.broadcast %41 : vector<8x1xf32> to vector<8x8xf32>
    %43 = arith.subf %39, %42 : vector<8x8xf32>
    %44 = math.exp %43 : vector<8x8xf32>
    %cst_18 = arith.constant dense<0.000000e+00> : vector<8xf32>
    %45 = vector.multi_reduction <add>, %44, %cst_18 [1] : vector<8x8xf32> to vector<8xf32>
    %46 = vector.shape_cast %45 : vector<8xf32> to vector<8x1xf32>
    %47 = tpu.reciprocal %46 {approx = true} : vector<8x1xf32> -> vector<8x1xf32>
    %48 = vector.broadcast %47 : vector<8x1xf32> to vector<8x8xf32>
    %49 = arith.mulf %44, %48 : vector<8x8xf32>
    %cst_19 = arith.constant dense<0.000000e+00> : vector<8x8xf32>
    %50 = tpu.matmul %49, %36, %cst_19 {dimension_numbers = #tpu.dot_dimension_numbers<[1], [0], [0], [1], [0, 0, 1, 1], [], []>} : vector<8x8xf32>, vector<8x8xf32>, vector<8x8xf32> -> vector<8x8xf32>
    %51 = vector.extract_strided_slice %11 {offsets = [0, 16], sizes = [8, 8], strides = [1, 1]} : vector<8x32xf32> to vector<8x8xf32>
    %52 = vector.extract_strided_slice %12 {offsets = [0, 16], sizes = [8, 8], strides = [1, 1]} : vector<8x32xf32> to vector<8x8xf32>
    %53 = vector.extract_strided_slice %13 {offsets = [0, 16], sizes = [8, 8], strides = [1, 1]} : vector<8x32xf32> to vector<8x8xf32>
    %cst_20 = arith.constant dense<0.000000e+00> : vector<8x8xf32>
    %54 = tpu.matmul %51, %52, %cst_20 {dimension_numbers = #tpu.dot_dimension_numbers<[1], [1], [0], [0], [0, 0, 1, 0], [], []>} : vector<8x8xf32>, vector<8x8xf32>, vector<8x8xf32> -> vector<8x8xf32>
    %cst_21 = arith.constant -1.000000e+20 : f32
    %55 = vector.broadcast %cst_21 : f32 to vector<8x8xf32>
    %56 = arith.select %16, %54, %55 : vector<8x8xi1>, vector<8x8xf32>
    %cst_22 = arith.constant dense<0xFF800000> : vector<8xf32>
    %57 = vector.multi_reduction <maximumf>, %56, %cst_22 [1] : vector<8x8xf32> to vector<8xf32>
    %58 = vector.shape_cast %57 : vector<8xf32> to vector<8x1xf32>
    %59 = vector.broadcast %58 : vector<8x1xf32> to vector<8x8xf32>
    %60 = arith.subf %56, %59 : vector<8x8xf32>
    %61 = math.exp %60 : vector<8x8xf32>
    %cst_23 = arith.constant dense<0.000000e+00> : vector<8xf32>
    %62 = vector.multi_reduction <add>, %61, %cst_23 [1] : vector<8x8xf32> to vector<8xf32>
    %63 = vector.shape_cast %62 : vector<8xf32> to vector<8x1xf32>
    %64 = tpu.reciprocal %63 {approx = true} : vector<8x1xf32> -> vector<8x1xf32>
    %65 = vector.broadcast %64 : vector<8x1xf32> to vector<8x8xf32>
    %66 = arith.mulf %61, %65 : vector<8x8xf32>
    %cst_24 = arith.constant dense<0.000000e+00> : vector<8x8xf32>
    %67 = tpu.matmul %66, %53, %cst_24 {dimension_numbers = #tpu.dot_dimension_numbers<[1], [0], [0], [1], [0, 0, 1, 1], [], []>} : vector<8x8xf32>, vector<8x8xf32>, vector<8x8xf32> -> vector<8x8xf32>
    %68 = vector.extract_strided_slice %11 {offsets = [0, 24], sizes = [8, 8], strides = [1, 1]} : vector<8x32xf32> to vector<8x8xf32>
    %69 = vector.extract_strided_slice %12 {offsets = [0, 24], sizes = [8, 8], strides = [1, 1]} : vector<8x32xf32> to vector<8x8xf32>
    %70 = vector.extract_strided_slice %13 {offsets = [0, 24], sizes = [8, 8], strides = [1, 1]} : vector<8x32xf32> to vector<8x8xf32>
    %cst_25 = arith.constant dense<0.000000e+00> : vector<8x8xf32>
    %71 = tpu.matmul %68, %69, %cst_25 {dimension_numbers = #tpu.dot_dimension_numbers<[1], [1], [0], [0], [0, 0, 1, 0], [], []>} : vector<8x8xf32>, vector<8x8xf32>, vector<8x8xf32> -> vector<8x8xf32>
    %cst_26 = arith.constant -1.000000e+20 : f32
    %72 = vector.broadcast %cst_26 : f32 to vector<8x8xf32>
    %73 = arith.select %16, %71, %72 : vector<8x8xi1>, vector<8x8xf32>
    %cst_27 = arith.constant dense<0xFF800000> : vector<8xf32>
    %74 = vector.multi_reduction <maximumf>, %73, %cst_27 [1] : vector<8x8xf32> to vector<8xf32>
    %75 = vector.shape_cast %74 : vector<8xf32> to vector<8x1xf32>
    %76 = vector.broadcast %75 : vector<8x1xf32> to vector<8x8xf32>
    %77 = arith.subf %73, %76 : vector<8x8xf32>
    %78 = math.exp %77 : vector<8x8xf32>
    %cst_28 = arith.constant dense<0.000000e+00> : vector<8xf32>
    %79 = vector.multi_reduction <add>, %78, %cst_28 [1] : vector<8x8xf32> to vector<8xf32>
    %80 = vector.shape_cast %79 : vector<8xf32> to vector<8x1xf32>
    %81 = tpu.reciprocal %80 {approx = true} : vector<8x1xf32> -> vector<8x1xf32>
    %82 = vector.broadcast %81 : vector<8x1xf32> to vector<8x8xf32>
    %83 = arith.mulf %78, %82 : vector<8x8xf32>
    %cst_29 = arith.constant dense<0.000000e+00> : vector<8x8xf32>
    %84 = tpu.matmul %83, %70, %cst_29 {dimension_numbers = #tpu.dot_dimension_numbers<[1], [0], [0], [1], [0, 0, 1, 1], [], []>} : vector<8x8xf32>, vector<8x8xf32>, vector<8x8xf32> -> vector<8x8xf32>
    %85 = tpu.concatenate %33, %50, %67, %84 in 1 : vector<8x8xf32>, vector<8x8xf32>, vector<8x8xf32>, vector<8x8xf32> -> vector<8x32xf32>
    %c0_30 = arith.constant 0 : index
    %c0_31 = arith.constant 0 : index
    %86 = vector.load %arg6[%c0_30, %c0_31] : memref<32x32xf32, #tpu.memory_space<vmem>>, vector<32x32xf32>
    %cst_32 = arith.constant dense<0.000000e+00> : vector<8x32xf32>
    %87 = tpu.matmul %85, %86, %cst_32 {dimension_numbers = #tpu.dot_dimension_numbers<[1], [0], [0], [1], [0, 0, 1, 1], [], []>} : vector<8x32xf32>, vector<32x32xf32>, vector<8x32xf32> -> vector<8x32xf32>
    %c0_33 = arith.constant 0 : index
    %c0_34 = arith.constant 0 : index
    %88 = vector.load %arg7[%c0_33, %c0_34] : memref<1x32xf32, #tpu.memory_space<vmem>>, vector<1x32xf32>
    %89 = vector.broadcast %88 : vector<1x32xf32> to vector<8x32xf32>
    %90 = arith.addf %87, %89 : vector<8x32xf32>
    %91 = arith.addf %90, %1 : vector<8x32xf32>
    %c0_35 = arith.constant 0 : index
    %c0_36 = arith.constant 0 : index
    %92 = vector.load %arg8[%c0_35, %c0_36] : memref<1x32xf32, #tpu.memory_space<vmem>>, vector<1x32xf32>
    %c0_37 = arith.constant 0 : index
    %c0_38 = arith.constant 0 : index
    %93 = vector.load %arg9[%c0_37, %c0_38] : memref<1x32xf32, #tpu.memory_space<vmem>>, vector<1x32xf32>
    %cst_39 = arith.constant dense<0.000000e+00> : vector<8xf32>
    %94 = vector.multi_reduction <add>, %91, %cst_39 [1] : vector<8x32xf32> to vector<8xf32>
    %95 = vector.shape_cast %94 : vector<8xf32> to vector<8x1xf32>
    %cst_40 = arith.constant 3.200000e+01 : f32
    %96 = vector.broadcast %cst_40 : f32 to vector<8x1xf32>
    %97 = arith.divf %95, %96 : vector<8x1xf32>
    %98 = vector.broadcast %97 : vector<8x1xf32> to vector<8x32xf32>
    %99 = arith.subf %91, %98 : vector<8x32xf32>
    %100 = arith.mulf %99, %99 : vector<8x32xf32>
    %cst_41 = arith.constant dense<0.000000e+00> : vector<8xf32>
    %101 = vector.multi_reduction <add>, %100, %cst_41 [1] : vector<8x32xf32> to vector<8xf32>
    %102 = vector.shape_cast %101 : vector<8xf32> to vector<8x1xf32>
    %cst_42 = arith.constant 3.200000e+01 : f32
    %103 = vector.broadcast %cst_42 : f32 to vector<8x1xf32>
    %104 = arith.divf %102, %103 : vector<8x1xf32>
    %105 = vector.broadcast %97 : vector<8x1xf32> to vector<8x32xf32>
    %106 = arith.subf %91, %105 : vector<8x32xf32>
    %cst_43 = arith.constant 9.99999974E-6 : f32
    %107 = vector.broadcast %cst_43 : f32 to vector<8x1xf32>
    %108 = arith.addf %104, %107 : vector<8x1xf32>
    %109 = math.rsqrt %108 : vector<8x1xf32>
    %110 = vector.broadcast %109 : vector<8x1xf32> to vector<8x32xf32>
    %111 = arith.mulf %106, %110 : vector<8x32xf32>
    %112 = vector.broadcast %92 : vector<1x32xf32> to vector<8x32xf32>
    %113 = arith.mulf %111, %112 : vector<8x32xf32>
    %114 = vector.broadcast %93 : vector<1x32xf32> to vector<8x32xf32>
    %115 = arith.addf %113, %114 : vector<8x32xf32>
    %c0_44 = arith.constant 0 : index
    %c0_45 = arith.constant 0 : index
    %116 = vector.load %arg10[%c0_44, %c0_45] : memref<32x32xf32, #tpu.memory_space<vmem>>, vector<32x32xf32>
    %cst_46 = arith.constant dense<0.000000e+00> : vector<8x32xf32>
    %117 = tpu.matmul %115, %116, %cst_46 {dimension_numbers = #tpu.dot_dimension_numbers<[1], [0], [0], [1], [0, 0, 1, 1], [], []>} : vector<8x32xf32>, vector<32x32xf32>, vector<8x32xf32> -> vector<8x32xf32>
    %c0_47 = arith.constant 0 : index
    %c0_48 = arith.constant 0 : index
    %118 = vector.load %arg11[%c0_47, %c0_48] : memref<1x32xf32, #tpu.memory_space<vmem>>, vector<1x32xf32>
    %119 = vector.broadcast %118 : vector<1x32xf32> to vector<8x32xf32>
    %120 = arith.addf %117, %119 : vector<8x32xf32>
    %cst_49 = arith.constant 0.176776692 : f32
    %121 = vector.broadcast %cst_49 : f32 to vector<8x32xf32>
    %122 = arith.mulf %120, %121 : vector<8x32xf32>
    %c0_50 = arith.constant 0 : index
    %c0_51 = arith.constant 0 : index
    %123 = vector.load %arg12[%c0_50, %c0_51] : memref<32x64xf32, #tpu.memory_space<vmem>>, vector<32x64xf32>
    %cst_52 = arith.constant dense<0.000000e+00> : vector<8x64xf32>
    %124 = tpu.matmul %3, %123, %cst_52 {dimension_numbers = #tpu.dot_dimension_numbers<[1], [0], [0], [1], [0, 0, 1, 1], [], []>} : vector<8x32xf32>, vector<32x64xf32>, vector<8x64xf32> -> vector<8x64xf32>
    %c0_53 = arith.constant 0 : index
    %c0_54 = arith.constant 0 : index
    %125 = vector.load %arg13[%c0_53, %c0_54] : memref<1x64xf32, #tpu.memory_space<vmem>>, vector<1x64xf32>
    %126 = vector.broadcast %125 : vector<1x64xf32> to vector<8x64xf32>
    %127 = arith.addf %124, %126 : vector<8x64xf32>
    %c0_55 = arith.constant 0 : index
    %c0_56 = arith.constant 0 : index
    %c0_57 = arith.constant 0 : index
    %128 = vector.load %arg3[%c0_55, %c0_56, %c0_57] : memref<1x1x8xf32, #tpu.memory_space<vmem>>, vector<1x1x8xf32>
    %129 = vector.shape_cast %128 : vector<1x1x8xf32> to vector<1x8xf32>
    %cst_58 = arith.constant 0.000000e+00 : f32
    %130 = vector.broadcast %cst_58 : f32 to vector<1x8xf32>
    %131 = arith.cmpf one, %129, %130 : vector<1x8xf32>
    %132 = vector.shape_cast %131 : vector<1x8xi1> to vector<1x8xi1>
    %133 = vector.broadcast %132 : vector<1x8xi1> to vector<8x8xi1>
    %134 = vector.extract_strided_slice %127 {offsets = [0, 0], sizes = [8, 32], strides = [1, 1]} : vector<8x64xf32> to vector<8x32xf32>
    %135 = vector.extract_strided_slice %127 {offsets = [0, 32], sizes = [8, 32], strides = [1, 1]} : vector<8x64xf32> to vector<8x32xf32>
    %136 = vector.extract_strided_slice %122 {offsets = [0, 0], sizes = [8, 8], strides = [1, 1]} : vector<8x32xf32> to vector<8x8xf32>
    %137 = vector.extract_strided_slice %134 {offsets = [0, 0], sizes = [8, 8], strides = [1, 1]} : vector<8x32xf32> to vector<8x8xf32>
    %138 = vector.extract_strided_slice %135 {offsets = [0, 0], sizes = [8, 8], strides = [1, 1]} : vector<8x32xf32> to vector<8x8xf32>
    %cst_59 = arith.constant dense<0.000000e+00> : vector<8x8xf32>
    %139 = tpu.matmul %136, %137, %cst_59 {dimension_numbers = #tpu.dot_dimension_numbers<[1], [1], [0], [0], [0, 0, 1, 0], [], []>} : vector<8x8xf32>, vector<8x8xf32>, vector<8x8xf32> -> vector<8x8xf32>
    %cst_60 = arith.constant -1.000000e+20 : f32
    %140 = vector.broadcast %cst_60 : f32 to vector<8x8xf32>
    %141 = arith.select %133, %139, %140 : vector<8x8xi1>, vector<8x8xf32>
    %cst_61 = arith.constant dense<0xFF800000> : vector<8xf32>
    %142 = vector.multi_reduction <maximumf>, %141, %cst_61 [1] : vector<8x8xf32> to vector<8xf32>
    %143 = vector.shape_cast %142 : vector<8xf32> to vector<8x1xf32>
    %144 = vector.broadcast %143 : vector<8x1xf32> to vector<8x8xf32>
    %145 = arith.subf %141, %144 : vector<8x8xf32>
    %146 = math.exp %145 : vector<8x8xf32>
    %cst_62 = arith.constant dense<0.000000e+00> : vector<8xf32>
    %147 = vector.multi_reduction <add>, %146, %cst_62 [1] : vector<8x8xf32> to vector<8xf32>
    %148 = vector.shape_cast %147 : vector<8xf32> to vector<8x1xf32>
    %149 = tpu.reciprocal %148 {approx = true} : vector<8x1xf32> -> vector<8x1xf32>
    %150 = vector.broadcast %149 : vector<8x1xf32> to vector<8x8xf32>
    %151 = arith.mulf %146, %150 : vector<8x8xf32>
    %cst_63 = arith.constant dense<0.000000e+00> : vector<8x8xf32>
    %152 = tpu.matmul %151, %138, %cst_63 {dimension_numbers = #tpu.dot_dimension_numbers<[1], [0], [0], [1], [0, 0, 1, 1], [], []>} : vector<8x8xf32>, vector<8x8xf32>, vector<8x8xf32> -> vector<8x8xf32>
    %153 = vector.extract_strided_slice %122 {offsets = [0, 8], sizes = [8, 8], strides = [1, 1]} : vector<8x32xf32> to vector<8x8xf32>
    %154 = vector.extract_strided_slice %134 {offsets = [0, 8], sizes = [8, 8], strides = [1, 1]} : vector<8x32xf32> to vector<8x8xf32>
    %155 = vector.extract_strided_slice %135 {offsets = [0, 8], sizes = [8, 8], strides = [1, 1]} : vector<8x32xf32> to vector<8x8xf32>
    %cst_64 = arith.constant dense<0.000000e+00> : vector<8x8xf32>
    %156 = tpu.matmul %153, %154, %cst_64 {dimension_numbers = #tpu.dot_dimension_numbers<[1], [1], [0], [0], [0, 0, 1, 0], [], []>} : vector<8x8xf32>, vector<8x8xf32>, vector<8x8xf32> -> vector<8x8xf32>
    %cst_65 = arith.constant -1.000000e+20 : f32
    %157 = vector.broadcast %cst_65 : f32 to vector<8x8xf32>
    %158 = arith.select %133, %156, %157 : vector<8x8xi1>, vector<8x8xf32>
    %cst_66 = arith.constant dense<0xFF800000> : vector<8xf32>
    %159 = vector.multi_reduction <maximumf>, %158, %cst_66 [1] : vector<8x8xf32> to vector<8xf32>
    %160 = vector.shape_cast %159 : vector<8xf32> to vector<8x1xf32>
    %161 = vector.broadcast %160 : vector<8x1xf32> to vector<8x8xf32>
    %162 = arith.subf %158, %161 : vector<8x8xf32>
    %163 = math.exp %162 : vector<8x8xf32>
    %cst_67 = arith.constant dense<0.000000e+00> : vector<8xf32>
    %164 = vector.multi_reduction <add>, %163, %cst_67 [1] : vector<8x8xf32> to vector<8xf32>
    %165 = vector.shape_cast %164 : vector<8xf32> to vector<8x1xf32>
    %166 = tpu.reciprocal %165 {approx = true} : vector<8x1xf32> -> vector<8x1xf32>
    %167 = vector.broadcast %166 : vector<8x1xf32> to vector<8x8xf32>
    %168 = arith.mulf %163, %167 : vector<8x8xf32>
    %cst_68 = arith.constant dense<0.000000e+00> : vector<8x8xf32>
    %169 = tpu.matmul %168, %155, %cst_68 {dimension_numbers = #tpu.dot_dimension_numbers<[1], [0], [0], [1], [0, 0, 1, 1], [], []>} : vector<8x8xf32>, vector<8x8xf32>, vector<8x8xf32> -> vector<8x8xf32>
    %170 = vector.extract_strided_slice %122 {offsets = [0, 16], sizes = [8, 8], strides = [1, 1]} : vector<8x32xf32> to vector<8x8xf32>
    %171 = vector.extract_strided_slice %134 {offsets = [0, 16], sizes = [8, 8], strides = [1, 1]} : vector<8x32xf32> to vector<8x8xf32>
    %172 = vector.extract_strided_slice %135 {offsets = [0, 16], sizes = [8, 8], strides = [1, 1]} : vector<8x32xf32> to vector<8x8xf32>
    %cst_69 = arith.constant dense<0.000000e+00> : vector<8x8xf32>
    %173 = tpu.matmul %170, %171, %cst_69 {dimension_numbers = #tpu.dot_dimension_numbers<[1], [1], [0], [0], [0, 0, 1, 0], [], []>} : vector<8x8xf32>, vector<8x8xf32>, vector<8x8xf32> -> vector<8x8xf32>
    %cst_70 = arith.constant -1.000000e+20 : f32
    %174 = vector.broadcast %cst_70 : f32 to vector<8x8xf32>
    %175 = arith.select %133, %173, %174 : vector<8x8xi1>, vector<8x8xf32>
    %cst_71 = arith.constant dense<0xFF800000> : vector<8xf32>
    %176 = vector.multi_reduction <maximumf>, %175, %cst_71 [1] : vector<8x8xf32> to vector<8xf32>
    %177 = vector.shape_cast %176 : vector<8xf32> to vector<8x1xf32>
    %178 = vector.broadcast %177 : vector<8x1xf32> to vector<8x8xf32>
    %179 = arith.subf %175, %178 : vector<8x8xf32>
    %180 = math.exp %179 : vector<8x8xf32>
    %cst_72 = arith.constant dense<0.000000e+00> : vector<8xf32>
    %181 = vector.multi_reduction <add>, %180, %cst_72 [1] : vector<8x8xf32> to vector<8xf32>
    %182 = vector.shape_cast %181 : vector<8xf32> to vector<8x1xf32>
    %183 = tpu.reciprocal %182 {approx = true} : vector<8x1xf32> -> vector<8x1xf32>
    %184 = vector.broadcast %183 : vector<8x1xf32> to vector<8x8xf32>
    %185 = arith.mulf %180, %184 : vector<8x8xf32>
    %cst_73 = arith.constant dense<0.000000e+00> : vector<8x8xf32>
    %186 = tpu.matmul %185, %172, %cst_73 {dimension_numbers = #tpu.dot_dimension_numbers<[1], [0], [0], [1], [0, 0, 1, 1], [], []>} : vector<8x8xf32>, vector<8x8xf32>, vector<8x8xf32> -> vector<8x8xf32>
    %187 = vector.extract_strided_slice %122 {offsets = [0, 24], sizes = [8, 8], strides = [1, 1]} : vector<8x32xf32> to vector<8x8xf32>
    %188 = vector.extract_strided_slice %134 {offsets = [0, 24], sizes = [8, 8], strides = [1, 1]} : vector<8x32xf32> to vector<8x8xf32>
    %189 = vector.extract_strided_slice %135 {offsets = [0, 24], sizes = [8, 8], strides = [1, 1]} : vector<8x32xf32> to vector<8x8xf32>
    %cst_74 = arith.constant dense<0.000000e+00> : vector<8x8xf32>
    %190 = tpu.matmul %187, %188, %cst_74 {dimension_numbers = #tpu.dot_dimension_numbers<[1], [1], [0], [0], [0, 0, 1, 0], [], []>} : vector<8x8xf32>, vector<8x8xf32>, vector<8x8xf32> -> vector<8x8xf32>
    %cst_75 = arith.constant -1.000000e+20 : f32
    %191 = vector.broadcast %cst_75 : f32 to vector<8x8xf32>
    %192 = arith.select %133, %190, %191 : vector<8x8xi1>, vector<8x8xf32>
    %cst_76 = arith.constant dense<0xFF800000> : vector<8xf32>
    %193 = vector.multi_reduction <maximumf>, %192, %cst_76 [1] : vector<8x8xf32> to vector<8xf32>
    %194 = vector.shape_cast %193 : vector<8xf32> to vector<8x1xf32>
    %195 = vector.broadcast %194 : vector<8x1xf32> to vector<8x8xf32>
    %196 = arith.subf %192, %195 : vector<8x8xf32>
    %197 = math.exp %196 : vector<8x8xf32>
    %cst_77 = arith.constant dense<0.000000e+00> : vector<8xf32>
    %198 = vector.multi_reduction <add>, %197, %cst_77 [1] : vector<8x8xf32> to vector<8xf32>
    %199 = vector.shape_cast %198 : vector<8xf32> to vector<8x1xf32>
    %200 = tpu.reciprocal %199 {approx = true} : vector<8x1xf32> -> vector<8x1xf32>
    %201 = vector.broadcast %200 : vector<8x1xf32> to vector<8x8xf32>
    %202 = arith.mulf %197, %201 : vector<8x8xf32>
    %cst_78 = arith.constant dense<0.000000e+00> : vector<8x8xf32>
    %203 = tpu.matmul %202, %189, %cst_78 {dimension_numbers = #tpu.dot_dimension_numbers<[1], [0], [0], [1], [0, 0, 1, 1], [], []>} : vector<8x8xf32>, vector<8x8xf32>, vector<8x8xf32> -> vector<8x8xf32>
    %204 = tpu.concatenate %152, %169, %186, %203 in 1 : vector<8x8xf32>, vector<8x8xf32>, vector<8x8xf32>, vector<8x8xf32> -> vector<8x32xf32>
    %c0_79 = arith.constant 0 : index
    %c0_80 = arith.constant 0 : index
    %205 = vector.load %arg14[%c0_79, %c0_80] : memref<32x32xf32, #tpu.memory_space<vmem>>, vector<32x32xf32>
    %cst_81 = arith.constant dense<0.000000e+00> : vector<8x32xf32>
    %206 = tpu.matmul %204, %205, %cst_81 {dimension_numbers = #tpu.dot_dimension_numbers<[1], [0], [0], [1], [0, 0, 1, 1], [], []>} : vector<8x32xf32>, vector<32x32xf32>, vector<8x32xf32> -> vector<8x32xf32>
    %c0_82 = arith.constant 0 : index
    %c0_83 = arith.constant 0 : index
    %207 = vector.load %arg15[%c0_82, %c0_83] : memref<1x32xf32, #tpu.memory_space<vmem>>, vector<1x32xf32>
    %208 = vector.broadcast %207 : vector<1x32xf32> to vector<8x32xf32>
    %209 = arith.addf %206, %208 : vector<8x32xf32>
    %210 = arith.addf %209, %115 : vector<8x32xf32>
    %c0_84 = arith.constant 0 : index
    %c0_85 = arith.constant 0 : index
    %211 = vector.load %arg16[%c0_84, %c0_85] : memref<1x32xf32, #tpu.memory_space<vmem>>, vector<1x32xf32>
    %c0_86 = arith.constant 0 : index
    %c0_87 = arith.constant 0 : index
    %212 = vector.load %arg17[%c0_86, %c0_87] : memref<1x32xf32, #tpu.memory_space<vmem>>, vector<1x32xf32>
    %cst_88 = arith.constant dense<0.000000e+00> : vector<8xf32>
    %213 = vector.multi_reduction <add>, %210, %cst_88 [1] : vector<8x32xf32> to vector<8xf32>
    %214 = vector.shape_cast %213 : vector<8xf32> to vector<8x1xf32>
    %cst_89 = arith.constant 3.200000e+01 : f32
    %215 = vector.broadcast %cst_89 : f32 to vector<8x1xf32>
    %216 = arith.divf %214, %215 : vector<8x1xf32>
    %217 = vector.broadcast %216 : vector<8x1xf32> to vector<8x32xf32>
    %218 = arith.subf %210, %217 : vector<8x32xf32>
    %219 = arith.mulf %218, %218 : vector<8x32xf32>
    %cst_90 = arith.constant dense<0.000000e+00> : vector<8xf32>
    %220 = vector.multi_reduction <add>, %219, %cst_90 [1] : vector<8x32xf32> to vector<8xf32>
    %221 = vector.shape_cast %220 : vector<8xf32> to vector<8x1xf32>
    %cst_91 = arith.constant 3.200000e+01 : f32
    %222 = vector.broadcast %cst_91 : f32 to vector<8x1xf32>
    %223 = arith.divf %221, %222 : vector<8x1xf32>
    %224 = vector.broadcast %216 : vector<8x1xf32> to vector<8x32xf32>
    %225 = arith.subf %210, %224 : vector<8x32xf32>
    %cst_92 = arith.constant 9.99999974E-6 : f32
    %226 = vector.broadcast %cst_92 : f32 to vector<8x1xf32>
    %227 = arith.addf %223, %226 : vector<8x1xf32>
    %228 = math.rsqrt %227 : vector<8x1xf32>
    %229 = vector.broadcast %228 : vector<8x1xf32> to vector<8x32xf32>
    %230 = arith.mulf %225, %229 : vector<8x32xf32>
    %231 = vector.broadcast %211 : vector<1x32xf32> to vector<8x32xf32>
    %232 = arith.mulf %230, %231 : vector<8x32xf32>
    %233 = vector.broadcast %212 : vector<1x32xf32> to vector<8x32xf32>
    %234 = arith.addf %232, %233 : vector<8x32xf32>
    %c0_93 = arith.constant 0 : index
    %c0_94 = arith.constant 0 : index
    %235 = vector.load %arg18[%c0_93, %c0_94] : memref<32x128xf32, #tpu.memory_space<vmem>>, vector<32x128xf32>
    %cst_95 = arith.constant dense<0.000000e+00> : vector<8x128xf32>
    %236 = tpu.matmul %234, %235, %cst_95 {dimension_numbers = #tpu.dot_dimension_numbers<[1], [0], [0], [1], [0, 0, 1, 1], [], []>} : vector<8x32xf32>, vector<32x128xf32>, vector<8x128xf32> -> vector<8x128xf32>
    %c0_96 = arith.constant 0 : index
    %c0_97 = arith.constant 0 : index
    %237 = vector.load %arg19[%c0_96, %c0_97] : memref<1x128xf32, #tpu.memory_space<vmem>>, vector<1x128xf32>
    %238 = vector.broadcast %237 : vector<1x128xf32> to vector<8x128xf32>
    %239 = arith.addf %236, %238 : vector<8x128xf32>
    %cst_98 = arith.constant 0.000000e+00 : f32
    %240 = vector.broadcast %cst_98 : f32 to vector<8x128xf32>
    %241 = arith.maximumf %239, %240 : vector<8x128xf32>
    %c0_99 = arith.constant 0 : index
    %c0_100 = arith.constant 0 : index
    %242 = vector.load %arg20[%c0_99, %c0_100] : memref<128x32xf32, #tpu.memory_space<vmem>>, vector<128x32xf32>
    %cst_101 = arith.constant dense<0.000000e+00> : vector<8x32xf32>
    %243 = tpu.matmul %241, %242, %cst_101 {dimension_numbers = #tpu.dot_dimension_numbers<[1], [0], [0], [1], [0, 0, 1, 1], [], []>} : vector<8x128xf32>, vector<128x32xf32>, vector<8x32xf32> -> vector<8x32xf32>
    %c0_102 = arith.constant 0 : index
    %c0_103 = arith.constant 0 : index
    %244 = vector.load %arg21[%c0_102, %c0_103] : memref<1x32xf32, #tpu.memory_space<vmem>>, vector<1x32xf32>
    %245 = vector.broadcast %244 : vector<1x32xf32> to vector<8x32xf32>
    %246 = arith.addf %243, %245 : vector<8x32xf32>
    %247 = arith.addf %246, %234 : vector<8x32xf32>
    %c0_104 = arith.constant 0 : index
    %c0_105 = arith.constant 0 : index
    %248 = vector.load %arg22[%c0_104, %c0_105] : memref<1x32xf32, #tpu.memory_space<vmem>>, vector<1x32xf32>
    %c0_106 = arith.constant 0 : index
    %c0_107 = arith.constant 0 : index
    %249 = vector.load %arg23[%c0_106, %c0_107] : memref<1x32xf32, #tpu.memory_space<vmem>>, vector<1x32xf32>
    %cst_108 = arith.constant dense<0.000000e+00> : vector<8xf32>
    %250 = vector.multi_reduction <add>, %247, %cst_108 [1] : vector<8x32xf32> to vector<8xf32>
    %251 = vector.shape_cast %250 : vector<8xf32> to vector<8x1xf32>
    %cst_109 = arith.constant 3.200000e+01 : f32
    %252 = vector.broadcast %cst_109 : f32 to vector<8x1xf32>
    %253 = arith.divf %251, %252 : vector<8x1xf32>
    %254 = vector.broadcast %253 : vector<8x1xf32> to vector<8x32xf32>
    %255 = arith.subf %247, %254 : vector<8x32xf32>
    %256 = arith.mulf %255, %255 : vector<8x32xf32>
    %cst_110 = arith.constant dense<0.000000e+00> : vector<8xf32>
    %257 = vector.multi_reduction <add>, %256, %cst_110 [1] : vector<8x32xf32> to vector<8xf32>
    %258 = vector.shape_cast %257 : vector<8xf32> to vector<8x1xf32>
    %cst_111 = arith.constant 3.200000e+01 : f32
    %259 = vector.broadcast %cst_111 : f32 to vector<8x1xf32>
    %260 = arith.divf %258, %259 : vector<8x1xf32>
    %261 = vector.broadcast %253 : vector<8x1xf32> to vector<8x32xf32>
    %262 = arith.subf %247, %261 : vector<8x32xf32>
    %cst_112 = arith.constant 9.99999974E-6 : f32
    %263 = vector.broadcast %cst_112 : f32 to vector<8x1xf32>
    %264 = arith.addf %260, %263 : vector<8x1xf32>
    %265 = math.rsqrt %264 : vector<8x1xf32>
    %266 = vector.broadcast %265 : vector<8x1xf32> to vector<8x32xf32>
    %267 = arith.mulf %262, %266 : vector<8x32xf32>
    %268 = vector.broadcast %248 : vector<1x32xf32> to vector<8x32xf32>
    %269 = arith.mulf %267, %268 : vector<8x32xf32>
    %270 = vector.broadcast %249 : vector<1x32xf32> to vector<8x32xf32>
    %271 = arith.addf %269, %270 : vector<8x32xf32>
    %c0_113 = arith.constant 0 : index
    %c0_114 = arith.constant 0 : index
    %272 = vector.load %arg24[%c0_113, %c0_114] : memref<32x128xf32, #tpu.memory_space<vmem>>, vector<32x128xf32>
    %cst_115 = arith.constant dense<0.000000e+00> : vector<8x128xf32>
    %273 = tpu.matmul %271, %272, %cst_115 {dimension_numbers = #tpu.dot_dimension_numbers<[1], [0], [0], [1], [0, 0, 1, 1], [], []>} : vector<8x32xf32>, vector<32x128xf32>, vector<8x128xf32> -> vector<8x128xf32>
    %c0_116 = arith.constant 0 : index
    %c0_117 = arith.constant 0 : index
    %274 = vector.load %arg25[%c0_116, %c0_117] : memref<1x128xf32, #tpu.memory_space<vmem>>, vector<1x128xf32>
    %275 = vector.broadcast %274 : vector<1x128xf32> to vector<8x128xf32>
    %276 = arith.addf %273, %275 : vector<8x128xf32>
    %c0_118 = arith.constant 0 : index
    %c0_119 = arith.constant 0 : index
    %c0_120 = arith.constant 0 : index
    %277 = vector.load %arg26[%c0_118, %c0_119, %c0_120] : memref<1x8x128xf32, #tpu.memory_space<vmem>>, vector<1x8x128xf32>
    %278 = vector.shape_cast %277 : vector<1x8x128xf32> to vector<8x128xf32>
    %279 = vector.shape_cast %276 : vector<8x128xf32> to vector<1x8x128xf32>
    tpu.vector_store %arg26[%c0_118, %c0_119, %c0_120], %279 {strides = array<i32>} : memref<1x8x128xf32, #tpu.memory_space<vmem>>, vector<1x8x128xf32>,
    return
  }
  func.func @transform_0(%arg0: i32) -> (i32, i32, i32) {
    %c0_i32 = arith.constant 0 : i32
    %c0_i32_0 = arith.constant 0 : i32
    %c0_i32_1 = arith.constant 0 : i32
    return %arg0, %c0_i32, %c0_i32_0 : i32, i32, i32
  }
  func.func @transform_1(%arg0: i32) -> (i32, i32, i32) {
    %c0_i32 = arith.constant 0 : i32
    %c0_i32_0 = arith.constant 0 : i32
    %c0_i32_1 = arith.constant 0 : i32
    return %arg0, %c0_i32, %c0_i32_0 : i32, i32, i32
  }
  func.func @transform_2(%arg0: i32) -> (i32, i32, i32) {
    %c0_i32 = arith.constant 0 : i32
    %c0_i32_0 = arith.constant 0 : i32
    %c0_i32_1 = arith.constant 0 : i32
    return %arg0, %c0_i32, %c0_i32_0 : i32, i32, i32
  }
  func.func @transform_3(%arg0: i32) -> (i32, i32) {
    %c0_i32 = arith.constant 0 : i32
    %c0_i32_0 = arith.constant 0 : i32
    %c0_i32_1 = arith.constant 0 : i32
    return %c0_i32, %c0_i32_0 : i32, i32
  }
  func.func @transform_4(%arg0: i32) -> (i32, i32) {
    %c0_i32 = arith.constant 0 : i32
    %c0_i32_0 = arith.constant 0 : i32
    %c0_i32_1 = arith.constant 0 : i32
    return %c0_i32, %c0_i32_0 : i32, i32
  }
  func.func @transform_5(%arg0: i32) -> (i32, i32) {
    %c0_i32 = arith.constant 0 : i32
    %c0_i32_0 = arith.constant 0 : i32
    %c0_i32_1 = arith.constant 0 : i32
    return %c0_i32, %c0_i32_0 : i32, i32
  }
  func.func @transform_6(%arg0: i32) -> (i32, i32) {
    %c0_i32 = arith.constant 0 : i32
    %c0_i32_0 = arith.constant 0 : i32
    %c0_i32_1 = arith.constant 0 : i32
    return %c0_i32, %c0_i32_0 : i32, i32
  }
  func.func @transform_7(%arg0: i32) -> (i32, i32) {
    %c0_i32 = arith.constant 0 : i32
    %c0_i32_0 = arith.constant 0 : i32
    %c0_i32_1 = arith.constant 0 : i32
    return %c0_i32, %c0_i32_0 : i32, i32
  }
  func.func @transform_8(%arg0: i32) -> (i32, i32) {
    %c0_i32 = arith.constant 0 : i32
    %c0_i32_0 = arith.constant 0 : i32
    %c0_i32_1 = arith.constant 0 : i32
    return %c0_i32, %c0_i32_0 : i32, i32
  }
  func.func @transform_9(%arg0: i32) -> (i32, i32) {
    %c0_i32 = arith.constant 0 : i32
    %c0_i32_0 = arith.constant 0 : i32
    %c0_i32_1 = arith.constant 0 : i32
    return %c0_i32, %c0_i32_0 : i32, i32
  }
  func.func @transform_10(%arg0: i32) -> (i32, i32) {
    %c0_i32 = arith.constant 0 : i32
    %c0_i32_0 = arith.constant 0 : i32
    %c0_i32_1 = arith.constant 0 : i32
    return %c0_i32, %c0_i32_0 : i32, i32
  }
  func.func @transform_11(%arg0: i32) -> (i32, i32) {
    %c0_i32 = arith.constant 0 : i32
    %c0_i32_0 = arith.constant 0 : i32
    %c0_i32_1 = arith.constant 0 : i32
    return %c0_i32, %c0_i32_0 : i32, i32
  }
  func.func @transform_12(%arg0: i32) -> (i32, i32) {
    %c0_i32 = arith.constant 0 : i32
    %c0_i32_0 = arith.constant 0 : i32
    %c0_i32_1 = arith.constant 0 : i32
    return %c0_i32, %c0_i32_0 : i32, i32
  }
  func.func @transform_13(%arg0: i32) -> (i32, i32) {
    %c0_i32 = arith.constant 0 : i32
    %c0_i32_0 = arith.constant 0 : i32
    %c0_i32_1 = arith.constant 0 : i32
    return %c0_i32, %c0_i32_0 : i32, i32
  }
  func.func @transform_14(%arg0: i32) -> (i32, i32) {
    %c0_i32 = arith.constant 0 : i32
    %c0_i32_0 = arith.constant 0 : i32
    %c0_i32_1 = arith.constant 0 : i32
    return %c0_i32, %c0_i32_0 : i32, i32
  }
  func.func @transform_15(%arg0: i32) -> (i32, i32) {
    %c0_i32 = arith.constant 0 : i32
    %c0_i32_0 = arith.constant 0 : i32
    %c0_i32_1 = arith.constant 0 : i32
    return %c0_i32, %c0_i32_0 : i32, i32
  }
  func.func @transform_16(%arg0: i32) -> (i32, i32) {
    %c0_i32 = arith.constant 0 : i32
    %c0_i32_0 = arith.constant 0 : i32
    %c0_i32_1 = arith.constant 0 : i32
    return %c0_i32, %c0_i32_0 : i32, i32
  }
  func.func @transform_17(%arg0: i32) -> (i32, i32) {
    %c0_i32 = arith.constant 0 : i32
    %c0_i32_0 = arith.constant 0 : i32
    %c0_i32_1 = arith.constant 0 : i32
    return %c0_i32, %c0_i32_0 : i32, i32
  }
  func.func @transform_18(%arg0: i32) -> (i32, i32) {
    %c0_i32 = arith.constant 0 : i32
    %c0_i32_0 = arith.constant 0 : i32
    %c0_i32_1 = arith.constant 0 : i32
    return %c0_i32, %c0_i32_0 : i32, i32
  }
  func.func @transform_19(%arg0: i32) -> (i32, i32) {
    %c0_i32 = arith.constant 0 : i32
    %c0_i32_0 = arith.constant 0 : i32
    %c0_i32_1 = arith.constant 0 : i32
    return %c0_i32, %c0_i32_0 : i32, i32
  }
  func.func @transform_20(%arg0: i32) -> (i32, i32) {
    %c0_i32 = arith.constant 0 : i32
    %c0_i32_0 = arith.constant 0 : i32
    %c0_i32_1 = arith.constant 0 : i32
    return %c0_i32, %c0_i32_0 : i32, i32
  }
  func.func @transform_21(%arg0: i32) -> (i32, i32) {
    %c0_i32 = arith.constant 0 : i32
    %c0_i32_0 = arith.constant 0 : i32
    %c0_i32_1 = arith.constant 0 : i32
    return %c0_i32, %c0_i32_0 : i32, i32
  }
  func.func @transform_22(%arg0: i32) -> (i32, i32) {
    %c0_i32 = arith.constant 0 : i32
    %c0_i32_0 = arith.constant 0 : i32
    %c0_i32_1 = arith.constant 0 : i32
    return %c0_i32, %c0_i32_0 : i32, i32
  }
  func.func @transform_23(%arg0: i32) -> (i32, i32) {
    %c0_i32 = arith.constant 0 : i32
    %c0_i32_0 = arith.constant 0 : i32
    %c0_i32_1 = arith.constant 0 : i32
    return %c0_i32, %c0_i32_0 : i32, i32
  }
  func.func @transform_24(%arg0: i32) -> (i32, i32) {
    %c0_i32 = arith.constant 0 : i32
    %c0_i32_0 = arith.constant 0 : i32
    %c0_i32_1 = arith.constant 0 : i32
    return %c0_i32, %c0_i32_0 : i32, i32
  }
  func.func @transform_25(%arg0: i32) -> (i32, i32, i32) {
    %c0_i32 = arith.constant 0 : i32
    %c0_i32_0 = arith.constant 0 : i32
    %c0_i32_1 = arith.constant 0 : i32
    return %arg0, %c0_i32, %c0_i32_0 : i32, i32, i32
  }
}

</mosaic_0001>

<llo_original>
// kernel: decoder_forward.1
$region0: #{decoder_forward.1}
  #allocation0 [shape = 'u32[]', space=smem, size = 0x4, offset = 0x4, fixed_abs, tag = 'smem constant byte address 0x4 - core index']
  #allocation1 [shape = 'u32[144,128]{1,0:T(1,128)}', space=vmem, size = 0x12000, scoped, tag = 'internal scratch']
  %s0 = inlined_call_operand.vmem [shape: f32[2,8,32], index: 0, kind: input, shape index: {}]
  %s1 = inlined_call_operand.vmem [shape: f32[2,8,32], index: 1, kind: input, shape index: {}]
  %s2 = inlined_call_operand.vmem [shape: f32[2,1,8], index: 2, kind: input, shape index: {}]
  %s3 = inlined_call_operand.vmem [shape: f32[32,96], index: 3, kind: input, shape index: {}]
  %s4 = inlined_call_operand.vmem [shape: f32[1,96], index: 4, kind: input, shape index: {}]
  %s5 = inlined_call_operand.vmem [shape: f32[32,32], index: 5, kind: input, shape index: {}]
  %s6 = inlined_call_operand.vmem [shape: f32[1,32], index: 6, kind: input, shape index: {}]
  %s7 = inlined_call_operand.vmem [shape: f32[1,32], index: 7, kind: input, shape index: {}]
  %s8 = inlined_call_operand.vmem [shape: f32[1,32], index: 8, kind: input, shape index: {}]
  %s9 = inlined_call_operand.vmem [shape: f32[32,32], index: 9, kind: input, shape index: {}]
  %s10 = inlined_call_operand.vmem [shape: f32[1,32], index: 10, kind: input, shape index: {}]
  %s11 = inlined_call_operand.vmem [shape: f32[32,64], index: 11, kind: input, shape index: {}]
  %s12 = inlined_call_operand.vmem [shape: f32[1,64], index: 12, kind: input, shape index: {}]
  %s13 = inlined_call_operand.vmem [shape: f32[32,32], index: 13, kind: input, shape index: {}]
  %s14 = inlined_call_operand.vmem [shape: f32[1,32], index: 14, kind: input, shape index: {}]
  %s15 = inlined_call_operand.vmem [shape: f32[1,32], index: 15, kind: input, shape index: {}]
  %s16 = inlined_call_operand.vmem [shape: f32[1,32], index: 16, kind: input, shape index: {}]
  %s17 = inlined_call_operand.vmem [shape: f32[32,128], index: 17, kind: input, shape index: {}]
  %s18 = inlined_call_operand.vmem [shape: f32[1,128], index: 18, kind: input, shape index: {}]
  %s19 = inlined_call_operand.vmem [shape: f32[128,32], index: 19, kind: input, shape index: {}]
  %s20 = inlined_call_operand.vmem [shape: f32[1,32], index: 20, kind: input, shape index: {}]
  %s21 = inlined_call_operand.vmem [shape: f32[1,32], index: 21, kind: input, shape index: {}]
  %s22 = inlined_call_operand.vmem [shape: f32[1,32], index: 22, kind: input, shape index: {}]
  %s23 = inlined_call_operand.vmem [shape: f32[32,128], index: 23, kind: input, shape index: {}]
  %s24 = inlined_call_operand.vmem [shape: f32[1,128], index: 24, kind: input, shape index: {}]
  %s25 = inlined_call_operand.hbm [shape: f32[2,8,128], index: 25, kind: output, shape index: {}]
  %s26 = sld [smem:[#allocation0]]
  $region133: #{decoder_forward.1} parent=0
    _
  %s28 = ssub.s32 1, %s26
  %s29 = scalar_select 0, %s28, %s26
  $region1: #{decoder_forward.1} parent=0
    #allocation2 [shape = 'u8[8192]{0}', space=vmem, size = 0x2000, scoped, tag = 'output window, operand 0']
    #allocation3 [shape = 's32[2]{0}', space=sflag, size = 0x8, scoped, tag = 'scoped memory for decoder_forward.1']
    %30 = vsyncpa [#allocation3], 0
    %s31 = scalar_lea.sflag [#allocation3], 1
    %32 = vsyncpa %s31, 0
    loop: start=0, step=1, limit=4
    $region2: #{decoder_forward.1} parent=1 // loop_pre_header
      _
    $region3: #{decoder_forward.1} parent=1 // loop_header
      %s34 = sphi 0, %s38
      %p35 = scmp.ge.s32.totalorder %s34, 4
      %s44 = sphi 0, %s46
      %s47 = sphi 0, %s44
      %s48 = sphi 0, %s47
      %s64 = sphi 0, %s48
      %s70 = sphi 0, %s72
      %s73 = sphi 0, %s70
      %s74 = sphi 0, %s73
      %s90 = sphi 0, %s74
      %s96 = sphi 0, %s98
      %s99 = sphi 0, %s96
      %s100 = sphi 0, %s99
      %s116 = sphi 0, %s100
      %s120 = sphi 0, %s120
      %s122 = sphi 0, %s120
      %s123 = sphi 0, %s122
      %s137 = sphi 0, %s123
      %s141 = sphi 0, %s141
      %s143 = sphi 0, %s141
      %s144 = sphi 0, %s143
      %s158 = sphi 0, %s144
      %s162 = sphi 0, %s162
      %s164 = sphi 0, %s162
      %s165 = sphi 0, %s164
      %s179 = sphi 0, %s165
      %s183 = sphi 0, %s183
      %s185 = sphi 0, %s183
      %s186 = sphi 0, %s185
      %s200 = sphi 0, %s186
      %s204 = sphi 0, %s204
      %s206 = sphi 0, %s204
      %s207 = sphi 0, %s206
      %s221 = sphi 0, %s207
      %s225 = sphi 0, %s225
      %s227 = sphi 0, %s225
      %s228 = sphi 0, %s227
      %s242 = sphi 0, %s228
      %s246 = sphi 0, %s246
      %s248 = sphi 0, %s246
      %s249 = sphi 0, %s248
      %s263 = sphi 0, %s249
      %s267 = sphi 0, %s267
      %s269 = sphi 0, %s267
      %s270 = sphi 0, %s269
      %s284 = sphi 0, %s270
      %s288 = sphi 0, %s288
      %s290 = sphi 0, %s288
      %s291 = sphi 0, %s290
      %s305 = sphi 0, %s291
      %s309 = sphi 0, %s309
      %s311 = sphi 0, %s309
      %s312 = sphi 0, %s311
      %s326 = sphi 0, %s312
      %s330 = sphi 0, %s330
      %s332 = sphi 0, %s330
      %s333 = sphi 0, %s332
      %s347 = sphi 0, %s333
      %s351 = sphi 0, %s351
      %s353 = sphi 0, %s351
      %s354 = sphi 0, %s353
      %s368 = sphi 0, %s354
      %s372 = sphi 0, %s372
      %s374 = sphi 0, %s372
      %s375 = sphi 0, %s374
      %s389 = sphi 0, %s375
      %s393 = sphi 0, %s393
      %s395 = sphi 0, %s393
      %s396 = sphi 0, %s395
      %s410 = sphi 0, %s396
      %s414 = sphi 0, %s414
      %s416 = sphi 0, %s414
      %s417 = sphi 0, %s416
      %s431 = sphi 0, %s417
      %s435 = sphi 0, %s435
      %s437 = sphi 0, %s435
      %s438 = sphi 0, %s437
      %s452 = sphi 0, %s438
      %s456 = sphi 0, %s456
      %s458 = sphi 0, %s456
      %s459 = sphi 0, %s458
      %s473 = sphi 0, %s459
      %s477 = sphi 0, %s477
      %s479 = sphi 0, %s477
      %s480 = sphi 0, %s479
      %s494 = sphi 0, %s480
      %s498 = sphi 0, %s498
      %s500 = sphi 0, %s498
      %s501 = sphi 0, %s500
      %s515 = sphi 0, %s501
      %s519 = sphi 0, %s519
      %s521 = sphi 0, %s519
      %s522 = sphi 0, %s521
      %s536 = sphi 0, %s522
      %s540 = sphi 0, %s540
      %s542 = sphi 0, %s540
      %s543 = sphi 0, %s542
      %s557 = sphi 0, %s543
      %s561 = sphi 0, %s561
      %s563 = sphi 0, %s561
      %s564 = sphi 0, %s563
      %s578 = sphi 0, %s564
      %s584 = sphi 0, %s586
      %s587 = sphi 0, %s584
      %s588 = sphi 0, %s587
      %s604 = sphi 0, %s588
    $region4: #{decoder_forward.1} parent=1 // loop_header_branch
      %37 = sbr.rel (%p35) target = $region8
    $region5: #{decoder_forward.1} parent=1 // loop_body
      %s39 = ssub.s32 %s34, 1
      %s40 = ssub.s32 %s34, 2
      %s41 = sadd.s32 %s34, 1
      %s42 = ssub.s32 %s34, %s41
      %p43 = scmp.eq.s32.totalorder %s42, 0
      %s45 = sadd.s32 %s44, 1
      %s46 = scalar_select %p43, %s44, %s45
      %p49 = pneg %p43
      %p50 = scmp.eq.s32.totalorder %s34, 1
      %p51 = por %p49, %p50
      %p52 = scmp.ne.s32.totalorder %s44, %s47
      %p53 = scmp.eq.s32.totalorder %s34, 0
      %p54 = por %p52, %p53
      %p55 = scmp.ne.s32.totalorder %s44, %s47
      %p56 = scmp.eq.s32.totalorder %s39, 1
      %p57 = por %p55, %p56
      %p58 = scmp.ne.s32.totalorder %s47, %s48
      %p59 = scmp.eq.s32.totalorder %s39, 0
      %p60 = por %p58, %p59
      %p61 = scmp.ne.s32.totalorder %s47, %s48
      %p62 = scmp.eq.s32.totalorder %s40, 1
      %p63 = por %p61, %p62
      %p65 = scmp.ne.s32.totalorder %s48, %s64
      %p66 = scmp.eq.s32.totalorder %s40, 0
      %p67 = por %p65, %p66
      %s68 = ssub.s32 %s34, %s41
      %p69 = scmp.eq.s32.totalorder %s68, 0
      %s71 = sadd.s32 %s70, 1
      %s72 = scalar_select %p69, %s70, %s71
      %p75 = pneg %p69
      %p76 = scmp.eq.s32.totalorder %s34, 1
      %p77 = por %p75, %p76
      %p78 = scmp.ne.s32.totalorder %s70, %s73
      %p79 = scmp.eq.s32.totalorder %s34, 0
      %p80 = por %p78, %p79
      %p81 = scmp.ne.s32.totalorder %s70, %s73
      %p82 = scmp.eq.s32.totalorder %s39, 1
      %p83 = por %p81, %p82
      %p84 = scmp.ne.s32.totalorder %s73, %s74
      %p85 = scmp.eq.s32.totalorder %s39, 0
      %p86 = por %p84, %p85
      %p87 = scmp.ne.s32.totalorder %s73, %s74
      %p88 = scmp.eq.s32.totalorder %s40, 1
      %p89 = por %p87, %p88
      %p91 = scmp.ne.s32.totalorder %s74, %s90
      %p92 = scmp.eq.s32.totalorder %s40, 0
      %p93 = por %p91, %p92
      %s94 = ssub.s32 %s34, %s41
      %p95 = scmp.eq.s32.totalorder %s94, 0
      %s97 = sadd.s32 %s96, 1
      %s98 = scalar_select %p95, %s96, %s97
      %p101 = pneg %p95
      %p102 = scmp.eq.s32.totalorder %s34, 1
      %p103 = por %p101, %p102
      %p104 = scmp.ne.s32.totalorder %s96, %s99
      %p105 = scmp.eq.s32.totalorder %s34, 0
      %p106 = por %p104, %p105
      %p107 = scmp.ne.s32.totalorder %s96, %s99
      %p108 = scmp.eq.s32.totalorder %s39, 1
      %p109 = por %p107, %p108
      %p110 = scmp.ne.s32.totalorder %s99, %s100
      %p111 = scmp.eq.s32.totalorder %s39, 0
      %p112 = por %p110, %p111
      %p113 = scmp.ne.s32.totalorder %s99, %s100
      %p114 = scmp.eq.s32.totalorder %s40, 1
      %p115 = por %p113, %p114
      %p117 = scmp.ne.s32.totalorder %s100, %s116
      %p118 = scmp.eq.s32.totalorder %s40, 0
      %p119 = por %p117, %p118
      %s121 = sadd.s32 %s120, 1
      %p124 = scmp.eq.s32.totalorder %s34, 1
      %p125 = scmp.ne.s32.totalorder %s120, %s122
      %p126 = scmp.eq.s32.totalorder %s34, 0
      %p127 = por %p125, %p126
      %p128 = scmp.ne.s32.totalorder %s120, %s122
      %p129 = scmp.eq.s32.totalorder %s39, 1
      %p130 = por %p128, %p129
      %p131 = scmp.ne.s32.totalorder %s122, %s123
      %p132 = scmp.eq.s32.totalorder %s39, 0
      %p133 = por %p131, %p132
      %p134 = scmp.ne.s32.totalorder %s122, %s123
      %p135 = scmp.eq.s32.totalorder %s40, 1
      %p136 = por %p134, %p135
      %p138 = scmp.ne.s32.totalorder %s123, %s137
      %p139 = scmp.eq.s32.totalorder %s40, 0
      %p140 = por %p138, %p139
      %s142 = sadd.s32 %s141, 1
      %p145 = scmp.eq.s32.totalorder %s34, 1
      %p146 = scmp.ne.s32.totalorder %s141, %s143
      %p147 = scmp.eq.s32.totalorder %s34, 0
      %p148 = por %p146, %p147
      %p149 = scmp.ne.s32.totalorder %s141, %s143
      %p150 = scmp.eq.s32.totalorder %s39, 1
      %p151 = por %p149, %p150
      %p152 = scmp.ne.s32.totalorder %s143, %s144
      %p153 = scmp.eq.s32.totalorder %s39, 0
      %p154 = por %p152, %p153
      %p155 = scmp.ne.s32.totalorder %s143, %s144
      %p156 = scmp.eq.s32.totalorder %s40, 1
      %p157 = por %p155, %p156
      %p159 = scmp.ne.s32.totalorder %s144, %s158
      %p160 = scmp.eq.s32.totalorder %s40, 0
      %p161 = por %p159, %p160
      %s163 = sadd.s32 %s162, 1
      %p166 = scmp.eq.s32.totalorder %s34, 1
      %p167 = scmp.ne.s32.totalorder %s162, %s164
      %p168 = scmp.eq.s32.totalorder %s34, 0
      %p169 = por %p167, %p168
      %p170 = scmp.ne.s32.totalorder %s162, %s164
      %p171 = scmp.eq.s32.totalorder %s39, 1
      %p172 = por %p170, %p171
      %p173 = scmp.ne.s32.totalorder %s164, %s165
      %p174 = scmp.eq.s32.totalorder %s39, 0
      %p175 = por %p173, %p174
      %p176 = scmp.ne.s32.totalorder %s164, %s165
      %p177 = scmp.eq.s32.totalorder %s40, 1
      %p178 = por %p176, %p177
      %p180 = scmp.ne.s32.totalorder %s165, %s179
      %p181 = scmp.eq.s32.totalorder %s40, 0
      %p182 = por %p180, %p181
      %s184 = sadd.s32 %s183, 1
      %p187 = scmp.eq.s32.totalorder %s34, 1
      %p188 = scmp.ne.s32.totalorder %s183, %s185
      %p189 = scmp.eq.s32.totalorder %s34, 0
      %p190 = por %p188, %p189
      %p191 = scmp.ne.s32.totalorder %s183, %s185
      %p192 = scmp.eq.s32.totalorder %s39, 1
      %p193 = por %p191, %p192
      %p194 = scmp.ne.s32.totalorder %s185, %s186
      %p195 = scmp.eq.s32.totalorder %s39, 0
      %p196 = por %p194, %p195
      %p197 = scmp.ne.s32.totalorder %s185, %s186
      %p198 = scmp.eq.s32.totalorder %s40, 1
      %p199 = por %p197, %p198
      %p201 = scmp.ne.s32.totalorder %s186, %s200
      %p202 = scmp.eq.s32.totalorder %s40, 0
      %p203 = por %p201, %p202
      %s205 = sadd.s32 %s204, 1
      %p208 = scmp.eq.s32.totalorder %s34, 1
      %p209 = scmp.ne.s32.totalorder %s204, %s206
      %p210 = scmp.eq.s32.totalorder %s34, 0
      %p211 = por %p209, %p210
      %p212 = scmp.ne.s32.totalorder %s204, %s206
      %p213 = scmp.eq.s32.totalorder %s39, 1
      %p214 = por %p212, %p213
      %p215 = scmp.ne.s32.totalorder %s206, %s207
      %p216 = scmp.eq.s32.totalorder %s39, 0
      %p217 = por %p215, %p216
      %p218 = scmp.ne.s32.totalorder %s206, %s207
      %p219 = scmp.eq.s32.totalorder %s40, 1
      %p220 = por %p218, %p219
      %p222 = scmp.ne.s32.totalorder %s207, %s221
      %p223 = scmp.eq.s32.totalorder %s40, 0
      %p224 = por %p222, %p223
      %s226 = sadd.s32 %s225, 1
      %p229 = scmp.eq.s32.totalorder %s34, 1
      %p230 = scmp.ne.s32.totalorder %s225, %s227
      %p231 = scmp.eq.s32.totalorder %s34, 0
      %p232 = por %p230, %p231
      %p233 = scmp.ne.s32.totalorder %s225, %s227
      %p234 = scmp.eq.s32.totalorder %s39, 1
      %p235 = por %p233, %p234
      %p236 = scmp.ne.s32.totalorder %s227, %s228
      %p237 = scmp.eq.s32.totalorder %s39, 0
      %p238 = por %p236, %p237
      %p239 = scmp.ne.s32.totalorder %s227, %s228
      %p240 = scmp.eq.s32.totalorder %s40, 1
      %p241 = por %p239, %p240
      %p243 = scmp.ne.s32.totalorder %s228, %s242
      %p244 = scmp.eq.s32.totalorder %s40, 0
      %p245 = por %p243, %p244
      %s247 = sadd.s32 %s246, 1
      %p250 = scmp.eq.s32.totalorder %s34, 1
      %p251 = scmp.ne.s32.totalorder %s246, %s248
      %p252 = scmp.eq.s32.totalorder %s34, 0
      %p253 = por %p251, %p252
      %p254 = scmp.ne.s32.totalorder %s246, %s248
      %p255 = scmp.eq.s32.totalorder %s39, 1
      %p256 = por %p254, %p255
      %p257 = scmp.ne.s32.totalorder %s248, %s249
      %p258 = scmp.eq.s32.totalorder %s39, 0
      %p259 = por %p257, %p258
      %p260 = scmp.ne.s32.totalorder %s248, %s249
      %p261 = scmp.eq.s32.totalorder %s40, 1
      %p262 = por %p260, %p261
      %p264 = scmp.ne.s32.totalorder %s249, %s263
      %p265 = scmp.eq.s32.totalorder %s40, 0
      %p266 = por %p264, %p265
      %s268 = sadd.s32 %s267, 1
      %p271 = scmp.eq.s32.totalorder %s34, 1
      %p272 = scmp.ne.s32.totalorder %s267, %s269
      %p273 = scmp.eq.s32.totalorder %s34, 0
      %p274 = por %p272, %p273
      %p275 = scmp.ne.s32.totalorder %s267, %s269
      %p276 = scmp.eq.s32.totalorder %s39, 1
      %p277 = por %p275, %p276
      %p278 = scmp.ne.s32.totalorder %s269, %s270
      %p279 = scmp.eq.s32.totalorder %s39, 0
      %p280 = por %p278, %p279
      %p281 = scmp.ne.s32.totalorder %s269, %s270
      %p282 = scmp.eq.s32.totalorder %s40, 1
      %p283 = por %p281, %p282
      %p285 = scmp.ne.s32.totalorder %s270, %s284
      %p286 = scmp.eq.s32.totalorder %s40, 0
      %p287 = por %p285, %p286
      %s289 = sadd.s32 %s288, 1
      %p292 = scmp.eq.s32.totalorder %s34, 1
      %p293 = scmp.ne.s32.totalorder %s288, %s290
      %p294 = scmp.eq.s32.totalorder %s34, 0
      %p295 = por %p293, %p294
      %p296 = scmp.ne.s32.totalorder %s288, %s290
      %p297 = scmp.eq.s32.totalorder %s39, 1
      %p298 = por %p296, %p297
      %p299 = scmp.ne.s32.totalorder %s290, %s291
      %p300 = scmp.eq.s32.totalorder %s39, 0
      %p301 = por %p299, %p300
      %p302 = scmp.ne.s32.totalorder %s290, %s291
      %p303 = scmp.eq.s32.totalorder %s40, 1
      %p304 = por %p302, %p303
      %p306 = scmp.ne.s32.totalorder %s291, %s305
      %p307 = scmp.eq.s32.totalorder %s40, 0
      %p308 = por %p306, %p307
      %s310 = sadd.s32 %s309, 1
      %p313 = scmp.eq.s32.totalorder %s34, 1
      %p314 = scmp.ne.s32.totalorder %s309, %s311
      %p315 = scmp.eq.s32.totalorder %s34, 0
      %p316 = por %p314, %p315
      %p317 = scmp.ne.s32.totalorder %s309, %s311
      %p318 = scmp.eq.s32.totalorder %s39, 1
      %p319 = por %p317, %p318
      %p320 = scmp.ne.s32.totalorder %s311, %s312
      %p321 = scmp.eq.s32.totalorder %s39, 0
      %p322 = por %p320, %p321
      %p323 = scmp.ne.s32.totalorder %s311, %s312
      %p324 = scmp.eq.s32.totalorder %s40, 1
      %p325 = por %p323, %p324
      %p327 = scmp.ne.s32.totalorder %s312, %s326
      %p328 = scmp.eq.s32.totalorder %s40, 0
      %p329 = por %p327, %p328
      %s331 = sadd.s32 %s330, 1
      %p334 = scmp.eq.s32.totalorder %s34, 1
      %p335 = scmp.ne.s32.totalorder %s330, %s332
      %p336 = scmp.eq.s32.totalorder %s34, 0
      %p337 = por %p335, %p336
      %p338 = scmp.ne.s32.totalorder %s330, %s332
      %p339 = scmp.eq.s32.totalorder %s39, 1
      %p340 = por %p338, %p339
      %p341 = scmp.ne.s32.totalorder %s332, %s333
      %p342 = scmp.eq.s32.totalorder %s39, 0
      %p343 = por %p341, %p342
      %p344 = scmp.ne.s32.totalorder %s332, %s333
      %p345 = scmp.eq.s32.totalorder %s40, 1
      %p346 = por %p344, %p345
      %p348 = scmp.ne.s32.totalorder %s333, %s347
      %p349 = scmp.eq.s32.totalorder %s40, 0
      %p350 = por %p348, %p349
      %s352 = sadd.s32 %s351, 1
      %p355 = scmp.eq.s32.totalorder %s34, 1
      %p356 = scmp.ne.s32.totalorder %s351, %s353
      %p357 = scmp.eq.s32.totalorder %s34, 0
      %p358 = por %p356, %p357
      %p359 = scmp.ne.s32.totalorder %s351, %s353
      %p360 = scmp.eq.s32.totalorder %s39, 1
      %p361 = por %p359, %p360
      %p362 = scmp.ne.s32.totalorder %s353, %s354
      %p363 = scmp.eq.s32.totalorder %s39, 0
      %p364 = por %p362, %p363
      %p365 = scmp.ne.s32.totalorder %s353, %s354
      %p366 = scmp.eq.s32.totalorder %s40, 1
      %p367 = por %p365, %p366
      %p369 = scmp.ne.s32.totalorder %s354, %s368
      %p370 = scmp.eq.s32.totalorder %s40, 0
      %p371 = por %p369, %p370
      %s373 = sadd.s32 %s372, 1
      %p376 = scmp.eq.s32.totalorder %s34, 1
      %p377 = scmp.ne.s32.totalorder %s372, %s374
      %p378 = scmp.eq.s32.totalorder %s34, 0
      %p379 = por %p377, %p378
      %p380 = scmp.ne.s32.totalorder %s372, %s374
      %p381 = scmp.eq.s32.totalorder %s39, 1
      %p382 = por %p380, %p381
      %p383 = scmp.ne.s32.totalorder %s374, %s375
      %p384 = scmp.eq.s32.totalorder %s39, 0
      %p385 = por %p383, %p384
      %p386 = scmp.ne.s32.totalorder %s374, %s375
      %p387 = scmp.eq.s32.totalorder %s40, 1
      %p388 = por %p386, %p387
      %p390 = scmp.ne.s32.totalorder %s375, %s389
      %p391 = scmp.eq.s32.totalorder %s40, 0
      %p392 = por %p390, %p391
      %s394 = sadd.s32 %s393, 1
      %p397 = scmp.eq.s32.totalorder %s34, 1
      %p398 = scmp.ne.s32.totalorder %s393, %s395
      %p399 = scmp.eq.s32.totalorder %s34, 0
      %p400 = por %p398, %p399
      %p401 = scmp.ne.s32.totalorder %s393, %s395
      %p402 = scmp.eq.s32.totalorder %s39, 1
      %p403 = por %p401, %p402
      %p404 = scmp.ne.s32.totalorder %s395, %s396
      %p405 = scmp.eq.s32.totalorder %s39, 0
      %p406 = por %p404, %p405
      %p407 = scmp.ne.s32.totalorder %s395, %s396
      %p408 = scmp.eq.s32.totalorder %s40, 1
      %p409 = por %p407, %p408
      %p411 = scmp.ne.s32.totalorder %s396, %s410
      %p412 = scmp.eq.s32.totalorder %s40, 0
      %p413 = por %p411, %p412
      %s415 = sadd.s32 %s414, 1
      %p418 = scmp.eq.s32.totalorder %s34, 1
      %p419 = scmp.ne.s32.totalorder %s414, %s416
      %p420 = scmp.eq.s32.totalorder %s34, 0
      %p421 = por %p419, %p420
      %p422 = scmp.ne.s32.totalorder %s414, %s416
      %p423 = scmp.eq.s32.totalorder %s39, 1
      %p424 = por %p422, %p423
      %p425 = scmp.ne.s32.totalorder %s416, %s417
      %p426 = scmp.eq.s32.totalorder %s39, 0
      %p427 = por %p425, %p426
      %p428 = scmp.ne.s32.totalorder %s416, %s417
      %p429 = scmp.eq.s32.totalorder %s40, 1
      %p430 = por %p428, %p429
      %p432 = scmp.ne.s32.totalorder %s417, %s431
      %p433 = scmp.eq.s32.totalorder %s40, 0
      %p434 = por %p432, %p433
      %s436 = sadd.s32 %s435, 1
      %p439 = scmp.eq.s32.totalorder %s34, 1
      %p440 = scmp.ne.s32.totalorder %s435, %s437
      %p441 = scmp.eq.s32.totalorder %s34, 0
      %p442 = por %p440, %p441
      %p443 = scmp.ne.s32.totalorder %s435, %s437
      %p444 = scmp.eq.s32.totalorder %s39, 1
      %p445 = por %p443, %p444
      %p446 = scmp.ne.s32.totalorder %s437, %s438
      %p447 = scmp.eq.s32.totalorder %s39, 0
      %p448 = por %p446, %p447
      %p449 = scmp.ne.s32.totalorder %s437, %s438
      %p450 = scmp.eq.s32.totalorder %s40, 1
      %p451 = por %p449, %p450
      %p453 = scmp.ne.s32.totalorder %s438, %s452
      %p454 = scmp.eq.s32.totalorder %s40, 0
      %p455 = por %p453, %p454
      %s457 = sadd.s32 %s456, 1
      %p460 = scmp.eq.s32.totalorder %s34, 1
      %p461 = scmp.ne.s32.totalorder %s456, %s458
      %p462 = scmp.eq.s32.totalorder %s34, 0
      %p463 = por %p461, %p462
      %p464 = scmp.ne.s32.totalorder %s456, %s458
      %p465 = scmp.eq.s32.totalorder %s39, 1
      %p466 = por %p464, %p465
      %p467 = scmp.ne.s32.totalorder %s458, %s459
      %p468 = scmp.eq.s32.totalorder %s39, 0
      %p469 = por %p467, %p468
      %p470 = scmp.ne.s32.totalorder %s458, %s459
      %p471 = scmp.eq.s32.totalorder %s40, 1
      %p472 = por %p470, %p471
      %p474 = scmp.ne.s32.totalorder %s459, %s473
      %p475 = scmp.eq.s32.totalorder %s40, 0
      %p476 = por %p474, %p475
      %s478 = sadd.s32 %s477, 1
      %p481 = scmp.eq.s32.totalorder %s34, 1
      %p482 = scmp.ne.s32.totalorder %s477, %s479
      %p483 = scmp.eq.s32.totalorder %s34, 0
      %p484 = por %p482, %p483
      %p485 = scmp.ne.s32.totalorder %s477, %s479
      %p486 = scmp.eq.s32.totalorder %s39, 1
      %p487 = por %p485, %p486
      %p488 = scmp.ne.s32.totalorder %s479, %s480
      %p489 = scmp.eq.s32.totalorder %s39, 0
      %p490 = por %p488, %p489
      %p491 = scmp.ne.s32.totalorder %s479, %s480
      %p492 = scmp.eq.s32.totalorder %s40, 1
      %p493 = por %p491, %p492
      %p495 = scmp.ne.s32.totalorder %s480, %s494
      %p496 = scmp.eq.s32.totalorder %s40, 0
      %p497 = por %p495, %p496
      %s499 = sadd.s32 %s498, 1
      %p502 = scmp.eq.s32.totalorder %s34, 1
      %p503 = scmp.ne.s32.totalorder %s498, %s500
      %p504 = scmp.eq.s32.totalorder %s34, 0
      %p505 = por %p503, %p504
      %p506 = scmp.ne.s32.totalorder %s498, %s500
      %p507 = scmp.eq.s32.totalorder %s39, 1
      %p508 = por %p506, %p507
      %p509 = scmp.ne.s32.totalorder %s500, %s501
      %p510 = scmp.eq.s32.totalorder %s39, 0
      %p511 = por %p509, %p510
      %p512 = scmp.ne.s32.totalorder %s500, %s501
      %p513 = scmp.eq.s32.totalorder %s40, 1
      %p514 = por %p512, %p513
      %p516 = scmp.ne.s32.totalorder %s501, %s515
      %p517 = scmp.eq.s32.totalorder %s40, 0
      %p518 = por %p516, %p517
      %s520 = sadd.s32 %s519, 1
      %p523 = scmp.eq.s32.totalorder %s34, 1
      %p524 = scmp.ne.s32.totalorder %s519, %s521
      %p525 = scmp.eq.s32.totalorder %s34, 0
      %p526 = por %p524, %p525
      %p527 = scmp.ne.s32.totalorder %s519, %s521
      %p528 = scmp.eq.s32.totalorder %s39, 1
      %p529 = por %p527, %p528
      %p530 = scmp.ne.s32.totalorder %s521, %s522
      %p531 = scmp.eq.s32.totalorder %s39, 0
      %p532 = por %p530, %p531
      %p533 = scmp.ne.s32.totalorder %s521, %s522
      %p534 = scmp.eq.s32.totalorder %s40, 1
      %p535 = por %p533, %p534
      %p537 = scmp.ne.s32.totalorder %s522, %s536
      %p538 = scmp.eq.s32.totalorder %s40, 0
      %p539 = por %p537, %p538
      %s541 = sadd.s32 %s540, 1
      %p544 = scmp.eq.s32.totalorder %s34, 1
      %p545 = scmp.ne.s32.totalorder %s540, %s542
      %p546 = scmp.eq.s32.totalorder %s34, 0
      %p547 = por %p545, %p546
      %p548 = scmp.ne.s32.totalorder %s540, %s542
      %p549 = scmp.eq.s32.totalorder %s39, 1
      %p550 = por %p548, %p549
      %p551 = scmp.ne.s32.totalorder %s542, %s543
      %p552 = scmp.eq.s32.totalorder %s39, 0
      %p553 = por %p551, %p552
      %p554 = scmp.ne.s32.totalorder %s542, %s543
      %p555 = scmp.eq.s32.totalorder %s40, 1
      %p556 = por %p554, %p555
      %p558 = scmp.ne.s32.totalorder %s543, %s557
      %p559 = scmp.eq.s32.totalorder %s40, 0
      %p560 = por %p558, %p559
      %s562 = sadd.s32 %s561, 1
      %p565 = scmp.eq.s32.totalorder %s34, 1
      %p566 = scmp.ne.s32.totalorder %s561, %s563
      %p567 = scmp.eq.s32.totalorder %s34, 0
      %p568 = por %p566, %p567
      %p569 = scmp.ne.s32.totalorder %s561, %s563
      %p570 = scmp.eq.s32.totalorder %s39, 1
      %p571 = por %p569, %p570
      %p572 = scmp.ne.s32.totalorder %s563, %s564
      %p573 = scmp.eq.s32.totalorder %s39, 0
      %p574 = por %p572, %p573
      %p575 = scmp.ne.s32.totalorder %s563, %s564
      %p576 = scmp.eq.s32.totalorder %s40, 1
      %p577 = por %p575, %p576
      %p579 = scmp.ne.s32.totalorder %s564, %s578
      %p580 = scmp.eq.s32.totalorder %s40, 0
      %p581 = por %p579, %p580
      %s582 = ssub.s32 %s34, %s41
      %p583 = scmp.eq.s32.totalorder %s582, 0
      %s585 = sadd.s32 %s584, 1
      %s586 = scalar_select %p583, %s584, %s585
      %p589 = pneg %p583
      %p590 = scmp.eq.s32.totalorder %s34, 1
      %p591 = por %p589, %p590
      %p592 = scmp.ne.s32.totalorder %s584, %s587
      %p593 = scmp.eq.s32.totalorder %s34, 0
      %p594 = por %p592, %p593
      %p595 = scmp.ne.s32.totalorder %s584, %s587
      %p596 = scmp.eq.s32.totalorder %s39, 1
      %p597 = por %p595, %p596
      %p598 = scmp.ne.s32.totalorder %s587, %s588
      %p599 = scmp.eq.s32.totalorder %s39, 0
      %p600 = por %p598, %p599
      %p601 = scmp.ne.s32.totalorder %s587, %s588
      %p602 = scmp.eq.s32.totalorder %s40, 1
      %p603 = por %p601, %p602
      %p605 = scmp.ne.s32.totalorder %s588, %s604
      %p606 = scmp.eq.s32.totalorder %s40, 0
      %p607 = por %p605, %p606
      %p608 = scmp.le.s32.totalorder 1, %s34
      %p609 = scmp.lt.s32.totalorder %s34, 3
      %p610 = pnand %p608, %p609
      %p611 = pneg %p610
      // Predicated region
      $region9: #{decoder_forward.1} parent=5 // pred_check
        _
      $region10: #{decoder_forward.1} parent=5 // pred_check_branch
        %613 = sbr.rel (%p610) target = $region12
      $region11: #{decoder_forward.1} parent=5 // pred_region
        %s614 = ssub.s32 %s34, 1
        // Predicated region
        $region13: #{decoder_forward.1} parent=11 // pred_check
          %p615 = pneg %p133
        $region14: #{decoder_forward.1} parent=11 // pred_check_branch
          %617 = sbr.rel (%p615) target = $region16
        $region15: #{decoder_forward.1} parent=11 // pred_region
          _
        $region16: #{decoder_forward.1} parent=11 // pred_fallthru
          _
        // Predicated region
        $region17: #{decoder_forward.1} parent=11 // pred_check
          %p618 = pneg %p154
        $region18: #{decoder_forward.1} parent=11 // pred_check_branch
          %620 = sbr.rel (%p618) target = $region20
        $region19: #{decoder_forward.1} parent=11 // pred_region
          _
        $region20: #{decoder_forward.1} parent=11 // pred_fallthru
          _
        // Predicated region
        $region21: #{decoder_forward.1} parent=11 // pred_check
          %p621 = pneg %p175
        $region22: #{decoder_forward.1} parent=11 // pred_check_branch
          %623 = sbr.rel (%p621) target = $region24
        $region23: #{decoder_forward.1} parent=11 // pred_region
          _
        $region24: #{decoder_forward.1} parent=11 // pred_fallthru
          _
        // Predicated region
        $region25: #{decoder_forward.1} parent=11 // pred_check
          %p624 = pneg %p196
        $region26: #{decoder_forward.1} parent=11 // pred_check_branch
          %626 = sbr.rel (%p624) target = $region28
        $region27: #{decoder_forward.1} parent=11 // pred_region
          _
        $region28: #{decoder_forward.1} parent=11 // pred_fallthru
          _
        // Predicated region
        $region29: #{decoder_forward.1} parent=11 // pred_check
          %p627 = pneg %p217
        $region30: #{decoder_forward.1} parent=11 // pred_check_branch
          %629 = sbr.rel (%p627) target = $region32
        $region31: #{decoder_forward.1} parent=11 // pred_region
          _
        $region32: #{decoder_forward.1} parent=11 // pred_fallthru
          _
        // Predicated region
        $region33: #{decoder_forward.1} parent=11 // pred_check
          %p630 = pneg %p238
        $region34: #{decoder_forward.1} parent=11 // pred_check_branch
          %632 = sbr.rel (%p630) target = $region36
        $region35: #{decoder_forward.1} parent=11 // pred_region
          _
        $region36: #{decoder_forward.1} parent=11 // pred_fallthru
          _
        // Predicated region
        $region37: #{decoder_forward.1} parent=11 // pred_check
          %p633 = pneg %p259
        $region38: #{decoder_forward.1} parent=11 // pred_check_branch
          %635 = sbr.rel (%p633) target = $region40
        $region39: #{decoder_forward.1} parent=11 // pred_region
          _
        $region40: #{decoder_forward.1} parent=11 // pred_fallthru
          _
        // Predicated region
        $region41: #{decoder_forward.1} parent=11 // pred_check
          %p636 = pneg %p280
        $region42: #{decoder_forward.1} parent=11 // pred_check_branch
          %638 = sbr.rel (%p636) target = $region44
        $region43: #{decoder_forward.1} parent=11 // pred_region
          _
        $region44: #{decoder_forward.1} parent=11 // pred_fallthru
          _
        // Predicated region
        $region45: #{decoder_forward.1} parent=11 // pred_check
          %p639 = pneg %p301
        $region46: #{decoder_forward.1} parent=11 // pred_check_branch
          %641 = sbr.rel (%p639) target = $region48
        $region47: #{decoder_forward.1} parent=11 // pred_region
          _
        $region48: #{decoder_forward.1} parent=11 // pred_fallthru
          _
        // Predicated region
        $region49: #{decoder_forward.1} parent=11 // pred_check
          %p642 = pneg %p322
        $region50: #{decoder_forward.1} parent=11 // pred_check_branch
          %644 = sbr.rel (%p642) target = $region52
        $region51: #{decoder_forward.1} parent=11 // pred_region
          _
        $region52: #{decoder_forward.1} parent=11 // pred_fallthru
          _
        // Predicated region
        $region53: #{decoder_forward.1} parent=11 // pred_check
          %p645 = pneg %p343
        $region54: #{decoder_forward.1} parent=11 // pred_check_branch
          %647 = sbr.rel (%p645) target = $region56
        $region55: #{decoder_forward.1} parent=11 // pred_region
          _
        $region56: #{decoder_forward.1} parent=11 // pred_fallthru
          _
        // Predicated region
        $region57: #{decoder_forward.1} parent=11 // pred_check
          %p648 = pneg %p364
        $region58: #{decoder_forward.1} parent=11 // pred_check_branch
          %650 = sbr.rel (%p648) target = $region60
        $region59: #{decoder_forward.1} parent=11 // pred_region
          _
        $region60: #{decoder_forward.1} parent=11 // pred_fallthru
          _
        // Predicated region
        $region61: #{decoder_forward.1} parent=11 // pred_check
          %p651 = pneg %p385
        $region62: #{decoder_forward.1} parent=11 // pred_check_branch
          %653 = sbr.rel (%p651) target = $region64
        $region63: #{decoder_forward.1} parent=11 // pred_region
          _
        $region64: #{decoder_forward.1} parent=11 // pred_fallthru
          _
        // Predicated region
        $region65: #{decoder_forward.1} parent=11 // pred_check
          %p654 = pneg %p406
        $region66: #{decoder_forward.1} parent=11 // pred_check_branch
          %656 = sbr.rel (%p654) target = $region68
        $region67: #{decoder_forward.1} parent=11 // pred_region
          _
        $region68: #{decoder_forward.1} parent=11 // pred_fallthru
          _
        // Predicated region
        $region69: #{decoder_forward.1} parent=11 // pred_check
          %p657 = pneg %p427
        $region70: #{decoder_forward.1} parent=11 // pred_check_branch
          %659 = sbr.rel (%p657) target = $region72
        $region71: #{decoder_forward.1} parent=11 // pred_region
          _
        $region72: #{decoder_forward.1} parent=11 // pred_fallthru
          _
        // Predicated region
        $region73: #{decoder_forward.1} parent=11 // pred_check
          %p660 = pneg %p448
        $region74: #{decoder_forward.1} parent=11 // pred_check_branch
          %662 = sbr.rel (%p660) target = $region76
        $region75: #{decoder_forward.1} parent=11 // pred_region
          _
        $region76: #{decoder_forward.1} parent=11 // pred_fallthru
          _
        // Predicated region
        $region77: #{decoder_forward.1} parent=11 // pred_check
          %p663 = pneg %p469
        $region78: #{decoder_forward.1} parent=11 // pred_check_branch
          %665 = sbr.rel (%p663) target = $region80
        $region79: #{decoder_forward.1} parent=11 // pred_region
          _
        $region80: #{decoder_forward.1} parent=11 // pred_fallthru
          _
        // Predicated region
        $region81: #{decoder_forward.1} parent=11 // pred_check
          %p666 = pneg %p490
        $region82: #{decoder_forward.1} parent=11 // pred_check_branch
          %668 = sbr.rel (%p666) target = $region84
        $region83: #{decoder_forward.1} parent=11 // pred_region
          _
        $region84: #{decoder_forward.1} parent=11 // pred_fallthru
          _
        // Predicated region
        $region85: #{decoder_forward.1} parent=11 // pred_check
          %p669 = pneg %p511
        $region86: #{decoder_forward.1} parent=11 // pred_check_branch
          %671 = sbr.rel (%p669) target = $region88
        $region87: #{decoder_forward.1} parent=11 // pred_region
          _
        $region88: #{decoder_forward.1} parent=11 // pred_fallthru
          _
        // Predicated region
        $region89: #{decoder_forward.1} parent=11 // pred_check
          %p672 = pneg %p532
        $region90: #{decoder_forward.1} parent=11 // pred_check_branch
          %674 = sbr.rel (%p672) target = $region92
        $region91: #{decoder_forward.1} parent=11 // pred_region
          _
        $region92: #{decoder_forward.1} parent=11 // pred_fallthru
          _
        // Predicated region
        $region93: #{decoder_forward.1} parent=11 // pred_check
          %p675 = pneg %p553
        $region94: #{decoder_forward.1} parent=11 // pred_check_branch
          %677 = sbr.rel (%p675) target = $region96
        $region95: #{decoder_forward.1} parent=11 // pred_region
          _
        $region96: #{decoder_forward.1} parent=11 // pred_fallthru
          _
        // Predicated region
        $region97: #{decoder_forward.1} parent=11 // pred_check
          %p678 = pneg %p574
        $region98: #{decoder_forward.1} parent=11 // pred_check_branch
          %680 = sbr.rel (%p678) target = $region100
        $region99: #{decoder_forward.1} parent=11 // pred_region
          _
        $region100: #{decoder_forward.1} parent=11 // pred_fallthru
          _
      $region12: #{decoder_forward.1} parent=5 // pred_fallthru
        _
      %p681 = scmp.lt.s32.totalorder %s34, 2
      // Predicated region
      $region101: #{decoder_forward.1} parent=5 // pred_check
        %p682 = pneg %p681
      $region102: #{decoder_forward.1} parent=5 // pred_check_branch
        %684 = sbr.rel (%p682) target = $region104
      $region103: #{decoder_forward.1} parent=5 // pred_region
        // Predicated region
        $region105: #{decoder_forward.1} parent=103 // pred_check
          %p685 = pneg %p54
        $region106: #{decoder_forward.1} parent=103 // pred_check_branch
          %687 = sbr.rel (%p685) target = $region108
        $region107: #{decoder_forward.1} parent=103 // pred_region
          %p688 = scmp.lt.s32.totalorder %s34, 1
          %s689 = scalar_select %p688, %s34, 1
          %s690 = smul.addr %s689, 8
          %s691 = scalar_lea.vmem %s0, %s690
        $region108: #{decoder_forward.1} parent=103 // pred_fallthru
          _
        // Predicated region
        $region109: #{decoder_forward.1} parent=103 // pred_check
          %p692 = pneg %p80
        $region110: #{decoder_forward.1} parent=103 // pred_check_branch
          %694 = sbr.rel (%p692) target = $region112
        $region111: #{decoder_forward.1} parent=103 // pred_region
          %p695 = scmp.lt.s32.totalorder %s34, 1
          %s696 = scalar_select %p695, %s34, 1
          %s697 = smul.addr %s696, 8
          %s698 = scalar_lea.vmem %s1, %s697
        $region112: #{decoder_forward.1} parent=103 // pred_fallthru
          _
        // Predicated region
        $region113: #{decoder_forward.1} parent=103 // pred_check
          %p699 = pneg %p106
        $region114: #{decoder_forward.1} parent=103 // pred_check_branch
          %701 = sbr.rel (%p699) target = $region116
        $region115: #{decoder_forward.1} parent=103 // pred_region
          %p702 = scmp.lt.s32.totalorder %s34, 1
          %s703 = scalar_select %p702, %s34, 1
          %s704 = scalar_lea.vmem %s2, %s703
        $region116: #{decoder_forward.1} parent=103 // pred_fallthru
          _
      $region104: #{decoder_forward.1} parent=5 // pred_fallthru
        _
      %p705 = scmp.le.s32.totalorder 1, %s34
      %p706 = scmp.lt.s32.totalorder %s34, 3
      %p707 = pnand %p705, %p706
      %p708 = pneg %p707
      // Predicated region
      $region117: #{decoder_forward.1} parent=5 // pred_check
        _
      $region118: #{decoder_forward.1} parent=5 // pred_check_branch
        %710 = sbr.rel (%p707) target = $region120
      $region119: #{decoder_forward.1} parent=5 // pred_region
        %s711 = ssub.s32 %s34, 1
        %p712 = scmp.lt.s32.totalorder %s39, 1
        %s713 = scalar_select %p712, %s39, 1
        %s714 = smul.addr %s713, 8
        %s715 = scalar_lea.vmem %s0, %s714
        %p716 = pneg %p60
        %p717 = pneg %p57
        %p718 = scmp.lt.s32.totalorder %s39, 1
        %s719 = scalar_select %p718, %s39, 1
        %s720 = smul.addr %s719, 8
        %s721 = scalar_lea.vmem %s1, %s720
        %p722 = pneg %p86
        %p723 = pneg %p83
        %p724 = scmp.lt.s32.totalorder %s39, 1
        %s725 = scalar_select %p724, %s39, 1
        %s726 = scalar_lea.vmem %s2, %s725
        %p727 = pneg %p112
        %p728 = pneg %p109
        %p729 = pneg %p133
        %p730 = pneg %p130
        %p731 = pneg %p154
        %p732 = pneg %p151
        %p733 = pneg %p175
        %p734 = pneg %p172
        %p735 = pneg %p196
        %p736 = pneg %p193
        %p737 = pneg %p217
        %p738 = pneg %p214
        %p739 = pneg %p238
        %p740 = pneg %p235
        %p741 = pneg %p259
        %p742 = pneg %p256
        %p743 = pneg %p280
        %p744 = pneg %p277
        %p745 = pneg %p301
        %p746 = pneg %p298
        %p747 = pneg %p322
        %p748 = pneg %p319
        %p749 = pneg %p343
        %p750 = pneg %p340
        %p751 = pneg %p364
        %p752 = pneg %p361
        %p753 = pneg %p385
        %p754 = pneg %p382
        %p755 = pneg %p406
        %p756 = pneg %p403
        %p757 = pneg %p427
        %p758 = pneg %p424
        %p759 = pneg %p448
        %p760 = pneg %p445
        %p761 = pneg %p469
        %p762 = pneg %p466
        %p763 = pneg %p490
        %p764 = pneg %p487
        %p765 = pneg %p511
        %p766 = pneg %p508
        %p767 = pneg %p532
        %p768 = pneg %p529
        %p769 = pneg %p553
        %p770 = pneg %p550
        %p771 = pneg %p574
        %p772 = pneg %p571
        %p773 = pneg %p600
        %p774 = pneg %p597
        %s775 = sand.u32 %s587, 1
        %s776 = scalar_lea.sflag [#allocation3], %s775
        %s777 = sand.u32 %s587, 1
        %s778 = smul.addr %s777, 8
        %s779 = scalar_lea.vmem [#allocation2], %s778
        %p780 = scmp.lt.s32.totalorder %s39, 1
        %s781 = scalar_select %p780, %s39, 1
        %s782 = smul.addr %s781, 8
        %s783 = scalar_lea.vmem %s0, %s782
        %p784 = scmp.lt.s32.totalorder %s39, 1
        %s785 = scalar_select %p784, %s39, 1
        %s786 = smul.addr %s785, 8
        %s787 = scalar_lea.vmem %s1, %s786
        %p788 = scmp.lt.s32.totalorder %s39, 1
        %s789 = scalar_select %p788, %s39, 1
        %s790 = scalar_lea.vmem %s2, %s789
        %v791 = vld [vmem:[%s783] sm:$0xff]
        %v792 = vld [vmem:[%s787] sm:$0xff]
        %v793 = vld [vmem:[%s3] sm:$0xff]
        %v794 = vld [vmem:[%s3 + $0x8] sm:$0xff]
        %v795 = vld [vmem:[%s3 + $0x10] sm:$0xff]
        %v796 = vld [vmem:[%s3 + $0x18] sm:$0xff]
        %v797 = vld [vmem:[%s4] sm:$0x1]
        %v799 = vlaneseq
        %v800 = vshrl.u32 %v799, 7
        %v801 = vsub.s32 0, %v800
        %v802 = vrot.slane %v797, %v801
        %vm804 = vcmask 261120
        %v806 = vsel %vm804, %v791, 0
        %808 = vmatprep.subr.mxu0 0.0
        %809 = vmatpush1.msra.mxu0 %v793
        %810 = vmatprep.subr.mxu0 0.0
        %811 = vmatpush1.msra.mxu0 %v794
        %812 = vmatprep.subr.mxu0 0.0
        %813 = vmatpush1.msra.mxu0 %v795
        %814 = vmatprep.subr.mxu0 0.0
        %815 = vmatpush1.msra.mxu0 %v796
        %816 = vmatprep.subr.mxu0 0.0
        %817 = vmatpush1.msra.mxu0 0.0
        %818 = vmatprep.subr.mxu0 0.0
        %819 = vmatpush1.msra.mxu0 0.0
        %820 = vmatprep.subr.mxu0 0.0
        %821 = vmatpush1.msra.mxu0 0.0
        %822 = vmatprep.subr.mxu0 0.0
        %823 = vmatpush1.msra.mxu0 0.0
        %824 = vmatprep.subr.mxu0 0.0
        %825 = vmatpush1.msra.mxu0 0.0
        %826 = vmatprep.subr.mxu0 0.0
        %827 = vmatpush1.msra.mxu0 0.0
        %828 = vmatprep.subr.mxu0 0.0
        %829 = vmatpush1.msra.mxu0 0.0
        %830 = vmatprep.subr.mxu0 0.0
        %831 = vmatpush1.msra.mxu0 0.0
        %832 = vmatprep.subr.mxu0 0.0
        %833 = vmatpush1.msra.mxu0 0.0
        %834 = vmatprep.subr.mxu0 0.0
        %835 = vmatpush1.msra.mxu0 0.0
        %836 = vmatprep.subr.mxu0 0.0
        %837 = vmatpush1.msra.mxu0 0.0
        %838 = vmatprep.subr.mxu0 0.0
        %839 = vmatpush1.msra.mxu0 0.0
        %840 = vmatprep.subr.mxu0 0.0
        %841 = vmatpush1.msra.mxu0 0.0
        %842 = vmatprep.subr.mxu0 0.0
        %843 = vmatpush1.msra.mxu0 0.0
        %844 = vmatprep.subr.mxu0 0.0
        %845 = vmatpush1.msra.mxu0 0.0
        %846 = vmatprep.subr.mxu0 0.0
        %847 = vmatpush1.msra.mxu0 0.0
        %848 = vmatprep.subr.mxu0 0.0
        %849 = vmatpush1.msra.mxu0 0.0
        %850 = vmatprep.subr.mxu0 0.0
        %851 = vmatpush1.msra.mxu0 0.0
        %852 = vmatprep.subr.mxu0 0.0
        %853 = vmatpush1.msra.mxu0 0.0
        %854 = vmatprep.subr.mxu0 0.0
        %855 = vmatpush1.msra.mxu0 0.0
        %856 = vmatprep.subr.mxu0 0.0
        %857 = vmatpush1.msra.mxu0 0.0
        %858 = vmatprep.subr.mxu0 0.0
        %859 = vmatpush1.msra.mxu0 0.0
        %860 = vmatprep.subr.mxu0 0.0
        %861 = vmatpush1.msra.mxu0 0.0
        %862 = vmatprep.subr.mxu0 0.0
        %863 = vmatpush1.msra.mxu0 0.0
        %864 = vmatprep.subr.mxu0 0.0
        %865 = vmatpush1.msra.mxu0 0.0
        %866 = vmatprep.subr.mxu0 0.0
        %867 = vmatpush1.msra.mxu0 0.0
        %868 = vmatprep.subr.mxu0 0.0
        %869 = vmatpush1.msra.mxu0 0.0
        %870 = vmatprep.subr.mxu0 0.0
        %871 = vmatpush1.msra.mxu0 0.0
        %872 = vmatprep.mubr.f32.mxu0 0.0
        %873 = vmatmul.mubr.f32.gmra.mrb[0].mxu0 %v806
        %v874 = vpop.f32.mrb[0].mxu0
        %v875 = vadd.f32 %v802, %v874
        %v876 = vpop.f32.mrb[0].mxu0
        %877 = vdwg.mxu0
        %v878 = vmul.f32 %v875, 0.17677669
        %v879 = vlaneseq
        %v880 = vshrl.u32 %v879, 7
        %v881 = vlaneseq
        %v882 = vand.u32 %v881, 127
        %vm883 = vcmp.ge.s32.totalorder %v880, %v882
        %885 = vrot.lane.b32.xlu0 %v875, 96
        %v886 = vpop.permute.xlu0 %885
        %vm887 = vcmask 64512
        %v889 = vsel %vm887, %v878, 0
        %v891 = vsel %vm887, %v886, 0
        %893 = vmatprep.subr.mxu0 0.0
        %894 = vmatpush1.xpose.msra.mxu0 %v891
        %895 = vmatprep.subr.mxu0 0.0
        %896 = vmatpush1.xpose.msra.mxu0 0.0
        %897 = vmatprep.subr.mxu0 0.0
        %898 = vmatpush1.xpose.msra.mxu0 0.0
        %899 = vmatprep.subr.mxu0 0.0
        %900 = vmatpush1.xpose.msra.mxu0 0.0
        %901 = vmatprep.subr.mxu0 0.0
        %902 = vmatpush1.xpose.msra.mxu0 0.0
        %903 = vmatprep.subr.mxu0 0.0
        %904 = vmatpush1.xpose.msra.mxu0 0.0
        %905 = vmatprep.subr.mxu0 0.0
        %906 = vmatpush1.xpose.msra.mxu0 0.0
        %907 = vmatprep.subr.mxu0 0.0
        %908 = vmatpush1.xpose.msra.mxu0 0.0
        %909 = vmatprep.subr.mxu0 0.0
        %910 = vmatpush1.xpose.msra.mxu0 0.0
        %911 = vmatprep.subr.mxu0 0.0
        %912 = vmatpush1.xpose.msra.mxu0 0.0
        %913 = vmatprep.subr.mxu0 0.0
        %914 = vmatpush1.xpose.msra.mxu0 0.0
        %915 = vmatprep.subr.mxu0 0.0
        %916 = vmatpush1.xpose.msra.mxu0 0.0
        %917 = vmatprep.subr.mxu0 0.0
        %918 = vmatpush1.xpose.msra.mxu0 0.0
        %919 = vmatprep.subr.mxu0 0.0
        %920 = vmatpush1.xpose.msra.mxu0 0.0
        %921 = vmatprep.subr.mxu0 0.0
        %922 = vmatpush1.xpose.msra.mxu0 0.0
        %923 = vmatprep.subr.mxu0 0.0
        %924 = vmatpush1.xpose.msra.mxu0 0.0
        %925 = vmatprep.subr.mxu0 0.0
        %926 = vmatpush1.xpose.msra.mxu0 0.0
        %927 = vmatprep.subr.mxu0 0.0
        %928 = vmatpush1.xpose.msra.mxu0 0.0
        %929 = vmatprep.subr.mxu0 0.0
        %930 = vmatpush1.xpose.msra.mxu0 0.0
        %931 = vmatprep.subr.mxu0 0.0
        %932 = vmatpush1.xpose.msra.mxu0 0.0
        %933 = vmatprep.subr.mxu0 0.0
        %934 = vmatpush1.xpose.msra.mxu0 0.0
        %935 = vmatprep.subr.mxu0 0.0
        %936 = vmatpush1.xpose.msra.mxu0 0.0
        %937 = vmatprep.subr.mxu0 0.0
        %938 = vmatpush1.xpose.msra.mxu0 0.0
        %939 = vmatprep.subr.mxu0 0.0
        %940 = vmatpush1.xpose.msra.mxu0 0.0
        %941 = vmatprep.subr.mxu0 0.0
        %942 = vmatpush1.xpose.msra.mxu0 0.0
        %943 = vmatprep.subr.mxu0 0.0
        %944 = vmatpush1.xpose.msra.mxu0 0.0
        %945 = vmatprep.subr.mxu0 0.0
        %946 = vmatpush1.xpose.msra.mxu0 0.0
        %947 = vmatprep.subr.mxu0 0.0
        %948 = vmatpush1.xpose.msra.mxu0 0.0
        %949 = vmatprep.subr.mxu0 0.0
        %950 = vmatpush1.xpose.msra.mxu0 0.0
        %951 = vmatprep.subr.mxu0 0.0
        %952 = vmatpush1.xpose.msra.mxu0 0.0
        %953 = vmatprep.subr.mxu0 0.0
        %954 = vmatpush1.xpose.msra.mxu0 0.0
        %955 = vmatprep.subr.mxu0 0.0
        %956 = vmatpush1.xpose.msra.mxu0 0.0
        %957 = vmatprep.mubr.f32.mxu0 0.0
        %958 = vmatmul.mubr.f32.gmra.mrb[0].mxu0 %v889
        %v959 = vpop.f32.mrb[0].mxu0
        %v960 = vadd.f32 0.0, %v959
        %v961 = vpop.f32.mrb[0].mxu0
        %962 = vdwg.mxu0
        %v963 = vsel %vm883, %v960, -1e+20
        %v964 = vsel %vm887, %v963, -inf
        %965 = vmax.xlane.f32.xlu0 %v964
        %v966 = vpop.xlane.xlu0 %965
        %v967 = vsub.f32 %v963, %v966
        %v968 = vmul.f32 %v967, 1.442695
        %v969 = vpow.pop %v968
        %v970 = vsel %vm887, %v969, 0.0
        %971 = vadd.xlane.f32.xlu0 %v970
        %v972 = vpop.xlane.xlu0 %971
        %v973 = vrcp.pop %v972
        %v974 = vmul.f32 %v969, %v973
        %975 = vrot.lane.b32.xlu0 %v875, 64
        %v976 = vpop.permute.xlu0 %975
        %v979 = vsel %vm887, %v974, 0
        %981 = vmatprep.subr.mxu0 0.0
        %982 = vmatpush1.msra.mxu0 %v976
        %983 = vmatprep.subr.mxu0 0.0
        %984 = vmatpush1.msra.mxu0 0.0
        %985 = vmatprep.subr.mxu0 0.0
        %986 = vmatpush1.msra.mxu0 0.0
        %987 = vmatprep.subr.mxu0 0.0
        %988 = vmatpush1.msra.mxu0 0.0
        %989 = vmatprep.subr.mxu0 0.0
        %990 = vmatpush1.msra.mxu0 0.0
        %991 = vmatprep.subr.mxu0 0.0
        %992 = vmatpush1.msra.mxu0 0.0
        %993 = vmatprep.subr.mxu0 0.0
        %994 = vmatpush1.msra.mxu0 0.0
        %995 = vmatprep.subr.mxu0 0.0
        %996 = vmatpush1.msra.mxu0 0.0
        %997 = vmatprep.subr.mxu0 0.0
        %998 = vmatpush1.msra.mxu0 0.0
        %999 = vmatprep.subr.mxu0 0.0
        %1000 = vmatpush1.msra.mxu0 0.0
        %1001 = vmatprep.subr.mxu0 0.0
        %1002 = vmatpush1.msra.mxu0 0.0
        %1003 = vmatprep.subr.mxu0 0.0
        %1004 = vmatpush1.msra.mxu0 0.0
        %1005 = vmatprep.subr.mxu0 0.0
        %1006 = vmatpush1.msra.mxu0 0.0
        %1007 = vmatprep.subr.mxu0 0.0
        %1008 = vmatpush1.msra.mxu0 0.0
        %1009 = vmatprep.subr.mxu0 0.0
        %1010 = vmatpush1.msra.mxu0 0.0
        %1011 = vmatprep.subr.mxu0 0.0
        %1012 = vmatpush1.msra.mxu0 0.0
        %1013 = vmatprep.subr.mxu0 0.0
        %1014 = vmatpush1.msra.mxu0 0.0
        %1015 = vmatprep.subr.mxu0 0.0
        %1016 = vmatpush1.msra.mxu0 0.0
        %1017 = vmatprep.subr.mxu0 0.0
        %1018 = vmatpush1.msra.mxu0 0.0
        %1019 = vmatprep.subr.mxu0 0.0
        %1020 = vmatpush1.msra.mxu0 0.0
        %1021 = vmatprep.subr.mxu0 0.0
        %1022 = vmatpush1.msra.mxu0 0.0
        %1023 = vmatprep.subr.mxu0 0.0
        %1024 = vmatpush1.msra.mxu0 0.0
        %1025 = vmatprep.subr.mxu0 0.0
        %1026 = vmatpush1.msra.mxu0 0.0
        %1027 = vmatprep.subr.mxu0 0.0
        %1028 = vmatpush1.msra.mxu0 0.0
        %1029 = vmatprep.subr.mxu0 0.0
        %1030 = vmatpush1.msra.mxu0 0.0
        %1031 = vmatprep.subr.mxu0 0.0
        %1032 = vmatpush1.msra.mxu0 0.0
        %1033 = vmatprep.subr.mxu0 0.0
        %1034 = vmatpush1.msra.mxu0 0.0
        %1035 = vmatprep.subr.mxu0 0.0
        %1036 = vmatpush1.msra.mxu0 0.0
        %1037 = vmatprep.subr.mxu0 0.0
        %1038 = vmatpush1.msra.mxu0 0.0
        %1039 = vmatprep.subr.mxu0 0.0
        %1040 = vmatpush1.msra.mxu0 0.0
        %1041 = vmatprep.subr.mxu0 0.0
        %1042 = vmatpush1.msra.mxu0 0.0
        %1043 = vmatprep.subr.mxu0 0.0
        %1044 = vmatpush1.msra.mxu0 0.0
        %1045 = vmatprep.mubr.f32.mxu0 0.0
        %1046 = vmatmul.mubr.f32.gmra.mrb[0].mxu0 %v979
        %v1047 = vpop.f32.mrb[0].mxu0
        %v1048 = vadd.f32 0.0, %v1047
        %v1049 = vpop.f32.mrb[0].mxu0
        %1050 = vdwg.mxu0
        %1051 = vrot.lane.b32.xlu0 %v878, 120
        %v1052 = vpop.permute.xlu0 %1051
        %1053 = vrot.lane.b32.xlu0 %v875, 88
        %v1054 = vpop.permute.xlu0 %1053
        %v1055 = vsel %vm887, %v1052, 0
        %v1057 = vsel %vm887, %v1054, 0
        %1059 = vmatprep.subr.mxu0 0.0
        %1060 = vmatpush1.xpose.msra.mxu0 %v1057
        %1061 = vmatprep.subr.mxu0 0.0
        %1062 = vmatpush1.xpose.msra.mxu0 0.0
        %1063 = vmatprep.subr.mxu0 0.0
        %1064 = vmatpush1.xpose.msra.mxu0 0.0
        %1065 = vmatprep.subr.mxu0 0.0
        %1066 = vmatpush1.xpose.msra.mxu0 0.0
        %1067 = vmatprep.subr.mxu0 0.0
        %1068 = vmatpush1.xpose.msra.mxu0 0.0
        %1069 = vmatprep.subr.mxu0 0.0
        %1070 = vmatpush1.xpose.msra.mxu0 0.0
        %1071 = vmatprep.subr.mxu0 0.0
        %1072 = vmatpush1.xpose.msra.mxu0 0.0
        %1073 = vmatprep.subr.mxu0 0.0
        %1074 = vmatpush1.xpose.msra.mxu0 0.0
        %1075 = vmatprep.subr.mxu0 0.0
        %1076 = vmatpush1.xpose.msra.mxu0 0.0
        %1077 = vmatprep.subr.mxu0 0.0
        %1078 = vmatpush1.xpose.msra.mxu0 0.0
        %1079 = vmatprep.subr.mxu0 0.0
        %1080 = vmatpush1.xpose.msra.mxu0 0.0
        %1081 = vmatprep.subr.mxu0 0.0
        %1082 = vmatpush1.xpose.msra.mxu0 0.0
        %1083 = vmatprep.subr.mxu0 0.0
        %1084 = vmatpush1.xpose.msra.mxu0 0.0
        %1085 = vmatprep.subr.mxu0 0.0
        %1086 = vmatpush1.xpose.msra.mxu0 0.0
        %1087 = vmatprep.subr.mxu0 0.0
        %1088 = vmatpush1.xpose.msra.mxu0 0.0
        %1089 = vmatprep.subr.mxu0 0.0
        %1090 = vmatpush1.xpose.msra.mxu0 0.0
        %1091 = vmatprep.subr.mxu0 0.0
        %1092 = vmatpush1.xpose.msra.mxu0 0.0
        %1093 = vmatprep.subr.mxu0 0.0
        %1094 = vmatpush1.xpose.msra.mxu0 0.0
        %1095 = vmatprep.subr.mxu0 0.0
        %1096 = vmatpush1.xpose.msra.mxu0 0.0
        %1097 = vmatprep.subr.mxu0 0.0
        %1098 = vmatpush1.xpose.msra.mxu0 0.0
        %1099 = vmatprep.subr.mxu0 0.0
        %1100 = vmatpush1.xpose.msra.mxu0 0.0
        %1101 = vmatprep.subr.mxu0 0.0
        %1102 = vmatpush1.xpose.msra.mxu0 0.0
        %1103 = vmatprep.subr.mxu0 0.0
        %1104 = vmatpush1.xpose.msra.mxu0 0.0
        %1105 = vmatprep.subr.mxu0 0.0
        %1106 = vmatpush1.xpose.msra.mxu0 0.0
        %1107 = vmatprep.subr.mxu0 0.0
        %1108 = vmatpush1.xpose.msra.mxu0 0.0
        %1109 = vmatprep.subr.mxu0 0.0
        %1110 = vmatpush1.xpose.msra.mxu0 0.0
        %1111 = vmatprep.subr.mxu0 0.0
        %1112 = vmatpush1.xpose.msra.mxu0 0.0
        %1113 = vmatprep.subr.mxu0 0.0
        %1114 = vmatpush1.xpose.msra.mxu0 0.0
        %1115 = vmatprep.subr.mxu0 0.0
        %1116 = vmatpush1.xpose.msra.mxu0 0.0
        %1117 = vmatprep.subr.mxu0 0.0
        %1118 = vmatpush1.xpose.msra.mxu0 0.0
        %1119 = vmatprep.subr.mxu0 0.0
        %1120 = vmatpush1.xpose.msra.mxu0 0.0
        %1121 = vmatprep.subr.mxu0 0.0
        %1122 = vmatpush1.xpose.msra.mxu0 0.0
        %1123 = vmatprep.mubr.f32.mxu0 0.0
        %1124 = vmatmul.mubr.f32.gmra.mrb[0].mxu0 %v1055
        %v1125 = vpop.f32.mrb[0].mxu0
        %v1126 = vadd.f32 0.0, %v1125
        %v1127 = vpop.f32.mrb[0].mxu0
        %1128 = vdwg.mxu0
        %v1129 = vsel %vm883, %v1126, -1e+20
        %v1130 = vsel %vm887, %v1129, -inf
        %1131 = vmax.xlane.f32.xlu0 %v1130
        %v1132 = vpop.xlane.xlu0 %1131
        %v1133 = vsub.f32 %v1129, %v1132
        %v1134 = vmul.f32 %v1133, 1.442695
        %v1135 = vpow.pop %v1134
        %v1136 = vsel %vm887, %v1135, 0.0
        %1137 = vadd.xlane.f32.xlu0 %v1136
        %v1138 = vpop.xlane.xlu0 %1137
        %v1139 = vrcp.pop %v1138
        %v1140 = vmul.f32 %v1135, %v1139
        %1141 = vrot.lane.b32.xlu0 %v875, 56
        %v1142 = vpop.permute.xlu0 %1141
        %v1145 = vsel %vm887, %v1140, 0
        %1147 = vmatprep.subr.mxu0 0.0
        %1148 = vmatpush1.msra.mxu0 %v1142
        %1149 = vmatprep.subr.mxu0 0.0
        %1150 = vmatpush1.msra.mxu0 0.0
        %1151 = vmatprep.subr.mxu0 0.0
        %1152 = vmatpush1.msra.mxu0 0.0
        %1153 = vmatprep.subr.mxu0 0.0
        %1154 = vmatpush1.msra.mxu0 0.0
        %1155 = vmatprep.subr.mxu0 0.0
        %1156 = vmatpush1.msra.mxu0 0.0
        %1157 = vmatprep.subr.mxu0 0.0
        %1158 = vmatpush1.msra.mxu0 0.0
        %1159 = vmatprep.subr.mxu0 0.0
        %1160 = vmatpush1.msra.mxu0 0.0
        %1161 = vmatprep.subr.mxu0 0.0
        %1162 = vmatpush1.msra.mxu0 0.0
        %1163 = vmatprep.subr.mxu0 0.0
        %1164 = vmatpush1.msra.mxu0 0.0
        %1165 = vmatprep.subr.mxu0 0.0
        %1166 = vmatpush1.msra.mxu0 0.0
        %1167 = vmatprep.subr.mxu0 0.0
        %1168 = vmatpush1.msra.mxu0 0.0
        %1169 = vmatprep.subr.mxu0 0.0
        %1170 = vmatpush1.msra.mxu0 0.0
        %1171 = vmatprep.subr.mxu0 0.0
        %1172 = vmatpush1.msra.mxu0 0.0
        %1173 = vmatprep.subr.mxu0 0.0
        %1174 = vmatpush1.msra.mxu0 0.0
        %1175 = vmatprep.subr.mxu0 0.0
        %1176 = vmatpush1.msra.mxu0 0.0
        %1177 = vmatprep.subr.mxu0 0.0
        %1178 = vmatpush1.msra.mxu0 0.0
        %1179 = vmatprep.subr.mxu0 0.0
        %1180 = vmatpush1.msra.mxu0 0.0
        %1181 = vmatprep.subr.mxu0 0.0
        %1182 = vmatpush1.msra.mxu0 0.0
        %1183 = vmatprep.subr.mxu0 0.0
        %1184 = vmatpush1.msra.mxu0 0.0
        %1185 = vmatprep.subr.mxu0 0.0
        %1186 = vmatpush1.msra.mxu0 0.0
        %1187 = vmatprep.subr.mxu0 0.0
        %1188 = vmatpush1.msra.mxu0 0.0
        %1189 = vmatprep.subr.mxu0 0.0
        %1190 = vmatpush1.msra.mxu0 0.0
        %1191 = vmatprep.subr.mxu0 0.0
        %1192 = vmatpush1.msra.mxu0 0.0
        %1193 = vmatprep.subr.mxu0 0.0
        %1194 = vmatpush1.msra.mxu0 0.0
        %1195 = vmatprep.subr.mxu0 0.0
        %1196 = vmatpush1.msra.mxu0 0.0
        %1197 = vmatprep.subr.mxu0 0.0
        %1198 = vmatpush1.msra.mxu0 0.0
        %1199 = vmatprep.subr.mxu0 0.0
        %1200 = vmatpush1.msra.mxu0 0.0
        %1201 = vmatprep.subr.mxu0 0.0
        %1202 = vmatpush1.msra.mxu0 0.0
        %1203 = vmatprep.subr.mxu0 0.0
        %1204 = vmatpush1.msra.mxu0 0.0
        %1205 = vmatprep.subr.mxu0 0.0
        %1206 = vmatpush1.msra.mxu0 0.0
        %1207 = vmatprep.subr.mxu0 0.0
        %1208 = vmatpush1.msra.mxu0 0.0
        %1209 = vmatprep.subr.mxu0 0.0
        %1210 = vmatpush1.msra.mxu0 0.0
        %1211 = vmatprep.mubr.f32.mxu0 0.0
        %1212 = vmatmul.mubr.f32.gmra.mrb[0].mxu0 %v1145
        %v1213 = vpop.f32.mrb[0].mxu0
        %v1214 = vadd.f32 0.0, %v1213
        %v1215 = vpop.f32.mrb[0].mxu0
        %1216 = vdwg.mxu0
        %1217 = vrot.lane.b32.xlu0 %v878, 112
        %v1218 = vpop.permute.xlu0 %1217
        %1219 = vrot.lane.b32.xlu0 %v875, 80
        %v1220 = vpop.permute.xlu0 %1219
        %v1221 = vsel %vm887, %v1218, 0
        %v1223 = vsel %vm887, %v1220, 0
        %1225 = vmatprep.subr.mxu0 0.0
        %1226 = vmatpush1.xpose.msra.mxu0 %v1223
        %1227 = vmatprep.subr.mxu0 0.0
        %1228 = vmatpush1.xpose.msra.mxu0 0.0
        %1229 = vmatprep.subr.mxu0 0.0
        %1230 = vmatpush1.xpose.msra.mxu0 0.0
        %1231 = vmatprep.subr.mxu0 0.0
        %1232 = vmatpush1.xpose.msra.mxu0 0.0
        %1233 = vmatprep.subr.mxu0 0.0
        %1234 = vmatpush1.xpose.msra.mxu0 0.0
        %1235 = vmatprep.subr.mxu0 0.0
        %1236 = vmatpush1.xpose.msra.mxu0 0.0
        %1237 = vmatprep.subr.mxu0 0.0
        %1238 = vmatpush1.xpose.msra.mxu0 0.0
        %1239 = vmatprep.subr.mxu0 0.0
        %1240 = vmatpush1.xpose.msra.mxu0 0.0
        %1241 = vmatprep.subr.mxu0 0.0
        %1242 = vmatpush1.xpose.msra.mxu0 0.0
        %1243 = vmatprep.subr.mxu0 0.0
        %1244 = vmatpush1.xpose.msra.mxu0 0.0
        %1245 = vmatprep.subr.mxu0 0.0
        %1246 = vmatpush1.xpose.msra.mxu0 0.0
        %1247 = vmatprep.subr.mxu0 0.0
        %1248 = vmatpush1.xpose.msra.mxu0 0.0
        %1249 = vmatprep.subr.mxu0 0.0
        %1250 = vmatpush1.xpose.msra.mxu0 0.0
        %1251 = vmatprep.subr.mxu0 0.0
        %1252 = vmatpush1.xpose.msra.mxu0 0.0
        %1253 = vmatprep.subr.mxu0 0.0
        %1254 = vmatpush1.xpose.msra.mxu0 0.0
        %1255 = vmatprep.subr.mxu0 0.0
        %1256 = vmatpush1.xpose.msra.mxu0 0.0
        %1257 = vmatprep.subr.mxu0 0.0
        %1258 = vmatpush1.xpose.msra.mxu0 0.0
        %1259 = vmatprep.subr.mxu0 0.0
        %1260 = vmatpush1.xpose.msra.mxu0 0.0
        %1261 = vmatprep.subr.mxu0 0.0
        %1262 = vmatpush1.xpose.msra.mxu0 0.0
        %1263 = vmatprep.subr.mxu0 0.0
        %1264 = vmatpush1.xpose.msra.mxu0 0.0
        %1265 = vmatprep.subr.mxu0 0.0
        %1266 = vmatpush1.xpose.msra.mxu0 0.0
        %1267 = vmatprep.subr.mxu0 0.0
        %1268 = vmatpush1.xpose.msra.mxu0 0.0
        %1269 = vmatprep.subr.mxu0 0.0
        %1270 = vmatpush1.xpose.msra.mxu0 0.0
        %1271 = vmatprep.subr.mxu0 0.0
        %1272 = vmatpush1.xpose.msra.mxu0 0.0
        %1273 = vmatprep.subr.mxu0 0.0
        %1274 = vmatpush1.xpose.msra.mxu0 0.0
        %1275 = vmatprep.subr.mxu0 0.0
        %1276 = vmatpush1.xpose.msra.mxu0 0.0
        %1277 = vmatprep.subr.mxu0 0.0
        %1278 = vmatpush1.xpose.msra.mxu0 0.0
        %1279 = vmatprep.subr.mxu0 0.0
        %1280 = vmatpush1.xpose.msra.mxu0 0.0
        %1281 = vmatprep.subr.mxu0 0.0
        %1282 = vmatpush1.xpose.msra.mxu0 0.0
        %1283 = vmatprep.subr.mxu0 0.0
        %1284 = vmatpush1.xpose.msra.mxu0 0.0
        %1285 = vmatprep.subr.mxu0 0.0
        %1286 = vmatpush1.xpose.msra.mxu0 0.0
        %1287 = vmatprep.subr.mxu0 0.0
        %1288 = vmatpush1.xpose.msra.mxu0 0.0
        %1289 = vmatprep.mubr.f32.mxu0 0.0
        %1290 = vmatmul.mubr.f32.gmra.mrb[0].mxu0 %v1221
        %v1291 = vpop.f32.mrb[0].mxu0
        %v1292 = vadd.f32 0.0, %v1291
        %v1293 = vpop.f32.mrb[0].mxu0
        %1294 = vdwg.mxu0
        %v1295 = vsel %vm883, %v1292, -1e+20
        %v1296 = vsel %vm887, %v1295, -inf
        %1297 = vmax.xlane.f32.xlu0 %v1296
        %v1298 = vpop.xlane.xlu0 %1297
        %v1299 = vsub.f32 %v1295, %v1298
        %v1300 = vmul.f32 %v1299, 1.442695
        %v1301 = vpow.pop %v1300
        %v1302 = vsel %vm887, %v1301, 0.0
        %1303 = vadd.xlane.f32.xlu0 %v1302
        %v1304 = vpop.xlane.xlu0 %1303
        %v1305 = vrcp.pop %v1304
        %v1306 = vmul.f32 %v1301, %v1305
        %1307 = vrot.lane.b32.xlu0 %v875, 48
        %v1308 = vpop.permute.xlu0 %1307
        %v1311 = vsel %vm887, %v1306, 0
        %1313 = vmatprep.subr.mxu0 0.0
        %1314 = vmatpush1.msra.mxu0 %v1308
        %1315 = vmatprep.subr.mxu0 0.0
        %1316 = vmatpush1.msra.mxu0 0.0
        %1317 = vmatprep.subr.mxu0 0.0
        %1318 = vmatpush1.msra.mxu0 0.0
        %1319 = vmatprep.subr.mxu0 0.0
        %1320 = vmatpush1.msra.mxu0 0.0
        %1321 = vmatprep.subr.mxu0 0.0
        %1322 = vmatpush1.msra.mxu0 0.0
        %1323 = vmatprep.subr.mxu0 0.0
        %1324 = vmatpush1.msra.mxu0 0.0
        %1325 = vmatprep.subr.mxu0 0.0
        %1326 = vmatpush1.msra.mxu0 0.0
        %1327 = vmatprep.subr.mxu0 0.0
        %1328 = vmatpush1.msra.mxu0 0.0
        %1329 = vmatprep.subr.mxu0 0.0
        %1330 = vmatpush1.msra.mxu0 0.0
        %1331 = vmatprep.subr.mxu0 0.0
        %1332 = vmatpush1.msra.mxu0 0.0
        %1333 = vmatprep.subr.mxu0 0.0
        %1334 = vmatpush1.msra.mxu0 0.0
        %1335 = vmatprep.subr.mxu0 0.0
        %1336 = vmatpush1.msra.mxu0 0.0
        %1337 = vmatprep.subr.mxu0 0.0
        %1338 = vmatpush1.msra.mxu0 0.0
        %1339 = vmatprep.subr.mxu0 0.0
        %1340 = vmatpush1.msra.mxu0 0.0
        %1341 = vmatprep.subr.mxu0 0.0
        %1342 = vmatpush1.msra.mxu0 0.0
        %1343 = vmatprep.subr.mxu0 0.0
        %1344 = vmatpush1.msra.mxu0 0.0
        %1345 = vmatprep.subr.mxu0 0.0
        %1346 = vmatpush1.msra.mxu0 0.0
        %1347 = vmatprep.subr.mxu0 0.0
        %1348 = vmatpush1.msra.mxu0 0.0
        %1349 = vmatprep.subr.mxu0 0.0
        %1350 = vmatpush1.msra.mxu0 0.0
        %1351 = vmatprep.subr.mxu0 0.0
        %1352 = vmatpush1.msra.mxu0 0.0
        %1353 = vmatprep.subr.mxu0 0.0
        %1354 = vmatpush1.msra.mxu0 0.0
        %1355 = vmatprep.subr.mxu0 0.0
        %1356 = vmatpush1.msra.mxu0 0.0
        %1357 = vmatprep.subr.mxu0 0.0
        %1358 = vmatpush1.msra.mxu0 0.0
        %1359 = vmatprep.subr.mxu0 0.0
        %1360 = vmatpush1.msra.mxu0 0.0
        %1361 = vmatprep.subr.mxu0 0.0
        %1362 = vmatpush1.msra.mxu0 0.0
        %1363 = vmatprep.subr.mxu0 0.0
        %1364 = vmatpush1.msra.mxu0 0.0
        %1365 = vmatprep.subr.mxu0 0.0
        %1366 = vmatpush1.msra.mxu0 0.0
        %1367 = vmatprep.subr.mxu0 0.0
        %1368 = vmatpush1.msra.mxu0 0.0
        %1369 = vmatprep.subr.mxu0 0.0
        %1370 = vmatpush1.msra.mxu0 0.0
        %1371 = vmatprep.subr.mxu0 0.0
        %1372 = vmatpush1.msra.mxu0 0.0
        %1373 = vmatprep.subr.mxu0 0.0
        %1374 = vmatpush1.msra.mxu0 0.0
        %1375 = vmatprep.subr.mxu0 0.0
        %1376 = vmatpush1.msra.mxu0 0.0
        %1377 = vmatprep.mubr.f32.mxu0 0.0
        %1378 = vmatmul.mubr.f32.gmra.mrb[0].mxu0 %v1311
        %v1379 = vpop.f32.mrb[0].mxu0
        %v1380 = vadd.f32 0.0, %v1379
        %v1381 = vpop.f32.mrb[0].mxu0
        %1382 = vdwg.mxu0
        %1383 = vrot.lane.b32.xlu0 %v878, 104
        %v1384 = vpop.permute.xlu0 %1383
        %1385 = vrot.lane.b32.xlu0 %v875, 72
        %v1386 = vpop.permute.xlu0 %1385
        %v1387 = vsel %vm887, %v1384, 0
        %v1389 = vsel %vm887, %v1386, 0
        %1391 = vmatprep.subr.mxu0 0.0
        %1392 = vmatpush1.xpose.msra.mxu0 %v1389
        %1393 = vmatprep.subr.mxu0 0.0
        %1394 = vmatpush1.xpose.msra.mxu0 0.0
        %1395 = vmatprep.subr.mxu0 0.0
        %1396 = vmatpush1.xpose.msra.mxu0 0.0
        %1397 = vmatprep.subr.mxu0 0.0
        %1398 = vmatpush1.xpose.msra.mxu0 0.0
        %1399 = vmatprep.subr.mxu0 0.0
        %1400 = vmatpush1.xpose.msra.mxu0 0.0
        %1401 = vmatprep.subr.mxu0 0.0
        %1402 = vmatpush1.xpose.msra.mxu0 0.0
        %1403 = vmatprep.subr.mxu0 0.0
        %1404 = vmatpush1.xpose.msra.mxu0 0.0
        %1405 = vmatprep.subr.mxu0 0.0
        %1406 = vmatpush1.xpose.msra.mxu0 0.0
        %1407 = vmatprep.subr.mxu0 0.0
        %1408 = vmatpush1.xpose.msra.mxu0 0.0
        %1409 = vmatprep.subr.mxu0 0.0
        %1410 = vmatpush1.xpose.msra.mxu0 0.0
        %1411 = vmatprep.subr.mxu0 0.0
        %1412 = vmatpush1.xpose.msra.mxu0 0.0
        %1413 = vmatprep.subr.mxu0 0.0
        %1414 = vmatpush1.xpose.msra.mxu0 0.0
        %1415 = vmatprep.subr.mxu0 0.0
        %1416 = vmatpush1.xpose.msra.mxu0 0.0
        %1417 = vmatprep.subr.mxu0 0.0
        %1418 = vmatpush1.xpose.msra.mxu0 0.0
        %1419 = vmatprep.subr.mxu0 0.0
        %1420 = vmatpush1.xpose.msra.mxu0 0.0
        %1421 = vmatprep.subr.mxu0 0.0
        %1422 = vmatpush1.xpose.msra.mxu0 0.0
        %1423 = vmatprep.subr.mxu0 0.0
        %1424 = vmatpush1.xpose.msra.mxu0 0.0
        %1425 = vmatprep.subr.mxu0 0.0
        %1426 = vmatpush1.xpose.msra.mxu0 0.0
        %1427 = vmatprep.subr.mxu0 0.0
        %1428 = vmatpush1.xpose.msra.mxu0 0.0
        %1429 = vmatprep.subr.mxu0 0.0
        %1430 = vmatpush1.xpose.msra.mxu0 0.0
        %1431 = vmatprep.subr.mxu0 0.0
        %1432 = vmatpush1.xpose.msra.mxu0 0.0
        %1433 = vmatprep.subr.mxu0 0.0
        %1434 = vmatpush1.xpose.msra.mxu0 0.0
        %1435 = vmatprep.subr.mxu0 0.0
        %1436 = vmatpush1.xpose.msra.mxu0 0.0
        %1437 = vmatprep.subr.mxu0 0.0
        %1438 = vmatpush1.xpose.msra.mxu0 0.0
        %1439 = vmatprep.subr.mxu0 0.0
        %1440 = vmatpush1.xpose.msra.mxu0 0.0
        %1441 = vmatprep.subr.mxu0 0.0
        %1442 = vmatpush1.xpose.msra.mxu0 0.0
        %1443 = vmatprep.subr.mxu0 0.0
        %1444 = vmatpush1.xpose.msra.mxu0 0.0
        %1445 = vmatprep.subr.mxu0 0.0
        %1446 = vmatpush1.xpose.msra.mxu0 0.0
        %1447 = vmatprep.subr.mxu0 0.0
        %1448 = vmatpush1.xpose.msra.mxu0 0.0
        %1449 = vmatprep.subr.mxu0 0.0
        %1450 = vmatpush1.xpose.msra.mxu0 0.0
        %1451 = vmatprep.subr.mxu0 0.0
        %1452 = vmatpush1.xpose.msra.mxu0 0.0
        %1453 = vmatprep.subr.mxu0 0.0
        %1454 = vmatpush1.xpose.msra.mxu0 0.0
        %1455 = vmatprep.mubr.f32.mxu0 0.0
        %1456 = vmatmul.mubr.f32.gmra.mrb[0].mxu0 %v1387
        %v1457 = vpop.f32.mrb[0].mxu0
        %v1458 = vadd.f32 0.0, %v1457
        %v1459 = vpop.f32.mrb[0].mxu0
        %1460 = vdwg.mxu0
        %v1461 = vsel %vm883, %v1458, -1e+20
        %v1462 = vsel %vm887, %v1461, -inf
        %1463 = vmax.xlane.f32.xlu0 %v1462
        %v1464 = vpop.xlane.xlu0 %1463
        %v1465 = vsub.f32 %v1461, %v1464
        %v1466 = vmul.f32 %v1465, 1.442695
        %v1467 = vpow.pop %v1466
        %v1468 = vsel %vm887, %v1467, 0.0
        %1469 = vadd.xlane.f32.xlu0 %v1468
        %v1470 = vpop.xlane.xlu0 %1469
        %v1471 = vrcp.pop %v1470
        %v1472 = vmul.f32 %v1467, %v1471
        %1473 = vrot.lane.b32.xlu0 %v875, 40
        %v1474 = vpop.permute.xlu0 %1473
        %v1477 = vsel %vm887, %v1472, 0
        %1479 = vmatprep.subr.mxu0 0.0
        %1480 = vmatpush1.msra.mxu0 %v1474
        %1481 = vmatprep.subr.mxu0 0.0
        %1482 = vmatpush1.msra.mxu0 0.0
        %1483 = vmatprep.subr.mxu0 0.0
        %1484 = vmatpush1.msra.mxu0 0.0
        %1485 = vmatprep.subr.mxu0 0.0
        %1486 = vmatpush1.msra.mxu0 0.0
        %1487 = vmatprep.subr.mxu0 0.0
        %1488 = vmatpush1.msra.mxu0 0.0
        %1489 = vmatprep.subr.mxu0 0.0
        %1490 = vmatpush1.msra.mxu0 0.0
        %1491 = vmatprep.subr.mxu0 0.0
        %1492 = vmatpush1.msra.mxu0 0.0
        %1493 = vmatprep.subr.mxu0 0.0
        %1494 = vmatpush1.msra.mxu0 0.0
        %1495 = vmatprep.subr.mxu0 0.0
        %1496 = vmatpush1.msra.mxu0 0.0
        %1497 = vmatprep.subr.mxu0 0.0
        %1498 = vmatpush1.msra.mxu0 0.0
        %1499 = vmatprep.subr.mxu0 0.0
        %1500 = vmatpush1.msra.mxu0 0.0
        %1501 = vmatprep.subr.mxu0 0.0
        %1502 = vmatpush1.msra.mxu0 0.0
        %1503 = vmatprep.subr.mxu0 0.0
        %1504 = vmatpush1.msra.mxu0 0.0
        %1505 = vmatprep.subr.mxu0 0.0
        %1506 = vmatpush1.msra.mxu0 0.0
        %1507 = vmatprep.subr.mxu0 0.0
        %1508 = vmatpush1.msra.mxu0 0.0
        %1509 = vmatprep.subr.mxu0 0.0
        %1510 = vmatpush1.msra.mxu0 0.0
        %1511 = vmatprep.subr.mxu0 0.0
        %1512 = vmatpush1.msra.mxu0 0.0
        %1513 = vmatprep.subr.mxu0 0.0
        %1514 = vmatpush1.msra.mxu0 0.0
        %1515 = vmatprep.subr.mxu0 0.0
        %1516 = vmatpush1.msra.mxu0 0.0
        %1517 = vmatprep.subr.mxu0 0.0
        %1518 = vmatpush1.msra.mxu0 0.0
        %1519 = vmatprep.subr.mxu0 0.0
        %1520 = vmatpush1.msra.mxu0 0.0
        %1521 = vmatprep.subr.mxu0 0.0
        %1522 = vmatpush1.msra.mxu0 0.0
        %1523 = vmatprep.subr.mxu0 0.0
        %1524 = vmatpush1.msra.mxu0 0.0
        %1525 = vmatprep.subr.mxu0 0.0
        %1526 = vmatpush1.msra.mxu0 0.0
        %1527 = vmatprep.subr.mxu0 0.0
        %1528 = vmatpush1.msra.mxu0 0.0
        %1529 = vmatprep.subr.mxu0 0.0
        %1530 = vmatpush1.msra.mxu0 0.0
        %1531 = vmatprep.subr.mxu0 0.0
        %1532 = vmatpush1.msra.mxu0 0.0
        %1533 = vmatprep.subr.mxu0 0.0
        %1534 = vmatpush1.msra.mxu0 0.0
        %1535 = vmatprep.subr.mxu0 0.0
        %1536 = vmatpush1.msra.mxu0 0.0
        %1537 = vmatprep.subr.mxu0 0.0
        %1538 = vmatpush1.msra.mxu0 0.0
        %1539 = vmatprep.subr.mxu0 0.0
        %1540 = vmatpush1.msra.mxu0 0.0
        %1541 = vmatprep.subr.mxu0 0.0
        %1542 = vmatpush1.msra.mxu0 0.0
        %1543 = vmatprep.mubr.f32.mxu0 0.0
        %1544 = vmatmul.mubr.f32.gmra.mrb[0].mxu0 %v1477
        %v1545 = vpop.f32.mrb[0].mxu0
        %v1546 = vadd.f32 0.0, %v1545
        %v1547 = vpop.f32.mrb[0].mxu0
        %1548 = vdwg.mxu0
        %1550 = vrot.lane.b32.xlu0 %v1214, 8
        %v1551 = vpop.permute.xlu0 %1550
        %1554 = vrot.lane.b32.xlu0 %v1380, 16
        %v1555 = vpop.permute.xlu0 %1554
        %1558 = vrot.lane.b32.xlu0 %v1546, 24
        %v1559 = vpop.permute.xlu0 %1558
        %v1561 = vsel %vm887, %v1048, %v1551
        %vm1562 = vcmask 130048
        %v1563 = vsel %vm1562, %v1561, %v1555
        %vm1564 = vcmask 195584
        %v1565 = vsel %vm1564, %v1563, %v1559
        %v1566 = vld [vmem:[%s5] sm:$0xff]
        %v1567 = vld [vmem:[%s5 + $0x8] sm:$0xff]
        %v1568 = vld [vmem:[%s5 + $0x10] sm:$0xff]
        %v1569 = vld [vmem:[%s5 + $0x18] sm:$0xff]
        %v1570 = vld [vmem:[%s6] sm:$0x1]
        %v1572 = vlaneseq
        %v1573 = vshrl.u32 %v1572, 7
        %v1574 = vsub.s32 0, %v1573
        %v1575 = vrot.slane %v1570, %v1574
        %v1578 = vsel %vm804, %v1565, 0
        %1580 = vmatprep.subr.mxu0 0.0
        %1581 = vmatpush1.msra.mxu0 %v1566
        %1582 = vmatprep.subr.mxu0 0.0
        %1583 = vmatpush1.msra.mxu0 %v1567
        %1584 = vmatprep.subr.mxu0 0.0
        %1585 = vmatpush1.msra.mxu0 %v1568
        %1586 = vmatprep.subr.mxu0 0.0
        %1587 = vmatpush1.msra.mxu0 %v1569
        %1588 = vmatprep.subr.mxu0 0.0
        %1589 = vmatpush1.msra.mxu0 0.0
        %1590 = vmatprep.subr.mxu0 0.0
        %1591 = vmatpush1.msra.mxu0 0.0
        %1592 = vmatprep.subr.mxu0 0.0
        %1593 = vmatpush1.msra.mxu0 0.0
        %1594 = vmatprep.subr.mxu0 0.0
        %1595 = vmatpush1.msra.mxu0 0.0
        %1596 = vmatprep.subr.mxu0 0.0
        %1597 = vmatpush1.msra.mxu0 0.0
        %1598 = vmatprep.subr.mxu0 0.0
        %1599 = vmatpush1.msra.mxu0 0.0
        %1600 = vmatprep.subr.mxu0 0.0
        %1601 = vmatpush1.msra.mxu0 0.0
        %1602 = vmatprep.subr.mxu0 0.0
        %1603 = vmatpush1.msra.mxu0 0.0
        %1604 = vmatprep.subr.mxu0 0.0
        %1605 = vmatpush1.msra.mxu0 0.0
        %1606 = vmatprep.subr.mxu0 0.0
        %1607 = vmatpush1.msra.mxu0 0.0
        %1608 = vmatprep.subr.mxu0 0.0
        %1609 = vmatpush1.msra.mxu0 0.0
        %1610 = vmatprep.subr.mxu0 0.0
        %1611 = vmatpush1.msra.mxu0 0.0
        %1612 = vmatprep.subr.mxu0 0.0
        %1613 = vmatpush1.msra.mxu0 0.0
        %1614 = vmatprep.subr.mxu0 0.0
        %1615 = vmatpush1.msra.mxu0 0.0
        %1616 = vmatprep.subr.mxu0 0.0
        %1617 = vmatpush1.msra.mxu0 0.0
        %1618 = vmatprep.subr.mxu0 0.0
        %1619 = vmatpush1.msra.mxu0 0.0
        %1620 = vmatprep.subr.mxu0 0.0
        %1621 = vmatpush1.msra.mxu0 0.0
        %1622 = vmatprep.subr.mxu0 0.0
        %1623 = vmatpush1.msra.mxu0 0.0
        %1624 = vmatprep.subr.mxu0 0.0
        %1625 = vmatpush1.msra.mxu0 0.0
        %1626 = vmatprep.subr.mxu0 0.0
        %1627 = vmatpush1.msra.mxu0 0.0
        %1628 = vmatprep.subr.mxu0 0.0
        %1629 = vmatpush1.msra.mxu0 0.0
        %1630 = vmatprep.subr.mxu0 0.0
        %1631 = vmatpush1.msra.mxu0 0.0
        %1632 = vmatprep.subr.mxu0 0.0
        %1633 = vmatpush1.msra.mxu0 0.0
        %1634 = vmatprep.subr.mxu0 0.0
        %1635 = vmatpush1.msra.mxu0 0.0
        %1636 = vmatprep.subr.mxu0 0.0
        %1637 = vmatpush1.msra.mxu0 0.0
        %1638 = vmatprep.subr.mxu0 0.0
        %1639 = vmatpush1.msra.mxu0 0.0
        %1640 = vmatprep.subr.mxu0 0.0
        %1641 = vmatpush1.msra.mxu0 0.0
        %1642 = vmatprep.subr.mxu0 0.0
        %1643 = vmatpush1.msra.mxu0 0.0
        %1644 = vmatprep.mubr.f32.mxu0 0.0
        %1645 = vmatmul.mubr.f32.gmra.mrb[0].mxu0 %v1578
        %v1646 = vpop.f32.mrb[0].mxu0
        %v1647 = vadd.f32 %v1575, %v1646
        %v1648 = vpop.f32.mrb[0].mxu0
        %1649 = vdwg.mxu0
        %v1650 = vadd.f32 %v1647, %v791
        %v1651 = vld [vmem:[%s7] sm:$0x1]
        %v1652 = vld [vmem:[%s8] sm:$0x1]
        %v1653 = vsel %vm804, %v1650, 0.0
        %1654 = vadd.xlane.f32.xlu0 %v1653
        %v1655 = vpop.xlane.xlu0 %1654
        %v1656 = vrcp.pop 32.0
        %v1657 = vmul.f32 %v1655, %v1656
        %v1658 = vsub.f32 %v1650, %v1657
        %v1659 = vmul.f32 %v1658, %v1658
        %v1660 = vsel %vm804, %v1659, 0.0
        %1661 = vadd.xlane.f32.xlu0 %v1660
        %v1662 = vpop.xlane.xlu0 %1661
        %v1663 = vmul.f32 %v1662, %v1656
        %v1664 = vadd.f32 %v1663, 1e-05
        %v1665 = vrsqrt.pop %v1664
        %v1666 = vmul.f32 %v1658, %v1665
        %v1668 = vlaneseq
        %v1669 = vshrl.u32 %v1668, 7
        %v1670 = vsub.s32 0, %v1669
        %v1671 = vrot.slane %v1651, %v1670
        %v1673 = vmul.f32 %v1666, %v1671
        %v1675 = vlaneseq
        %v1676 = vshrl.u32 %v1675, 7
        %v1677 = vsub.s32 0, %v1676
        %v1678 = vrot.slane %v1652, %v1677
        %v1680 = vadd.f32 %v1673, %v1678
        %v1681 = vld [vmem:[%s9] sm:$0xff]
        %v1682 = vld [vmem:[%s9 + $0x8] sm:$0xff]
        %v1683 = vld [vmem:[%s9 + $0x10] sm:$0xff]
        %v1684 = vld [vmem:[%s9 + $0x18] sm:$0xff]
        %v1685 = vld [vmem:[%s10] sm:$0x1]
        %v1687 = vlaneseq
        %v1688 = vshrl.u32 %v1687, 7
        %v1689 = vsub.s32 0, %v1688
        %v1690 = vrot.slane %v1685, %v1689
        %v1693 = vsel %vm804, %v1680, 0
        %1695 = vmatprep.subr.mxu0 0.0
        %1696 = vmatpush1.msra.mxu0 %v1681
        %1697 = vmatprep.subr.mxu0 0.0
        %1698 = vmatpush1.msra.mxu0 %v1682
        %1699 = vmatprep.subr.mxu0 0.0
        %1700 = vmatpush1.msra.mxu0 %v1683
        %1701 = vmatprep.subr.mxu0 0.0
        %1702 = vmatpush1.msra.mxu0 %v1684
        %1703 = vmatprep.subr.mxu0 0.0
        %1704 = vmatpush1.msra.mxu0 0.0
        %1705 = vmatprep.subr.mxu0 0.0
        %1706 = vmatpush1.msra.mxu0 0.0
        %1707 = vmatprep.subr.mxu0 0.0
        %1708 = vmatpush1.msra.mxu0 0.0
        %1709 = vmatprep.subr.mxu0 0.0
        %1710 = vmatpush1.msra.mxu0 0.0
        %1711 = vmatprep.subr.mxu0 0.0
        %1712 = vmatpush1.msra.mxu0 0.0
        %1713 = vmatprep.subr.mxu0 0.0
        %1714 = vmatpush1.msra.mxu0 0.0
        %1715 = vmatprep.subr.mxu0 0.0
        %1716 = vmatpush1.msra.mxu0 0.0
        %1717 = vmatprep.subr.mxu0 0.0
        %1718 = vmatpush1.msra.mxu0 0.0
        %1719 = vmatprep.subr.mxu0 0.0
        %1720 = vmatpush1.msra.mxu0 0.0
        %1721 = vmatprep.subr.mxu0 0.0
        %1722 = vmatpush1.msra.mxu0 0.0
        %1723 = vmatprep.subr.mxu0 0.0
        %1724 = vmatpush1.msra.mxu0 0.0
        %1725 = vmatprep.subr.mxu0 0.0
        %1726 = vmatpush1.msra.mxu0 0.0
        %1727 = vmatprep.subr.mxu0 0.0
        %1728 = vmatpush1.msra.mxu0 0.0
        %1729 = vmatprep.subr.mxu0 0.0
        %1730 = vmatpush1.msra.mxu0 0.0
        %1731 = vmatprep.subr.mxu0 0.0
        %1732 = vmatpush1.msra.mxu0 0.0
        %1733 = vmatprep.subr.mxu0 0.0
        %1734 = vmatpush1.msra.mxu0 0.0
        %1735 = vmatprep.subr.mxu0 0.0
        %1736 = vmatpush1.msra.mxu0 0.0
        %1737 = vmatprep.subr.mxu0 0.0
        %1738 = vmatpush1.msra.mxu0 0.0
        %1739 = vmatprep.subr.mxu0 0.0
        %1740 = vmatpush1.msra.mxu0 0.0
        %1741 = vmatprep.subr.mxu0 0.0
        %1742 = vmatpush1.msra.mxu0 0.0
        %1743 = vmatprep.subr.mxu0 0.0
        %1744 = vmatpush1.msra.mxu0 0.0
        %1745 = vmatprep.subr.mxu0 0.0
        %1746 = vmatpush1.msra.mxu0 0.0
        %1747 = vmatprep.subr.mxu0 0.0
        %1748 = vmatpush1.msra.mxu0 0.0
        %1749 = vmatprep.subr.mxu0 0.0
        %1750 = vmatpush1.msra.mxu0 0.0
        %1751 = vmatprep.subr.mxu0 0.0
        %1752 = vmatpush1.msra.mxu0 0.0
        %1753 = vmatprep.subr.mxu0 0.0
        %1754 = vmatpush1.msra.mxu0 0.0
        %1755 = vmatprep.subr.mxu0 0.0
        %1756 = vmatpush1.msra.mxu0 0.0
        %1757 = vmatprep.subr.mxu0 0.0
        %1758 = vmatpush1.msra.mxu0 0.0
        %1759 = vmatprep.mubr.f32.mxu0 0.0
        %1760 = vmatmul.mubr.f32.gmra.mrb[0].mxu0 %v1693
        %v1761 = vpop.f32.mrb[0].mxu0
        %v1762 = vadd.f32 %v1690, %v1761
        %v1763 = vpop.f32.mrb[0].mxu0
        %1764 = vdwg.mxu0
        %v1765 = vmul.f32 %v1762, 0.17677669
        %v1766 = vld [vmem:[%s11] sm:$0xff]
        %v1767 = vld [vmem:[%s11 + $0x8] sm:$0xff]
        %v1768 = vld [vmem:[%s11 + $0x10] sm:$0xff]
        %v1769 = vld [vmem:[%s11 + $0x18] sm:$0xff]
        %v1770 = vld [vmem:[%s12] sm:$0x1]
        %v1772 = vlaneseq
        %v1773 = vshrl.u32 %v1772, 7
        %v1774 = vsub.s32 0, %v1773
        %v1775 = vrot.slane %v1770, %v1774
        %v1778 = vsel %vm804, %v792, 0
        %1780 = vmatprep.subr.mxu0 0.0
        %1781 = vmatpush1.msra.mxu0 %v1766
        %1782 = vmatprep.subr.mxu0 0.0
        %1783 = vmatpush1.msra.mxu0 %v1767
        %1784 = vmatprep.subr.mxu0 0.0
        %1785 = vmatpush1.msra.mxu0 %v1768
        %1786 = vmatprep.subr.mxu0 0.0
        %1787 = vmatpush1.msra.mxu0 %v1769
        %1788 = vmatprep.subr.mxu0 0.0
        %1789 = vmatpush1.msra.mxu0 0.0
        %1790 = vmatprep.subr.mxu0 0.0
        %1791 = vmatpush1.msra.mxu0 0.0
        %1792 = vmatprep.subr.mxu0 0.0
        %1793 = vmatpush1.msra.mxu0 0.0
        %1794 = vmatprep.subr.mxu0 0.0
        %1795 = vmatpush1.msra.mxu0 0.0
        %1796 = vmatprep.subr.mxu0 0.0
        %1797 = vmatpush1.msra.mxu0 0.0
        %1798 = vmatprep.subr.mxu0 0.0
        %1799 = vmatpush1.msra.mxu0 0.0
        %1800 = vmatprep.subr.mxu0 0.0
        %1801 = vmatpush1.msra.mxu0 0.0
        %1802 = vmatprep.subr.mxu0 0.0
        %1803 = vmatpush1.msra.mxu0 0.0
        %1804 = vmatprep.subr.mxu0 0.0
        %1805 = vmatpush1.msra.mxu0 0.0
        %1806 = vmatprep.subr.mxu0 0.0
        %1807 = vmatpush1.msra.mxu0 0.0
        %1808 = vmatprep.subr.mxu0 0.0
        %1809 = vmatpush1.msra.mxu0 0.0
        %1810 = vmatprep.subr.mxu0 0.0
        %1811 = vmatpush1.msra.mxu0 0.0
        %1812 = vmatprep.subr.mxu0 0.0
        %1813 = vmatpush1.msra.mxu0 0.0
        %1814 = vmatprep.subr.mxu0 0.0
        %1815 = vmatpush1.msra.mxu0 0.0
        %1816 = vmatprep.subr.mxu0 0.0
        %1817 = vmatpush1.msra.mxu0 0.0
        %1818 = vmatprep.subr.mxu0 0.0
        %1819 = vmatpush1.msra.mxu0 0.0
        %1820 = vmatprep.subr.mxu0 0.0
        %1821 = vmatpush1.msra.mxu0 0.0
        %1822 = vmatprep.subr.mxu0 0.0
        %1823 = vmatpush1.msra.mxu0 0.0
        %1824 = vmatprep.subr.mxu0 0.0
        %1825 = vmatpush1.msra.mxu0 0.0
        %1826 = vmatprep.subr.mxu0 0.0
        %1827 = vmatpush1.msra.mxu0 0.0
        %1828 = vmatprep.subr.mxu0 0.0
        %1829 = vmatpush1.msra.mxu0 0.0
        %1830 = vmatprep.subr.mxu0 0.0
        %1831 = vmatpush1.msra.mxu0 0.0
        %1832 = vmatprep.subr.mxu0 0.0
        %1833 = vmatpush1.msra.mxu0 0.0
        %1834 = vmatprep.subr.mxu0 0.0
        %1835 = vmatpush1.msra.mxu0 0.0
        %1836 = vmatprep.subr.mxu0 0.0
        %1837 = vmatpush1.msra.mxu0 0.0
        %1838 = vmatprep.subr.mxu0 0.0
        %1839 = vmatpush1.msra.mxu0 0.0
        %1840 = vmatprep.subr.mxu0 0.0
        %1841 = vmatpush1.msra.mxu0 0.0
        %1842 = vmatprep.subr.mxu0 0.0
        %1843 = vmatpush1.msra.mxu0 0.0
        %1844 = vmatprep.mubr.f32.mxu0 0.0
        %1845 = vmatmul.mubr.f32.gmra.mrb[0].mxu0 %v1778
        %v1846 = vpop.f32.mrb[0].mxu0
        %v1847 = vadd.f32 %v1775, %v1846
        %v1848 = vpop.f32.mrb[0].mxu0
        %1849 = vdwg.mxu0
        %v1850 = vld [vmem:[%s790] sm:$0x1]
        %vm1851 = vcmp.ne.f32.partialorder %v1850, 0.0
        %v1852 = vsel %vm1851, 1, 0
        %v1853 = vlaneseq
        %v1854 = vshrl.u32 %v1853, 7
        %v1855 = vsub.s32 0, %v1854
        %v1856 = vrot.slane %v1852, %v1855
        %vm1857 = vcmp.eq.s32.totalorder %v1856, 1
        %v1859 = vsel %vm887, %v1765, 0
        %v1862 = vsel %vm887, %v1847, 0
        %1864 = vmatprep.subr.mxu0 0.0
        %1865 = vmatpush1.xpose.msra.mxu0 %v1862
        %1866 = vmatprep.subr.mxu0 0.0
        %1867 = vmatpush1.xpose.msra.mxu0 0.0
        %1868 = vmatprep.subr.mxu0 0.0
        %1869 = vmatpush1.xpose.msra.mxu0 0.0
        %1870 = vmatprep.subr.mxu0 0.0
        %1871 = vmatpush1.xpose.msra.mxu0 0.0
        %1872 = vmatprep.subr.mxu0 0.0
        %1873 = vmatpush1.xpose.msra.mxu0 0.0
        %1874 = vmatprep.subr.mxu0 0.0
        %1875 = vmatpush1.xpose.msra.mxu0 0.0
        %1876 = vmatprep.subr.mxu0 0.0
        %1877 = vmatpush1.xpose.msra.mxu0 0.0
        %1878 = vmatprep.subr.mxu0 0.0
        %1879 = vmatpush1.xpose.msra.mxu0 0.0
        %1880 = vmatprep.subr.mxu0 0.0
        %1881 = vmatpush1.xpose.msra.mxu0 0.0
        %1882 = vmatprep.subr.mxu0 0.0
        %1883 = vmatpush1.xpose.msra.mxu0 0.0
        %1884 = vmatprep.subr.mxu0 0.0
        %1885 = vmatpush1.xpose.msra.mxu0 0.0
        %1886 = vmatprep.subr.mxu0 0.0
        %1887 = vmatpush1.xpose.msra.mxu0 0.0
        %1888 = vmatprep.subr.mxu0 0.0
        %1889 = vmatpush1.xpose.msra.mxu0 0.0
        %1890 = vmatprep.subr.mxu0 0.0
        %1891 = vmatpush1.xpose.msra.mxu0 0.0
        %1892 = vmatprep.subr.mxu0 0.0
        %1893 = vmatpush1.xpose.msra.mxu0 0.0
        %1894 = vmatprep.subr.mxu0 0.0
        %1895 = vmatpush1.xpose.msra.mxu0 0.0
        %1896 = vmatprep.subr.mxu0 0.0
        %1897 = vmatpush1.xpose.msra.mxu0 0.0
        %1898 = vmatprep.subr.mxu0 0.0
        %1899 = vmatpush1.xpose.msra.mxu0 0.0
        %1900 = vmatprep.subr.mxu0 0.0
        %1901 = vmatpush1.xpose.msra.mxu0 0.0
        %1902 = vmatprep.subr.mxu0 0.0
        %1903 = vmatpush1.xpose.msra.mxu0 0.0
        %1904 = vmatprep.subr.mxu0 0.0
        %1905 = vmatpush1.xpose.msra.mxu0 0.0
        %1906 = vmatprep.subr.mxu0 0.0
        %1907 = vmatpush1.xpose.msra.mxu0 0.0
        %1908 = vmatprep.subr.mxu0 0.0
        %1909 = vmatpush1.xpose.msra.mxu0 0.0
        %1910 = vmatprep.subr.mxu0 0.0
        %1911 = vmatpush1.xpose.msra.mxu0 0.0
        %1912 = vmatprep.subr.mxu0 0.0
        %1913 = vmatpush1.xpose.msra.mxu0 0.0
        %1914 = vmatprep.subr.mxu0 0.0
        %1915 = vmatpush1.xpose.msra.mxu0 0.0
        %1916 = vmatprep.subr.mxu0 0.0
        %1917 = vmatpush1.xpose.msra.mxu0 0.0
        %1918 = vmatprep.subr.mxu0 0.0
        %1919 = vmatpush1.xpose.msra.mxu0 0.0
        %1920 = vmatprep.subr.mxu0 0.0
        %1921 = vmatpush1.xpose.msra.mxu0 0.0
        %1922 = vmatprep.subr.mxu0 0.0
        %1923 = vmatpush1.xpose.msra.mxu0 0.0
        %1924 = vmatprep.subr.mxu0 0.0
        %1925 = vmatpush1.xpose.msra.mxu0 0.0
        %1926 = vmatprep.subr.mxu0 0.0
        %1927 = vmatpush1.xpose.msra.mxu0 0.0
        %1928 = vmatprep.mubr.f32.mxu0 0.0
        %1929 = vmatmul.mubr.f32.gmra.mrb[0].mxu0 %v1859
        %v1930 = vpop.f32.mrb[0].mxu0
        %v1931 = vadd.f32 0.0, %v1930
        %v1932 = vpop.f32.mrb[0].mxu0
        %1933 = vdwg.mxu0
        %v1934 = vsel %vm1857, %v1931, -1e+20
        %v1935 = vsel %vm887, %v1934, -inf
        %1936 = vmax.xlane.f32.xlu0 %v1935
        %v1937 = vpop.xlane.xlu0 %1936
        %v1938 = vsub.f32 %v1934, %v1937
        %v1939 = vmul.f32 %v1938, 1.442695
        %v1940 = vpow.pop %v1939
        %v1941 = vsel %vm887, %v1940, 0.0
        %1942 = vadd.xlane.f32.xlu0 %v1941
        %v1943 = vpop.xlane.xlu0 %1942
        %v1944 = vrcp.pop %v1943
        %v1945 = vmul.f32 %v1940, %v1944
        %1946 = vrot.lane.b32.xlu0 %v1847, 96
        %v1947 = vpop.permute.xlu0 %1946
        %v1950 = vsel %vm887, %v1945, 0
        %1952 = vmatprep.subr.mxu0 0.0
        %1953 = vmatpush1.msra.mxu0 %v1947
        %1954 = vmatprep.subr.mxu0 0.0
        %1955 = vmatpush1.msra.mxu0 0.0
        %1956 = vmatprep.subr.mxu0 0.0
        %1957 = vmatpush1.msra.mxu0 0.0
        %1958 = vmatprep.subr.mxu0 0.0
        %1959 = vmatpush1.msra.mxu0 0.0
        %1960 = vmatprep.subr.mxu0 0.0
        %1961 = vmatpush1.msra.mxu0 0.0
        %1962 = vmatprep.subr.mxu0 0.0
        %1963 = vmatpush1.msra.mxu0 0.0
        %1964 = vmatprep.subr.mxu0 0.0
        %1965 = vmatpush1.msra.mxu0 0.0
        %1966 = vmatprep.subr.mxu0 0.0
        %1967 = vmatpush1.msra.mxu0 0.0
        %1968 = vmatprep.subr.mxu0 0.0
        %1969 = vmatpush1.msra.mxu0 0.0
        %1970 = vmatprep.subr.mxu0 0.0
        %1971 = vmatpush1.msra.mxu0 0.0
        %1972 = vmatprep.subr.mxu0 0.0
        %1973 = vmatpush1.msra.mxu0 0.0
        %1974 = vmatprep.subr.mxu0 0.0
        %1975 = vmatpush1.msra.mxu0 0.0
        %1976 = vmatprep.subr.mxu0 0.0
        %1977 = vmatpush1.msra.mxu0 0.0
        %1978 = vmatprep.subr.mxu0 0.0
        %1979 = vmatpush1.msra.mxu0 0.0
        %1980 = vmatprep.subr.mxu0 0.0
        %1981 = vmatpush1.msra.mxu0 0.0
        %1982 = vmatprep.subr.mxu0 0.0
        %1983 = vmatpush1.msra.mxu0 0.0
        %1984 = vmatprep.subr.mxu0 0.0
        %1985 = vmatpush1.msra.mxu0 0.0
        %1986 = vmatprep.subr.mxu0 0.0
        %1987 = vmatpush1.msra.mxu0 0.0
        %1988 = vmatprep.subr.mxu0 0.0
        %1989 = vmatpush1.msra.mxu0 0.0
        %1990 = vmatprep.subr.mxu0 0.0
        %1991 = vmatpush1.msra.mxu0 0.0
        %1992 = vmatprep.subr.mxu0 0.0
        %1993 = vmatpush1.msra.mxu0 0.0
        %1994 = vmatprep.subr.mxu0 0.0
        %1995 = vmatpush1.msra.mxu0 0.0
        %1996 = vmatprep.subr.mxu0 0.0
        %1997 = vmatpush1.msra.mxu0 0.0
        %1998 = vmatprep.subr.mxu0 0.0
        %1999 = vmatpush1.msra.mxu0 0.0
        %2000 = vmatprep.subr.mxu0 0.0
        %2001 = vmatpush1.msra.mxu0 0.0
        %2002 = vmatprep.subr.mxu0 0.0
        %2003 = vmatpush1.msra.mxu0 0.0
        %2004 = vmatprep.subr.mxu0 0.0
        %2005 = vmatpush1.msra.mxu0 0.0
        %2006 = vmatprep.subr.mxu0 0.0
        %2007 = vmatpush1.msra.mxu0 0.0
        %2008 = vmatprep.subr.mxu0 0.0
        %2009 = vmatpush1.msra.mxu0 0.0
        %2010 = vmatprep.subr.mxu0 0.0
        %2011 = vmatpush1.msra.mxu0 0.0
        %2012 = vmatprep.subr.mxu0 0.0
        %2013 = vmatpush1.msra.mxu0 0.0
        %2014 = vmatprep.subr.mxu0 0.0
        %2015 = vmatpush1.msra.mxu0 0.0
        %2016 = vmatprep.mubr.f32.mxu0 0.0
        %2017 = vmatmul.mubr.f32.gmra.mrb[0].mxu0 %v1950
        %v2018 = vpop.f32.mrb[0].mxu0
        %v2019 = vadd.f32 0.0, %v2018
        %v2020 = vpop.f32.mrb[0].mxu0
        %2021 = vdwg.mxu0
        %2022 = vrot.lane.b32.xlu0 %v1765, 120
        %v2023 = vpop.permute.xlu0 %2022
        %2024 = vrot.lane.b32.xlu0 %v1847, 120
        %v2025 = vpop.permute.xlu0 %2024
        %v2026 = vsel %vm887, %v2023, 0
        %v2028 = vsel %vm887, %v2025, 0
        %2030 = vmatprep.subr.mxu0 0.0
        %2031 = vmatpush1.xpose.msra.mxu0 %v2028
        %2032 = vmatprep.subr.mxu0 0.0
        %2033 = vmatpush1.xpose.msra.mxu0 0.0
        %2034 = vmatprep.subr.mxu0 0.0
        %2035 = vmatpush1.xpose.msra.mxu0 0.0
        %2036 = vmatprep.subr.mxu0 0.0
        %2037 = vmatpush1.xpose.msra.mxu0 0.0
        %2038 = vmatprep.subr.mxu0 0.0
        %2039 = vmatpush1.xpose.msra.mxu0 0.0
        %2040 = vmatprep.subr.mxu0 0.0
        %2041 = vmatpush1.xpose.msra.mxu0 0.0
        %2042 = vmatprep.subr.mxu0 0.0
        %2043 = vmatpush1.xpose.msra.mxu0 0.0
        %2044 = vmatprep.subr.mxu0 0.0
        %2045 = vmatpush1.xpose.msra.mxu0 0.0
        %2046 = vmatprep.subr.mxu0 0.0
        %2047 = vmatpush1.xpose.msra.mxu0 0.0
        %2048 = vmatprep.subr.mxu0 0.0
        %2049 = vmatpush1.xpose.msra.mxu0 0.0
        %2050 = vmatprep.subr.mxu0 0.0
        %2051 = vmatpush1.xpose.msra.mxu0 0.0
        %2052 = vmatprep.subr.mxu0 0.0
        %2053 = vmatpush1.xpose.msra.mxu0 0.0
        %2054 = vmatprep.subr.mxu0 0.0
        %2055 = vmatpush1.xpose.msra.mxu0 0.0
        %2056 = vmatprep.subr.mxu0 0.0
        %2057 = vmatpush1.xpose.msra.mxu0 0.0
        %2058 = vmatprep.subr.mxu0 0.0
        %2059 = vmatpush1.xpose.msra.mxu0 0.0
        %2060 = vmatprep.subr.mxu0 0.0
        %2061 = vmatpush1.xpose.msra.mxu0 0.0
        %2062 = vmatprep.subr.mxu0 0.0
        %2063 = vmatpush1.xpose.msra.mxu0 0.0
        %2064 = vmatprep.subr.mxu0 0.0
        %2065 = vmatpush1.xpose.msra.mxu0 0.0
        %2066 = vmatprep.subr.mxu0 0.0
        %2067 = vmatpush1.xpose.msra.mxu0 0.0
        %2068 = vmatprep.subr.mxu0 0.0
        %2069 = vmatpush1.xpose.msra.mxu0 0.0
        %2070 = vmatprep.subr.mxu0 0.0
        %2071 = vmatpush1.xpose.msra.mxu0 0.0
        %2072 = vmatprep.subr.mxu0 0.0
        %2073 = vmatpush1.xpose.msra.mxu0 0.0
        %2074 = vmatprep.subr.mxu0 0.0
        %2075 = vmatpush1.xpose.msra.mxu0 0.0
        %2076 = vmatprep.subr.mxu0 0.0
        %2077 = vmatpush1.xpose.msra.mxu0 0.0
        %2078 = vmatprep.subr.mxu0 0.0
        %2079 = vmatpush1.xpose.msra.mxu0 0.0
        %2080 = vmatprep.subr.mxu0 0.0
        %2081 = vmatpush1.xpose.msra.mxu0 0.0
        %2082 = vmatprep.subr.mxu0 0.0
        %2083 = vmatpush1.xpose.msra.mxu0 0.0
        %2084 = vmatprep.subr.mxu0 0.0
        %2085 = vmatpush1.xpose.msra.mxu0 0.0
        %2086 = vmatprep.subr.mxu0 0.0
        %2087 = vmatpush1.xpose.msra.mxu0 0.0
        %2088 = vmatprep.subr.mxu0 0.0
        %2089 = vmatpush1.xpose.msra.mxu0 0.0
        %2090 = vmatprep.subr.mxu0 0.0
        %2091 = vmatpush1.xpose.msra.mxu0 0.0
        %2092 = vmatprep.subr.mxu0 0.0
        %2093 = vmatpush1.xpose.msra.mxu0 0.0
        %2094 = vmatprep.mubr.f32.mxu0 0.0
        %2095 = vmatmul.mubr.f32.gmra.mrb[0].mxu0 %v2026
        %v2096 = vpop.f32.mrb[0].mxu0
        %v2097 = vadd.f32 0.0, %v2096
        %v2098 = vpop.f32.mrb[0].mxu0
        %2099 = vdwg.mxu0
        %v2100 = vsel %vm1857, %v2097, -1e+20
        %v2101 = vsel %vm887, %v2100, -inf
        %2102 = vmax.xlane.f32.xlu0 %v2101
        %v2103 = vpop.xlane.xlu0 %2102
        %v2104 = vsub.f32 %v2100, %v2103
        %v2105 = vmul.f32 %v2104, 1.442695
        %v2106 = vpow.pop %v2105
        %v2107 = vsel %vm887, %v2106, 0.0
        %2108 = vadd.xlane.f32.xlu0 %v2107
        %v2109 = vpop.xlane.xlu0 %2108
        %v2110 = vrcp.pop %v2109
        %v2111 = vmul.f32 %v2106, %v2110
        %2112 = vrot.lane.b32.xlu0 %v1847, 88
        %v2113 = vpop.permute.xlu0 %2112
        %v2116 = vsel %vm887, %v2111, 0
        %2118 = vmatprep.subr.mxu0 0.0
        %2119 = vmatpush1.msra.mxu0 %v2113
        %2120 = vmatprep.subr.mxu0 0.0
        %2121 = vmatpush1.msra.mxu0 0.0
        %2122 = vmatprep.subr.mxu0 0.0
        %2123 = vmatpush1.msra.mxu0 0.0
        %2124 = vmatprep.subr.mxu0 0.0
        %2125 = vmatpush1.msra.mxu0 0.0
        %2126 = vmatprep.subr.mxu0 0.0
        %2127 = vmatpush1.msra.mxu0 0.0
        %2128 = vmatprep.subr.mxu0 0.0
        %2129 = vmatpush1.msra.mxu0 0.0
        %2130 = vmatprep.subr.mxu0 0.0
        %2131 = vmatpush1.msra.mxu0 0.0
        %2132 = vmatprep.subr.mxu0 0.0
        %2133 = vmatpush1.msra.mxu0 0.0
        %2134 = vmatprep.subr.mxu0 0.0
        %2135 = vmatpush1.msra.mxu0 0.0
        %2136 = vmatprep.subr.mxu0 0.0
        %2137 = vmatpush1.msra.mxu0 0.0
        %2138 = vmatprep.subr.mxu0 0.0
        %2139 = vmatpush1.msra.mxu0 0.0
        %2140 = vmatprep.subr.mxu0 0.0
        %2141 = vmatpush1.msra.mxu0 0.0
        %2142 = vmatprep.subr.mxu0 0.0
        %2143 = vmatpush1.msra.mxu0 0.0
        %2144 = vmatprep.subr.mxu0 0.0
        %2145 = vmatpush1.msra.mxu0 0.0
        %2146 = vmatprep.subr.mxu0 0.0
        %2147 = vmatpush1.msra.mxu0 0.0
        %2148 = vmatprep.subr.mxu0 0.0
        %2149 = vmatpush1.msra.mxu0 0.0
        %2150 = vmatprep.subr.mxu0 0.0
        %2151 = vmatpush1.msra.mxu0 0.0
        %2152 = vmatprep.subr.mxu0 0.0
        %2153 = vmatpush1.msra.mxu0 0.0
        %2154 = vmatprep.subr.mxu0 0.0
        %2155 = vmatpush1.msra.mxu0 0.0
        %2156 = vmatprep.subr.mxu0 0.0
        %2157 = vmatpush1.msra.mxu0 0.0
        %2158 = vmatprep.subr.mxu0 0.0
        %2159 = vmatpush1.msra.mxu0 0.0
        %2160 = vmatprep.subr.mxu0 0.0
        %2161 = vmatpush1.msra.mxu0 0.0
        %2162 = vmatprep.subr.mxu0 0.0
        %2163 = vmatpush1.msra.mxu0 0.0
        %2164 = vmatprep.subr.mxu0 0.0
        %2165 = vmatpush1.msra.mxu0 0.0
        %2166 = vmatprep.subr.mxu0 0.0
        %2167 = vmatpush1.msra.mxu0 0.0
        %2168 = vmatprep.subr.mxu0 0.0
        %2169 = vmatpush1.msra.mxu0 0.0
        %2170 = vmatprep.subr.mxu0 0.0
        %2171 = vmatpush1.msra.mxu0 0.0
        %2172 = vmatprep.subr.mxu0 0.0
        %2173 = vmatpush1.msra.mxu0 0.0
        %2174 = vmatprep.subr.mxu0 0.0
        %2175 = vmatpush1.msra.mxu0 0.0
        %2176 = vmatprep.subr.mxu0 0.0
        %2177 = vmatpush1.msra.mxu0 0.0
        %2178 = vmatprep.subr.mxu0 0.0
        %2179 = vmatpush1.msra.mxu0 0.0
        %2180 = vmatprep.subr.mxu0 0.0
        %2181 = vmatpush1.msra.mxu0 0.0
        %2182 = vmatprep.mubr.f32.mxu0 0.0
        %2183 = vmatmul.mubr.f32.gmra.mrb[0].mxu0 %v2116
        %v2184 = vpop.f32.mrb[0].mxu0
        %v2185 = vadd.f32 0.0, %v2184
        %v2186 = vpop.f32.mrb[0].mxu0
        %2187 = vdwg.mxu0
        %2188 = vrot.lane.b32.xlu0 %v1765, 112
        %v2189 = vpop.permute.xlu0 %2188
        %2190 = vrot.lane.b32.xlu0 %v1847, 112
        %v2191 = vpop.permute.xlu0 %2190
        %v2192 = vsel %vm887, %v2189, 0
        %v2194 = vsel %vm887, %v2191, 0
        %2196 = vmatprep.subr.mxu0 0.0
        %2197 = vmatpush1.xpose.msra.mxu0 %v2194
        %2198 = vmatprep.subr.mxu0 0.0
        %2199 = vmatpush1.xpose.msra.mxu0 0.0
        %2200 = vmatprep.subr.mxu0 0.0
        %2201 = vmatpush1.xpose.msra.mxu0 0.0
        %2202 = vmatprep.subr.mxu0 0.0
        %2203 = vmatpush1.xpose.msra.mxu0 0.0
        %2204 = vmatprep.subr.mxu0 0.0
        %2205 = vmatpush1.xpose.msra.mxu0 0.0
        %2206 = vmatprep.subr.mxu0 0.0
        %2207 = vmatpush1.xpose.msra.mxu0 0.0
        %2208 = vmatprep.subr.mxu0 0.0
        %2209 = vmatpush1.xpose.msra.mxu0 0.0
        %2210 = vmatprep.subr.mxu0 0.0
        %2211 = vmatpush1.xpose.msra.mxu0 0.0
        %2212 = vmatprep.subr.mxu0 0.0
        %2213 = vmatpush1.xpose.msra.mxu0 0.0
        %2214 = vmatprep.subr.mxu0 0.0
        %2215 = vmatpush1.xpose.msra.mxu0 0.0
        %2216 = vmatprep.subr.mxu0 0.0
        %2217 = vmatpush1.xpose.msra.mxu0 0.0
        %2218 = vmatprep.subr.mxu0 0.0
        %2219 = vmatpush1.xpose.msra.mxu0 0.0
        %2220 = vmatprep.subr.mxu0 0.0
        %2221 = vmatpush1.xpose.msra.mxu0 0.0
        %2222 = vmatprep.subr.mxu0 0.0
        %2223 = vmatpush1.xpose.msra.mxu0 0.0
        %2224 = vmatprep.subr.mxu0 0.0
        %2225 = vmatpush1.xpose.msra.mxu0 0.0
        %2226 = vmatprep.subr.mxu0 0.0
        %2227 = vmatpush1.xpose.msra.mxu0 0.0
        %2228 = vmatprep.subr.mxu0 0.0
        %2229 = vmatpush1.xpose.msra.mxu0 0.0
        %2230 = vmatprep.subr.mxu0 0.0
        %2231 = vmatpush1.xpose.msra.mxu0 0.0
        %2232 = vmatprep.subr.mxu0 0.0
        %2233 = vmatpush1.xpose.msra.mxu0 0.0
        %2234 = vmatprep.subr.mxu0 0.0
        %2235 = vmatpush1.xpose.msra.mxu0 0.0
        %2236 = vmatprep.subr.mxu0 0.0
        %2237 = vmatpush1.xpose.msra.mxu0 0.0
        %2238 = vmatprep.subr.mxu0 0.0
        %2239 = vmatpush1.xpose.msra.mxu0 0.0
        %2240 = vmatprep.subr.mxu0 0.0
        %2241 = vmatpush1.xpose.msra.mxu0 0.0
        %2242 = vmatprep.subr.mxu0 0.0
        %2243 = vmatpush1.xpose.msra.mxu0 0.0
        %2244 = vmatprep.subr.mxu0 0.0
        %2245 = vmatpush1.xpose.msra.mxu0 0.0
        %2246 = vmatprep.subr.mxu0 0.0
        %2247 = vmatpush1.xpose.msra.mxu0 0.0
        %2248 = vmatprep.subr.mxu0 0.0
        %2249 = vmatpush1.xpose.msra.mxu0 0.0
        %2250 = vmatprep.subr.mxu0 0.0
        %2251 = vmatpush1.xpose.msra.mxu0 0.0
        %2252 = vmatprep.subr.mxu0 0.0
        %2253 = vmatpush1.xpose.msra.mxu0 0.0
        %2254 = vmatprep.subr.mxu0 0.0
        %2255 = vmatpush1.xpose.msra.mxu0 0.0
        %2256 = vmatprep.subr.mxu0 0.0
        %2257 = vmatpush1.xpose.msra.mxu0 0.0
        %2258 = vmatprep.subr.mxu0 0.0
        %2259 = vmatpush1.xpose.msra.mxu0 0.0
        %2260 = vmatprep.mubr.f32.mxu0 0.0
        %2261 = vmatmul.mubr.f32.gmra.mrb[0].mxu0 %v2192
        %v2262 = vpop.f32.mrb[0].mxu0
        %v2263 = vadd.f32 0.0, %v2262
        %v2264 = vpop.f32.mrb[0].mxu0
        %2265 = vdwg.mxu0
        %v2266 = vsel %vm1857, %v2263, -1e+20
        %v2267 = vsel %vm887, %v2266, -inf
        %2268 = vmax.xlane.f32.xlu0 %v2267
        %v2269 = vpop.xlane.xlu0 %2268
        %v2270 = vsub.f32 %v2266, %v2269
        %v2271 = vmul.f32 %v2270, 1.442695
        %v2272 = vpow.pop %v2271
        %v2273 = vsel %vm887, %v2272, 0.0
        %2274 = vadd.xlane.f32.xlu0 %v2273
        %v2275 = vpop.xlane.xlu0 %2274
        %v2276 = vrcp.pop %v2275
        %v2277 = vmul.f32 %v2272, %v2276
        %2278 = vrot.lane.b32.xlu0 %v1847, 80
        %v2279 = vpop.permute.xlu0 %2278
        %v2282 = vsel %vm887, %v2277, 0
        %2284 = vmatprep.subr.mxu0 0.0
        %2285 = vmatpush1.msra.mxu0 %v2279
        %2286 = vmatprep.subr.mxu0 0.0
        %2287 = vmatpush1.msra.mxu0 0.0
        %2288 = vmatprep.subr.mxu0 0.0
        %2289 = vmatpush1.msra.mxu0 0.0
        %2290 = vmatprep.subr.mxu0 0.0
        %2291 = vmatpush1.msra.mxu0 0.0
        %2292 = vmatprep.subr.mxu0 0.0
        %2293 = vmatpush1.msra.mxu0 0.0
        %2294 = vmatprep.subr.mxu0 0.0
        %2295 = vmatpush1.msra.mxu0 0.0
        %2296 = vmatprep.subr.mxu0 0.0
        %2297 = vmatpush1.msra.mxu0 0.0
        %2298 = vmatprep.subr.mxu0 0.0
        %2299 = vmatpush1.msra.mxu0 0.0
        %2300 = vmatprep.subr.mxu0 0.0
        %2301 = vmatpush1.msra.mxu0 0.0
        %2302 = vmatprep.subr.mxu0 0.0
        %2303 = vmatpush1.msra.mxu0 0.0
        %2304 = vmatprep.subr.mxu0 0.0
        %2305 = vmatpush1.msra.mxu0 0.0
        %2306 = vmatprep.subr.mxu0 0.0
        %2307 = vmatpush1.msra.mxu0 0.0
        %2308 = vmatprep.subr.mxu0 0.0
        %2309 = vmatpush1.msra.mxu0 0.0
        %2310 = vmatprep.subr.mxu0 0.0
        %2311 = vmatpush1.msra.mxu0 0.0
        %2312 = vmatprep.subr.mxu0 0.0
        %2313 = vmatpush1.msra.mxu0 0.0
        %2314 = vmatprep.subr.mxu0 0.0
        %2315 = vmatpush1.msra.mxu0 0.0
        %2316 = vmatprep.subr.mxu0 0.0
        %2317 = vmatpush1.msra.mxu0 0.0
        %2318 = vmatprep.subr.mxu0 0.0
        %2319 = vmatpush1.msra.mxu0 0.0
        %2320 = vmatprep.subr.mxu0 0.0
        %2321 = vmatpush1.msra.mxu0 0.0
        %2322 = vmatprep.subr.mxu0 0.0
        %2323 = vmatpush1.msra.mxu0 0.0
        %2324 = vmatprep.subr.mxu0 0.0
        %2325 = vmatpush1.msra.mxu0 0.0
        %2326 = vmatprep.subr.mxu0 0.0
        %2327 = vmatpush1.msra.mxu0 0.0
        %2328 = vmatprep.subr.mxu0 0.0
        %2329 = vmatpush1.msra.mxu0 0.0
        %2330 = vmatprep.subr.mxu0 0.0
        %2331 = vmatpush1.msra.mxu0 0.0
        %2332 = vmatprep.subr.mxu0 0.0
        %2333 = vmatpush1.msra.mxu0 0.0
        %2334 = vmatprep.subr.mxu0 0.0
        %2335 = vmatpush1.msra.mxu0 0.0
        %2336 = vmatprep.subr.mxu0 0.0
        %2337 = vmatpush1.msra.mxu0 0.0
        %2338 = vmatprep.subr.mxu0 0.0
        %2339 = vmatpush1.msra.mxu0 0.0
        %2340 = vmatprep.subr.mxu0 0.0
        %2341 = vmatpush1.msra.mxu0 0.0
        %2342 = vmatprep.subr.mxu0 0.0
        %2343 = vmatpush1.msra.mxu0 0.0
        %2344 = vmatprep.subr.mxu0 0.0
        %2345 = vmatpush1.msra.mxu0 0.0
        %2346 = vmatprep.subr.mxu0 0.0
        %2347 = vmatpush1.msra.mxu0 0.0
        %2348 = vmatprep.mubr.f32.mxu0 0.0
        %2349 = vmatmul.mubr.f32.gmra.mrb[0].mxu0 %v2282
        %v2350 = vpop.f32.mrb[0].mxu0
        %v2351 = vadd.f32 0.0, %v2350
        %v2352 = vpop.f32.mrb[0].mxu0
        %2353 = vdwg.mxu0
        %2354 = vrot.lane.b32.xlu0 %v1765, 104
        %v2355 = vpop.permute.xlu0 %2354
        %2356 = vrot.lane.b32.xlu0 %v1847, 104
        %v2357 = vpop.permute.xlu0 %2356
        %v2358 = vsel %vm887, %v2355, 0
        %v2360 = vsel %vm887, %v2357, 0
        %2362 = vmatprep.subr.mxu0 0.0
        %2363 = vmatpush1.xpose.msra.mxu0 %v2360
        %2364 = vmatprep.subr.mxu0 0.0
        %2365 = vmatpush1.xpose.msra.mxu0 0.0
        %2366 = vmatprep.subr.mxu0 0.0
        %2367 = vmatpush1.xpose.msra.mxu0 0.0
        %2368 = vmatprep.subr.mxu0 0.0
        %2369 = vmatpush1.xpose.msra.mxu0 0.0
        %2370 = vmatprep.subr.mxu0 0.0
        %2371 = vmatpush1.xpose.msra.mxu0 0.0
        %2372 = vmatprep.subr.mxu0 0.0
        %2373 = vmatpush1.xpose.msra.mxu0 0.0
        %2374 = vmatprep.subr.mxu0 0.0
        %2375 = vmatpush1.xpose.msra.mxu0 0.0
        %2376 = vmatprep.subr.mxu0 0.0
        %2377 = vmatpush1.xpose.msra.mxu0 0.0
        %2378 = vmatprep.subr.mxu0 0.0
        %2379 = vmatpush1.xpose.msra.mxu0 0.0
        %2380 = vmatprep.subr.mxu0 0.0
        %2381 = vmatpush1.xpose.msra.mxu0 0.0
        %2382 = vmatprep.subr.mxu0 0.0
        %2383 = vmatpush1.xpose.msra.mxu0 0.0
        %2384 = vmatprep.subr.mxu0 0.0
        %2385 = vmatpush1.xpose.msra.mxu0 0.0
        %2386 = vmatprep.subr.mxu0 0.0
        %2387 = vmatpush1.xpose.msra.mxu0 0.0
        %2388 = vmatprep.subr.mxu0 0.0
        %2389 = vmatpush1.xpose.msra.mxu0 0.0
        %2390 = vmatprep.subr.mxu0 0.0
        %2391 = vmatpush1.xpose.msra.mxu0 0.0
        %2392 = vmatprep.subr.mxu0 0.0
        %2393 = vmatpush1.xpose.msra.mxu0 0.0
        %2394 = vmatprep.subr.mxu0 0.0
        %2395 = vmatpush1.xpose.msra.mxu0 0.0
        %2396 = vmatprep.subr.mxu0 0.0
        %2397 = vmatpush1.xpose.msra.mxu0 0.0
        %2398 = vmatprep.subr.mxu0 0.0
        %2399 = vmatpush1.xpose.msra.mxu0 0.0
        %2400 = vmatprep.subr.mxu0 0.0
        %2401 = vmatpush1.xpose.msra.mxu0 0.0
        %2402 = vmatprep.subr.mxu0 0.0
        %2403 = vmatpush1.xpose.msra.mxu0 0.0
        %2404 = vmatprep.subr.mxu0 0.0
        %2405 = vmatpush1.xpose.msra.mxu0 0.0
        %2406 = vmatprep.subr.mxu0 0.0
        %2407 = vmatpush1.xpose.msra.mxu0 0.0
        %2408 = vmatprep.subr.mxu0 0.0
        %2409 = vmatpush1.xpose.msra.mxu0 0.0
        %2410 = vmatprep.subr.mxu0 0.0
        %2411 = vmatpush1.xpose.msra.mxu0 0.0
        %2412 = vmatprep.subr.mxu0 0.0
        %2413 = vmatpush1.xpose.msra.mxu0 0.0
        %2414 = vmatprep.subr.mxu0 0.0
        %2415 = vmatpush1.xpose.msra.mxu0 0.0
        %2416 = vmatprep.subr.mxu0 0.0
        %2417 = vmatpush1.xpose.msra.mxu0 0.0
        %2418 = vmatprep.subr.mxu0 0.0
        %2419 = vmatpush1.xpose.msra.mxu0 0.0
        %2420 = vmatprep.subr.mxu0 0.0
        %2421 = vmatpush1.xpose.msra.mxu0 0.0
        %2422 = vmatprep.subr.mxu0 0.0
        %2423 = vmatpush1.xpose.msra.mxu0 0.0
        %2424 = vmatprep.subr.mxu0 0.0
        %2425 = vmatpush1.xpose.msra.mxu0 0.0
        %2426 = vmatprep.mubr.f32.mxu0 0.0
        %2427 = vmatmul.mubr.f32.gmra.mrb[0].mxu0 %v2358
        %v2428 = vpop.f32.mrb[0].mxu0
        %v2429 = vadd.f32 0.0, %v2428
        %v2430 = vpop.f32.mrb[0].mxu0
        %2431 = vdwg.mxu0
        %v2432 = vsel %vm1857, %v2429, -1e+20
        %v2433 = vsel %vm887, %v2432, -inf
        %2434 = vmax.xlane.f32.xlu0 %v2433
        %v2435 = vpop.xlane.xlu0 %2434
        %v2436 = vsub.f32 %v2432, %v2435
        %v2437 = vmul.f32 %v2436, 1.442695
        %v2438 = vpow.pop %v2437
        %v2439 = vsel %vm887, %v2438, 0.0
        %2440 = vadd.xlane.f32.xlu0 %v2439
        %v2441 = vpop.xlane.xlu0 %2440
        %v2442 = vrcp.pop %v2441
        %v2443 = vmul.f32 %v2438, %v2442
        %2444 = vrot.lane.b32.xlu0 %v1847, 72
        %v2445 = vpop.permute.xlu0 %2444
        %v2448 = vsel %vm887, %v2443, 0
        %2450 = vmatprep.subr.mxu0 0.0
        %2451 = vmatpush1.msra.mxu0 %v2445
        %2452 = vmatprep.subr.mxu0 0.0
        %2453 = vmatpush1.msra.mxu0 0.0
        %2454 = vmatprep.subr.mxu0 0.0
        %2455 = vmatpush1.msra.mxu0 0.0
        %2456 = vmatprep.subr.mxu0 0.0
        %2457 = vmatpush1.msra.mxu0 0.0
        %2458 = vmatprep.subr.mxu0 0.0
        %2459 = vmatpush1.msra.mxu0 0.0
        %2460 = vmatprep.subr.mxu0 0.0
        %2461 = vmatpush1.msra.mxu0 0.0
        %2462 = vmatprep.subr.mxu0 0.0
        %2463 = vmatpush1.msra.mxu0 0.0
        %2464 = vmatprep.subr.mxu0 0.0
        %2465 = vmatpush1.msra.mxu0 0.0
        %2466 = vmatprep.subr.mxu0 0.0
        %2467 = vmatpush1.msra.mxu0 0.0
        %2468 = vmatprep.subr.mxu0 0.0
        %2469 = vmatpush1.msra.mxu0 0.0
        %2470 = vmatprep.subr.mxu0 0.0
        %2471 = vmatpush1.msra.mxu0 0.0
        %2472 = vmatprep.subr.mxu0 0.0
        %2473 = vmatpush1.msra.mxu0 0.0
        %2474 = vmatprep.subr.mxu0 0.0
        %2475 = vmatpush1.msra.mxu0 0.0
        %2476 = vmatprep.subr.mxu0 0.0
        %2477 = vmatpush1.msra.mxu0 0.0
        %2478 = vmatprep.subr.mxu0 0.0
        %2479 = vmatpush1.msra.mxu0 0.0
        %2480 = vmatprep.subr.mxu0 0.0
        %2481 = vmatpush1.msra.mxu0 0.0
        %2482 = vmatprep.subr.mxu0 0.0
        %2483 = vmatpush1.msra.mxu0 0.0
        %2484 = vmatprep.subr.mxu0 0.0
        %2485 = vmatpush1.msra.mxu0 0.0
        %2486 = vmatprep.subr.mxu0 0.0
        %2487 = vmatpush1.msra.mxu0 0.0
        %2488 = vmatprep.subr.mxu0 0.0
        %2489 = vmatpush1.msra.mxu0 0.0
        %2490 = vmatprep.subr.mxu0 0.0
        %2491 = vmatpush1.msra.mxu0 0.0
        %2492 = vmatprep.subr.mxu0 0.0
        %2493 = vmatpush1.msra.mxu0 0.0
        %2494 = vmatprep.subr.mxu0 0.0
        %2495 = vmatpush1.msra.mxu0 0.0
        %2496 = vmatprep.subr.mxu0 0.0
        %2497 = vmatpush1.msra.mxu0 0.0
        %2498 = vmatprep.subr.mxu0 0.0
        %2499 = vmatpush1.msra.mxu0 0.0
        %2500 = vmatprep.subr.mxu0 0.0
        %2501 = vmatpush1.msra.mxu0 0.0
        %2502 = vmatprep.subr.mxu0 0.0
        %2503 = vmatpush1.msra.mxu0 0.0
        %2504 = vmatprep.subr.mxu0 0.0
        %2505 = vmatpush1.msra.mxu0 0.0
        %2506 = vmatprep.subr.mxu0 0.0
        %2507 = vmatpush1.msra.mxu0 0.0
        %2508 = vmatprep.subr.mxu0 0.0
        %2509 = vmatpush1.msra.mxu0 0.0
        %2510 = vmatprep.subr.mxu0 0.0
        %2511 = vmatpush1.msra.mxu0 0.0
        %2512 = vmatprep.subr.mxu0 0.0
        %2513 = vmatpush1.msra.mxu0 0.0
        %2514 = vmatprep.mubr.f32.mxu0 0.0
        %2515 = vmatmul.mubr.f32.gmra.mrb[0].mxu0 %v2448
        %v2516 = vpop.f32.mrb[0].mxu0
        %v2517 = vadd.f32 0.0, %v2516
        %v2518 = vpop.f32.mrb[0].mxu0
        %2519 = vdwg.mxu0
        %2521 = vrot.lane.b32.xlu0 %v2185, 8
        %v2522 = vpop.permute.xlu0 %2521
        %2525 = vrot.lane.b32.xlu0 %v2351, 16
        %v2526 = vpop.permute.xlu0 %2525
        %2529 = vrot.lane.b32.xlu0 %v2517, 24
        %v2530 = vpop.permute.xlu0 %2529
        %v2532 = vsel %vm887, %v2019, %v2522
        %v2533 = vsel %vm1562, %v2532, %v2526
        %v2534 = vsel %vm1564, %v2533, %v2530
        %v2535 = vld [vmem:[%s13] sm:$0xff]
        %v2536 = vld [vmem:[%s13 + $0x8] sm:$0xff]
        %v2537 = vld [vmem:[%s13 + $0x10] sm:$0xff]
        %v2538 = vld [vmem:[%s13 + $0x18] sm:$0xff]
        %v2539 = vld [vmem:[%s14] sm:$0x1]
        %v2541 = vlaneseq
        %v2542 = vshrl.u32 %v2541, 7
        %v2543 = vsub.s32 0, %v2542
        %v2544 = vrot.slane %v2539, %v2543
        %v2547 = vsel %vm804, %v2534, 0
        %2549 = vmatprep.subr.mxu0 0.0
        %2550 = vmatpush1.msra.mxu0 %v2535
        %2551 = vmatprep.subr.mxu0 0.0
        %2552 = vmatpush1.msra.mxu0 %v2536
        %2553 = vmatprep.subr.mxu0 0.0
        %2554 = vmatpush1.msra.mxu0 %v2537
        %2555 = vmatprep.subr.mxu0 0.0
        %2556 = vmatpush1.msra.mxu0 %v2538
        %2557 = vmatprep.subr.mxu0 0.0
        %2558 = vmatpush1.msra.mxu0 0.0
        %2559 = vmatprep.subr.mxu0 0.0
        %2560 = vmatpush1.msra.mxu0 0.0
        %2561 = vmatprep.subr.mxu0 0.0
        %2562 = vmatpush1.msra.mxu0 0.0
        %2563 = vmatprep.subr.mxu0 0.0
        %2564 = vmatpush1.msra.mxu0 0.0
        %2565 = vmatprep.subr.mxu0 0.0
        %2566 = vmatpush1.msra.mxu0 0.0
        %2567 = vmatprep.subr.mxu0 0.0
        %2568 = vmatpush1.msra.mxu0 0.0
        %2569 = vmatprep.subr.mxu0 0.0
        %2570 = vmatpush1.msra.mxu0 0.0
        %2571 = vmatprep.subr.mxu0 0.0
        %2572 = vmatpush1.msra.mxu0 0.0
        %2573 = vmatprep.subr.mxu0 0.0
        %2574 = vmatpush1.msra.mxu0 0.0
        %2575 = vmatprep.subr.mxu0 0.0
        %2576 = vmatpush1.msra.mxu0 0.0
        %2577 = vmatprep.subr.mxu0 0.0
        %2578 = vmatpush1.msra.mxu0 0.0
        %2579 = vmatprep.subr.mxu0 0.0
        %2580 = vmatpush1.msra.mxu0 0.0
        %2581 = vmatprep.subr.mxu0 0.0
        %2582 = vmatpush1.msra.mxu0 0.0
        %2583 = vmatprep.subr.mxu0 0.0
        %2584 = vmatpush1.msra.mxu0 0.0
        %2585 = vmatprep.subr.mxu0 0.0
        %2586 = vmatpush1.msra.mxu0 0.0
        %2587 = vmatprep.subr.mxu0 0.0
        %2588 = vmatpush1.msra.mxu0 0.0
        %2589 = vmatprep.subr.mxu0 0.0
        %2590 = vmatpush1.msra.mxu0 0.0
        %2591 = vmatprep.subr.mxu0 0.0
        %2592 = vmatpush1.msra.mxu0 0.0
        %2593 = vmatprep.subr.mxu0 0.0
        %2594 = vmatpush1.msra.mxu0 0.0
        %2595 = vmatprep.subr.mxu0 0.0
        %2596 = vmatpush1.msra.mxu0 0.0
        %2597 = vmatprep.subr.mxu0 0.0
        %2598 = vmatpush1.msra.mxu0 0.0
        %2599 = vmatprep.subr.mxu0 0.0
        %2600 = vmatpush1.msra.mxu0 0.0
        %2601 = vmatprep.subr.mxu0 0.0
        %2602 = vmatpush1.msra.mxu0 0.0
        %2603 = vmatprep.subr.mxu0 0.0
        %2604 = vmatpush1.msra.mxu0 0.0
        %2605 = vmatprep.subr.mxu0 0.0
        %2606 = vmatpush1.msra.mxu0 0.0
        %2607 = vmatprep.subr.mxu0 0.0
        %2608 = vmatpush1.msra.mxu0 0.0
        %2609 = vmatprep.subr.mxu0 0.0
        %2610 = vmatpush1.msra.mxu0 0.0
        %2611 = vmatprep.subr.mxu0 0.0
        %2612 = vmatpush1.msra.mxu0 0.0
        %2613 = vmatprep.mubr.f32.mxu0 0.0
        %2614 = vmatmul.mubr.f32.gmra.mrb[0].mxu0 %v2547
        %v2615 = vpop.f32.mrb[0].mxu0
        %v2616 = vadd.f32 %v2544, %v2615
        %v2617 = vpop.f32.mrb[0].mxu0
        %2618 = vdwg.mxu0
        %v2619 = vadd.f32 %v2616, %v1680
        %v2620 = vld [vmem:[%s15] sm:$0x1]
        %v2621 = vld [vmem:[%s16] sm:$0x1]
        %v2622 = vsel %vm804, %v2619, 0.0
        %2623 = vadd.xlane.f32.xlu0 %v2622
        %v2624 = vpop.xlane.xlu0 %2623
        %v2625 = vmul.f32 %v2624, %v1656
        %v2626 = vsub.f32 %v2619, %v2625
        %v2627 = vmul.f32 %v2626, %v2626
        %v2628 = vsel %vm804, %v2627, 0.0
        %2629 = vadd.xlane.f32.xlu0 %v2628
        %v2630 = vpop.xlane.xlu0 %2629
        %v2631 = vmul.f32 %v2630, %v1656
        %v2632 = vadd.f32 %v2631, 1e-05
        %v2633 = vrsqrt.pop %v2632
        %v2634 = vmul.f32 %v2626, %v2633
        %v2636 = vlaneseq
        %v2637 = vshrl.u32 %v2636, 7
        %v2638 = vsub.s32 0, %v2637
        %v2639 = vrot.slane %v2620, %v2638
        %v2641 = vmul.f32 %v2634, %v2639
        %v2643 = vlaneseq
        %v2644 = vshrl.u32 %v2643, 7
        %v2645 = vsub.s32 0, %v2644
        %v2646 = vrot.slane %v2621, %v2645
        %v2648 = vadd.f32 %v2641, %v2646
        %v2649 = vld [vmem:[%s17] sm:$0xff]
        %v2650 = vld [vmem:[%s17 + $0x8] sm:$0xff]
        %v2651 = vld [vmem:[%s17 + $0x10] sm:$0xff]
        %v2652 = vld [vmem:[%s17 + $0x18] sm:$0xff]
        %v2653 = vld [vmem:[%s18] sm:$0x1]
        %v2655 = vlaneseq
        %v2656 = vshrl.u32 %v2655, 7
        %v2657 = vsub.s32 0, %v2656
        %v2658 = vrot.slane %v2653, %v2657
        %v2661 = vsel %vm804, %v2648, 0
        %2663 = vmatprep.subr.mxu0 0.0
        %2664 = vmatpush1.msra.mxu0 %v2649
        %2665 = vmatprep.subr.mxu0 0.0
        %2666 = vmatpush1.msra.mxu0 %v2650
        %2667 = vmatprep.subr.mxu0 0.0
        %2668 = vmatpush1.msra.mxu0 %v2651
        %2669 = vmatprep.subr.mxu0 0.0
        %2670 = vmatpush1.msra.mxu0 %v2652
        %2671 = vmatprep.subr.mxu0 0.0
        %2672 = vmatpush1.msra.mxu0 0.0
        %2673 = vmatprep.subr.mxu0 0.0
        %2674 = vmatpush1.msra.mxu0 0.0
        %2675 = vmatprep.subr.mxu0 0.0
        %2676 = vmatpush1.msra.mxu0 0.0
        %2677 = vmatprep.subr.mxu0 0.0
        %2678 = vmatpush1.msra.mxu0 0.0
        %2679 = vmatprep.subr.mxu0 0.0
        %2680 = vmatpush1.msra.mxu0 0.0
        %2681 = vmatprep.subr.mxu0 0.0
        %2682 = vmatpush1.msra.mxu0 0.0
        %2683 = vmatprep.subr.mxu0 0.0
        %2684 = vmatpush1.msra.mxu0 0.0
        %2685 = vmatprep.subr.mxu0 0.0
        %2686 = vmatpush1.msra.mxu0 0.0
        %2687 = vmatprep.subr.mxu0 0.0
        %2688 = vmatpush1.msra.mxu0 0.0
        %2689 = vmatprep.subr.mxu0 0.0
        %2690 = vmatpush1.msra.mxu0 0.0
        %2691 = vmatprep.subr.mxu0 0.0
        %2692 = vmatpush1.msra.mxu0 0.0
        %2693 = vmatprep.subr.mxu0 0.0
        %2694 = vmatpush1.msra.mxu0 0.0
        %2695 = vmatprep.subr.mxu0 0.0
        %2696 = vmatpush1.msra.mxu0 0.0
        %2697 = vmatprep.subr.mxu0 0.0
        %2698 = vmatpush1.msra.mxu0 0.0
        %2699 = vmatprep.subr.mxu0 0.0
        %2700 = vmatpush1.msra.mxu0 0.0
        %2701 = vmatprep.subr.mxu0 0.0
        %2702 = vmatpush1.msra.mxu0 0.0
        %2703 = vmatprep.subr.mxu0 0.0
        %2704 = vmatpush1.msra.mxu0 0.0
        %2705 = vmatprep.subr.mxu0 0.0
        %2706 = vmatpush1.msra.mxu0 0.0
        %2707 = vmatprep.subr.mxu0 0.0
        %2708 = vmatpush1.msra.mxu0 0.0
        %2709 = vmatprep.subr.mxu0 0.0
        %2710 = vmatpush1.msra.mxu0 0.0
        %2711 = vmatprep.subr.mxu0 0.0
        %2712 = vmatpush1.msra.mxu0 0.0
        %2713 = vmatprep.subr.mxu0 0.0
        %2714 = vmatpush1.msra.mxu0 0.0
        %2715 = vmatprep.subr.mxu0 0.0
        %2716 = vmatpush1.msra.mxu0 0.0
        %2717 = vmatprep.subr.mxu0 0.0
        %2718 = vmatpush1.msra.mxu0 0.0
        %2719 = vmatprep.subr.mxu0 0.0
        %2720 = vmatpush1.msra.mxu0 0.0
        %2721 = vmatprep.subr.mxu0 0.0
        %2722 = vmatpush1.msra.mxu0 0.0
        %2723 = vmatprep.subr.mxu0 0.0
        %2724 = vmatpush1.msra.mxu0 0.0
        %2725 = vmatprep.subr.mxu0 0.0
        %2726 = vmatpush1.msra.mxu0 0.0
        %2727 = vmatprep.mubr.f32.mxu0 0.0
        %2728 = vmatmul.mubr.f32.gmra.mrb[0].mxu0 %v2661
        %v2729 = vpop.f32.mrb[0].mxu0
        %v2730 = vadd.f32 %v2658, %v2729
        %v2731 = vpop.f32.mrb[0].mxu0
        %2732 = vdwg.mxu0
        %v2733 = vmax.f32 %v2730, 0.0
        %v2734 = vld [vmem:[%s19] sm:$0xff]
        %v2735 = vld [vmem:[%s19 + $0x8] sm:$0xff]
        %v2736 = vld [vmem:[%s19 + $0x10] sm:$0xff]
        %v2737 = vld [vmem:[%s19 + $0x18] sm:$0xff]
        %v2738 = vld [vmem:[%s19 + $0x20] sm:$0xff]
        %v2739 = vld [vmem:[%s19 + $0x28] sm:$0xff]
        %v2740 = vld [vmem:[%s19 + $0x30] sm:$0xff]
        %v2741 = vld [vmem:[%s19 + $0x38] sm:$0xff]
        %v2742 = vld [vmem:[%s19 + $0x40] sm:$0xff]
        %v2743 = vld [vmem:[%s19 + $0x48] sm:$0xff]
        %v2744 = vld [vmem:[%s19 + $0x50] sm:$0xff]
        %v2745 = vld [vmem:[%s19 + $0x58] sm:$0xff]
        %v2746 = vld [vmem:[%s19 + $0x60] sm:$0xff]
        %v2747 = vld [vmem:[%s19 + $0x68] sm:$0xff]
        %v2748 = vld [vmem:[%s19 + $0x70] sm:$0xff]
        %v2749 = vld [vmem:[%s19 + $0x78] sm:$0xff]
        %v2750 = vld [vmem:[%s20] sm:$0x1]
        %v2752 = vlaneseq
        %v2753 = vshrl.u32 %v2752, 7
        %v2754 = vsub.s32 0, %v2753
        %v2755 = vrot.slane %v2750, %v2754
        %2757 = vmatprep.subr.mxu0 0.0
        %2758 = vmatpush1.msra.mxu0 %v2734
        %2759 = vmatprep.subr.mxu0 0.0
        %2760 = vmatpush1.msra.mxu0 %v2735
        %2761 = vmatprep.subr.mxu0 0.0
        %2762 = vmatpush1.msra.mxu0 %v2736
        %2763 = vmatprep.subr.mxu0 0.0
        %2764 = vmatpush1.msra.mxu0 %v2737
        %2765 = vmatprep.subr.mxu0 0.0
        %2766 = vmatpush1.msra.mxu0 %v2738
        %2767 = vmatprep.subr.mxu0 0.0
        %2768 = vmatpush1.msra.mxu0 %v2739
        %2769 = vmatprep.subr.mxu0 0.0
        %2770 = vmatpush1.msra.mxu0 %v2740
        %2771 = vmatprep.subr.mxu0 0.0
        %2772 = vmatpush1.msra.mxu0 %v2741
        %2773 = vmatprep.subr.mxu0 0.0
        %2774 = vmatpush1.msra.mxu0 %v2742
        %2775 = vmatprep.subr.mxu0 0.0
        %2776 = vmatpush1.msra.mxu0 %v2743
        %2777 = vmatprep.subr.mxu0 0.0
        %2778 = vmatpush1.msra.mxu0 %v2744
        %2779 = vmatprep.subr.mxu0 0.0
        %2780 = vmatpush1.msra.mxu0 %v2745
        %2781 = vmatprep.subr.mxu0 0.0
        %2782 = vmatpush1.msra.mxu0 %v2746
        %2783 = vmatprep.subr.mxu0 0.0
        %2784 = vmatpush1.msra.mxu0 %v2747
        %2785 = vmatprep.subr.mxu0 0.0
        %2786 = vmatpush1.msra.mxu0 %v2748
        %2787 = vmatprep.subr.mxu0 0.0
        %2788 = vmatpush1.msra.mxu0 %v2749
        %2789 = vmatprep.subr.mxu0 0.0
        %2790 = vmatpush1.msra.mxu0 0.0
        %2791 = vmatprep.subr.mxu0 0.0
        %2792 = vmatpush1.msra.mxu0 0.0
        %2793 = vmatprep.subr.mxu0 0.0
        %2794 = vmatpush1.msra.mxu0 0.0
        %2795 = vmatprep.subr.mxu0 0.0
        %2796 = vmatpush1.msra.mxu0 0.0
        %2797 = vmatprep.subr.mxu0 0.0
        %2798 = vmatpush1.msra.mxu0 0.0
        %2799 = vmatprep.subr.mxu0 0.0
        %2800 = vmatpush1.msra.mxu0 0.0
        %2801 = vmatprep.subr.mxu0 0.0
        %2802 = vmatpush1.msra.mxu0 0.0
        %2803 = vmatprep.subr.mxu0 0.0
        %2804 = vmatpush1.msra.mxu0 0.0
        %2805 = vmatprep.subr.mxu0 0.0
        %2806 = vmatpush1.msra.mxu0 0.0
        %2807 = vmatprep.subr.mxu0 0.0
        %2808 = vmatpush1.msra.mxu0 0.0
        %2809 = vmatprep.subr.mxu0 0.0
        %2810 = vmatpush1.msra.mxu0 0.0
        %2811 = vmatprep.subr.mxu0 0.0
        %2812 = vmatpush1.msra.mxu0 0.0
        %2813 = vmatprep.subr.mxu0 0.0
        %2814 = vmatpush1.msra.mxu0 0.0
        %2815 = vmatprep.subr.mxu0 0.0
        %2816 = vmatpush1.msra.mxu0 0.0
        %2817 = vmatprep.subr.mxu0 0.0
        %2818 = vmatpush1.msra.mxu0 0.0
        %2819 = vmatprep.subr.mxu0 0.0
        %2820 = vmatpush1.msra.mxu0 0.0
        %2821 = vmatprep.mubr.f32.mxu0 0.0
        %2822 = vmatmul.mubr.f32.gmra.mrb[0].mxu0 %v2733
        %v2823 = vpop.f32.mrb[0].mxu0
        %v2824 = vadd.f32 %v2755, %v2823
        %v2825 = vpop.f32.mrb[0].mxu0
        %2826 = vdwg.mxu0
        %v2827 = vadd.f32 %v2824, %v2648
        %v2828 = vld [vmem:[%s21] sm:$0x1]
        %v2829 = vld [vmem:[%s22] sm:$0x1]
        %v2830 = vsel %vm804, %v2827, 0.0
        %2831 = vadd.xlane.f32.xlu0 %v2830
        %v2832 = vpop.xlane.xlu0 %2831
        %v2833 = vmul.f32 %v2832, %v1656
        %v2834 = vsub.f32 %v2827, %v2833
        %v2835 = vmul.f32 %v2834, %v2834
        %v2836 = vsel %vm804, %v2835, 0.0
        %2837 = vadd.xlane.f32.xlu0 %v2836
        %v2838 = vpop.xlane.xlu0 %2837
        %v2839 = vmul.f32 %v2838, %v1656
        %v2840 = vadd.f32 %v2839, 1e-05
        %v2841 = vrsqrt.pop %v2840
        %v2842 = vmul.f32 %v2834, %v2841
        %v2844 = vlaneseq
        %v2845 = vshrl.u32 %v2844, 7
        %v2846 = vsub.s32 0, %v2845
        %v2847 = vrot.slane %v2828, %v2846
        %v2849 = vmul.f32 %v2842, %v2847
        %v2851 = vlaneseq
        %v2852 = vshrl.u32 %v2851, 7
        %v2853 = vsub.s32 0, %v2852
        %v2854 = vrot.slane %v2829, %v2853
        %v2856 = vadd.f32 %v2849, %v2854
        %v2857 = vld [vmem:[%s23] sm:$0xff]
        %v2858 = vld [vmem:[%s23 + $0x8] sm:$0xff]
        %v2859 = vld [vmem:[%s23 + $0x10] sm:$0xff]
        %v2860 = vld [vmem:[%s23 + $0x18] sm:$0xff]
        %v2861 = vld [vmem:[%s24] sm:$0x1]
        %v2863 = vlaneseq
        %v2864 = vshrl.u32 %v2863, 7
        %v2865 = vsub.s32 0, %v2864
        %v2866 = vrot.slane %v2861, %v2865
        %v2869 = vsel %vm804, %v2856, 0
        %2871 = vmatprep.subr.mxu0 0.0
        %2872 = vmatpush1.msra.mxu0 %v2857
        %2873 = vmatprep.subr.mxu0 0.0
        %2874 = vmatpush1.msra.mxu0 %v2858
        %2875 = vmatprep.subr.mxu0 0.0
        %2876 = vmatpush1.msra.mxu0 %v2859
        %2877 = vmatprep.subr.mxu0 0.0
        %2878 = vmatpush1.msra.mxu0 %v2860
        %2879 = vmatprep.subr.mxu0 0.0
        %2880 = vmatpush1.msra.mxu0 0.0
        %2881 = vmatprep.subr.mxu0 0.0
        %2882 = vmatpush1.msra.mxu0 0.0
        %2883 = vmatprep.subr.mxu0 0.0
        %2884 = vmatpush1.msra.mxu0 0.0
        %2885 = vmatprep.subr.mxu0 0.0
        %2886 = vmatpush1.msra.mxu0 0.0
        %2887 = vmatprep.subr.mxu0 0.0
        %2888 = vmatpush1.msra.mxu0 0.0
        %2889 = vmatprep.subr.mxu0 0.0
        %2890 = vmatpush1.msra.mxu0 0.0
        %2891 = vmatprep.subr.mxu0 0.0
        %2892 = vmatpush1.msra.mxu0 0.0
        %2893 = vmatprep.subr.mxu0 0.0
        %2894 = vmatpush1.msra.mxu0 0.0
        %2895 = vmatprep.subr.mxu0 0.0
        %2896 = vmatpush1.msra.mxu0 0.0
        %2897 = vmatprep.subr.mxu0 0.0
        %2898 = vmatpush1.msra.mxu0 0.0
        %2899 = vmatprep.subr.mxu0 0.0
        %2900 = vmatpush1.msra.mxu0 0.0
        %2901 = vmatprep.subr.mxu0 0.0
        %2902 = vmatpush1.msra.mxu0 0.0
        %2903 = vmatprep.subr.mxu0 0.0
        %2904 = vmatpush1.msra.mxu0 0.0
        %2905 = vmatprep.subr.mxu0 0.0
        %2906 = vmatpush1.msra.mxu0 0.0
        %2907 = vmatprep.subr.mxu0 0.0
        %2908 = vmatpush1.msra.mxu0 0.0
        %2909 = vmatprep.subr.mxu0 0.0
        %2910 = vmatpush1.msra.mxu0 0.0
        %2911 = vmatprep.subr.mxu0 0.0
        %2912 = vmatpush1.msra.mxu0 0.0
        %2913 = vmatprep.subr.mxu0 0.0
        %2914 = vmatpush1.msra.mxu0 0.0
        %2915 = vmatprep.subr.mxu0 0.0
        %2916 = vmatpush1.msra.mxu0 0.0
        %2917 = vmatprep.subr.mxu0 0.0
        %2918 = vmatpush1.msra.mxu0 0.0
        %2919 = vmatprep.subr.mxu0 0.0
        %2920 = vmatpush1.msra.mxu0 0.0
        %2921 = vmatprep.subr.mxu0 0.0
        %2922 = vmatpush1.msra.mxu0 0.0
        %2923 = vmatprep.subr.mxu0 0.0
        %2924 = vmatpush1.msra.mxu0 0.0
        %2925 = vmatprep.subr.mxu0 0.0
        %2926 = vmatpush1.msra.mxu0 0.0
        %2927 = vmatprep.subr.mxu0 0.0
        %2928 = vmatpush1.msra.mxu0 0.0
        %2929 = vmatprep.subr.mxu0 0.0
        %2930 = vmatpush1.msra.mxu0 0.0
        %2931 = vmatprep.subr.mxu0 0.0
        %2932 = vmatpush1.msra.mxu0 0.0
        %2933 = vmatprep.subr.mxu0 0.0
        %2934 = vmatpush1.msra.mxu0 0.0
        %2935 = vmatprep.mubr.f32.mxu0 0.0
        %2936 = vmatmul.mubr.f32.gmra.mrb[0].mxu0 %v2869
        %v2937 = vpop.f32.mrb[0].mxu0
        %v2938 = vadd.f32 %v2866, %v2937
        %v2939 = vpop.f32.mrb[0].mxu0
        %2940 = vdwg.mxu0
        %2941 = vst [vmem:[%s779] sm:$0xff] %v2938
        %s2942 = sand.u32 %s587, 1
        %s2943 = scalar_lea.sflag [#allocation3], %s2942
        %s2944 = sand.u32 %s587, 1
        %s2945 = smul.addr %s2944, 8
        %s2946 = scalar_lea.vmem [#allocation2], %s2945
        // Predicated region
        $region121: #{decoder_forward.1} parent=119 // pred_check
          %p2947 = pneg %p597
        $region122: #{decoder_forward.1} parent=119 // pred_check_branch
          %2949 = sbr.rel (%p2947) target = $region124
        $region123: #{decoder_forward.1} parent=119 // pred_region
          %s2951 = ssub.s32 128, 128
          %2952 = vsyncadd %s2943, %s2951
          %s2953 = smul.addr %s39, 128
          %s2954 = scalar_lea.hbm %s25, %s2953
          %s2956 = sshll.u32 %s2946, 4
          %s2957 = int_to_ptr.vmem [resolvable:$true] %s2956
          %2959 = dma.vmem_to_hbm [thread:$0]  %s2957, 128, %s2954, %s2943
        $region124: #{decoder_forward.1} parent=119 // pred_fallthru
          _
      $region120: #{decoder_forward.1} parent=5 // pred_fallthru
        _
      %p2960 = scmp.le.s32.totalorder 2, %s34
      // Predicated region
      $region125: #{decoder_forward.1} parent=5 // pred_check
        %p2961 = pneg %p2960
      $region126: #{decoder_forward.1} parent=5 // pred_check_branch
        %2963 = sbr.rel (%p2961) target = $region128
      $region127: #{decoder_forward.1} parent=5 // pred_region
        %s2964 = ssub.s32 %s34, 2
        // Predicated region
        $region129: #{decoder_forward.1} parent=127 // pred_check
          %p2965 = pneg %p603
        $region130: #{decoder_forward.1} parent=127 // pred_check_branch
          %2967 = sbr.rel (%p2965) target = $region132
        $region131: #{decoder_forward.1} parent=127 // pred_region
          %s2968 = sand.u32 %s588, 1
          %s2969 = scalar_lea.sflag [#allocation3], %s2968
          %s2970 = sand.u32 %s588, 1
          %s2971 = smul.addr %s2970, 8
          %s2972 = scalar_lea.vmem [#allocation2], %s2971
          %2973 = dma.done %s2969, 128
        $region132: #{decoder_forward.1} parent=127 // pred_fallthru
          _
      $region128: #{decoder_forward.1} parent=5 // pred_fallthru
        _
    $region6: #{decoder_forward.1} parent=1 // loop_footer
      %s38 = sadd.s32 1, %s34
    $region7: #{decoder_forward.1} parent=1 // loop_footer_branch
      %33 = sbr.rel target = $region3
    $region8: #{decoder_forward.1} parent=1 // loop_exit
      _
    %2974 = vsyncpa [#allocation3], 1
    %s2975 = scalar_lea.sflag [#allocation3], 1
    %2976 = vsyncpa %s2975, 1

</llo_original>
